<compile_context>
chip_gen: v6e
topology: v6e:2x2x1
jax: 0.10.0
libtpu: 0.0.40
codegen_flags: <defaults>
</compile_context>

<pallas_src>
import jax
import jax.numpy as jnp
from jax.experimental import pallas as pl
from jax.experimental.pallas import tpu as pltpu

FEAT = 1280        # EfficientNet-B0 feature width
H1, H2 = 512, 256
META_PAD = 128     # metadata (num_labels + num_varieties + 1) zero-padded to one lane tile
OUT_PAD = 128      # lane-dense output slab; the real scalar output is column 0
SMALL_W = H1 + H2 + H2 + OUT_PAD   # [t1_fold | t2_fold | w3_row | b3_fill] = 1152


# ----------------------------- fused Pallas kernel ------------------------------

def fused_forward_kernel(x_ref, meta_ref, wf_ref, w1f_ref, w1m_ref, w2_ref,
                         small_ref, o_ref):
    # TODO(synk): the real module uses torchvision EfficientNet-B0 (conv/MBConv stack,
    # classifier=Identity -> 1280-d features); that backbone has no compact Pallas
    # translation here, so features come from this deterministic linear-projection
    # stand-in (flattened image -> 1280).  Result stays a local value (no VMEM scratch).
    feat = jnp.dot(x_ref[...], wf_ref[...], preferred_element_type=jnp.float32)

    # Linear(1280 + meta, 512) with BN(512) scale pre-folded into the weight columns,
    # split into an aligned 1280-K bf16 matmul plus a 128-K padded metadata matmul.
    # Dropout(0.3) = identity in eval.
    h = jnp.dot(feat.astype(jnp.bfloat16), w1f_ref[...],
                preferred_element_type=jnp.float32)
    h = h + jnp.dot(meta_ref[...], w1m_ref[...], preferred_element_type=jnp.float32)
    h = jnp.maximum(h + small_ref[:, 0:H1], 0.0)                 # folded bias+BN shift

    # Linear(512, 256) with BN(256) scale folded into columns; Dropout(0.2) = identity.
    h = jnp.dot(h.astype(jnp.bfloat16), w2_ref[...], preferred_element_type=jnp.float32)
    h = jnp.maximum(h + small_ref[:, H1:H1 + H2], 0.0)

    # Linear(256, 1) as VPU multiply + lane reduction (no N=1 MXU matmul); the scalar
    # per row is broadcast into a lane-dense 128-wide output slab, with the bias b3
    # replicated across the last 128 lanes of the packed slab.
    y = jnp.sum(h * small_ref[:, H1 + H2:H1 + 2 * H2], axis=-1, keepdims=True)
    o_ref[...] = jnp.broadcast_to(y, o_ref.shape) + small_ref[:, H1 + 2 * H2:]


# ------------------------------- wrappers ----------------------------------

def pallas_age_forward(x_pad_bf16, meta_pad_bf16, fused_params, tb):
    wf, w1f, w1m, w2s, small = fused_params
    Bp, D = x_pad_bf16.shape
    grid = (Bp // tb,)
    out = pl.pallas_call(
        fused_forward_kernel,
        out_shape=jax.ShapeDtypeStruct((Bp, OUT_PAD), jnp.float32),
        grid=grid,
        in_specs=[
            pl.BlockSpec((tb, D), lambda i: (i, 0)),              # x rows per batch tile
            pl.BlockSpec((tb, META_PAD), lambda i: (i, 0)),       # metadata rows
            # Weight blocks keep a constant block index -> fetched once, re-used across
            # batch tiles.  (Default double-buffering keeps a 2x resident footprint for
            # these constant blocks; still well under every chip's VMEM, so left as-is.)
            pl.BlockSpec((D, FEAT), lambda i: (0, 0)),             # backbone proj (bf16)
            pl.BlockSpec((FEAT, H1), lambda i: (0, 0)),            # w1 feature part (bf16)
            pl.BlockSpec((META_PAD, H1), lambda i: (0, 0)),        # w1 metadata part (bf16)
            pl.BlockSpec((H1, H2), lambda i: (0, 0)),              # w2 (bf16)
            pl.BlockSpec((1, SMALL_W), lambda i: (0, 0)),          # packed shifts/w3/b3
        ],
        out_specs=pl.BlockSpec((tb, OUT_PAD), lambda i: (i, 0)),
        # TODO(synk): for a real backbone (D = 224*224*3, wf ~368 MB bf16) add a K grid
        # axis over D (last, "arbitrary") with an f32 accumulator scratch + pl.when(k==0)
        # init; size the K tile for v7x's 64 MiB VMEM (tk ~ 4096-8192), larger on v5e/v6e.
        compiler_params=pltpu.CompilerParams(
            dimension_semantics=("parallel",),     # batch tiles -> both v7x TensorCores
            vmem_limit_bytes=32 * 1024 * 1024),
    )(x_pad_bf16, meta_pad_bf16, wf, w1f, w1m, w2s, small)
    return out


def age_regressor_forward(x, label_vec, variety_vec, grvi_scalar, fused_params):
    B = x.shape[0]
    meta = jnp.concatenate([label_vec, variety_vec, grvi_scalar], axis=1)
    assert meta.shape[1] <= META_PAD, "metadata width exceeds META_PAD lane tile"

    x_flat = x.reshape(B, -1)                                    # NCHW flatten (row-major)
    D = x_flat.shape[1]

    # Pad batch to a sublane-friendly tile: 16 rows (bf16 packing) for small batches,
    # 128-row tiles once the caller batch is large enough to amortize the weight stream.
    if B >= 128:
        tb = 128
    else:
        tb = ((B + 15) // 16) * 16
    Bp = ((B + tb - 1) // tb) * tb

    x_pad = jnp.zeros((Bp, D), jnp.bfloat16).at[:B].set(x_flat.astype(jnp.bfloat16))
    meta_pad = jnp.zeros((Bp, META_PAD), jnp.bfloat16)
    meta_pad = meta_pad.at[:B, :meta.shape[1]].set(meta.astype(jnp.bfloat16))

    out = pallas_age_forward(x_pad, meta_pad, fused_params, tb)  # [Bp, 128]
    return out[:B, :1]                                           # [B, 1]


# ------------------------- deterministic parameters -------------------------

def fold_bn(gamma, beta, mean, var, eps=1e-5):
    scale = gamma / jnp.sqrt(var + eps)
    shift = beta - mean * scale
    return scale[None, :], shift[None, :]


def make_params(key, d_in):
    ks = jax.random.split(key, 6)

    def lin(k, fan_in, fan_out):
        kw, kb = jax.random.split(k)
        w = jax.random.uniform(kw, (fan_in, fan_out), jnp.float32, -1.0, 1.0) / jnp.sqrt(fan_in)
        b = jax.random.uniform(kb, (1, fan_out), jnp.float32, -1.0, 1.0) / jnp.sqrt(fan_in)
        return w, b

    def bn(k, n):
        k1, k2, k3, k4 = jax.random.split(k, 4)
        gamma = 1.0 + 0.1 * jax.random.normal(k1, (n,), jnp.float32)
        beta = 0.1 * jax.random.normal(k2, (n,), jnp.float32)
        mean = 0.1 * jax.random.normal(k3, (n,), jnp.float32)
        var = 1.0 + 0.1 * jnp.abs(jax.random.normal(k4, (n,), jnp.float32))
        return fold_bn(gamma, beta, mean, var)

    w1, b1 = lin(ks[0], d_in, H1)
    s1, t1 = bn(ks[1], H1)
    w2, b2 = lin(ks[2], H1, H2)
    s2, t2 = bn(ks[3], H2)
    w3, b3 = lin(ks[4], H2, 1)
    return (w1, b1, s1, t1, w2, b2, s2, t2, w3, b3)


def prepare_fused_params(w_feat, head_params, meta_dim):
    """Host-side prep: split/pad w1, fold Linear bias AND BN scale into weights/shifts,
    bf16-cast every streamed weight, pack all small vectors into one lane-dense slab."""
    (w1, b1, s1, t1, w2, b2, s2, t2, w3, b3) = head_params

    wf_bf16 = w_feat.astype(jnp.bfloat16)                      # dominant DMA bytes -> bf16
    # (xW + b) * s + t  ==  x(W*s) + (b*s + t): fold BN scale into weight columns.
    w1f_bf16 = (w1[:FEAT, :] * s1).astype(jnp.bfloat16)
    w1m_pad = jnp.zeros((META_PAD, H1), jnp.float32).at[:meta_dim, :].set(w1[FEAT:, :])
    w1m_bf16 = (w1m_pad * s1).astype(jnp.bfloat16)
    t1_fold = t1 + b1 * s1                                     # [1, 512]
    w2_bf16 = (w2 * s2).astype(jnp.bfloat16)
    t2_fold = t2 + b2 * s2                                     # [1, 256]
    w3_row = w3.T                                              # [1, 256]
    b3_fill = jnp.full((1, OUT_PAD), b3[0, 0], jnp.float32)    # b3 replicated over lanes

    small = jnp.concatenate([t1_fold, t2_fold, w3_row, b3_fill], axis=1)  # [1, 1152] f32
    return (wf_bf16, w1f_bf16, w1m_bf16, w2_bf16, small)


# --------------------------------- main -------------------------------------

if __name__ == "__main__":
    key = jax.random.PRNGKey(0)
    ks = jax.random.split(key, 8)

    B = 2
    C, H, W = 3, 16, 16
    num_labels, num_varieties = 4, 3
    meta_dim = num_labels + num_varieties + 1      # = 8

    x = jax.random.normal(ks[0], (B, C, H, W), jnp.float32)
    label_vec = jax.random.normal(ks[1], (B, num_labels), jnp.float32)
    variety_vec = jax.random.normal(ks[2], (B, num_varieties), jnp.float32)
    grvi_scalar = jax.random.normal(ks[3], (B, 1), jnp.float32)

    D = C * H * W
    w_feat = jax.random.normal(ks[4], (D, FEAT), jnp.float32) / jnp.sqrt(D)
    head_params = make_params(ks[5], FEAT + meta_dim)
    fused_params = prepare_fused_params(w_feat, head_params, meta_dim)

    out = age_regressor_forward(x, label_vec, variety_vec, grvi_scalar, fused_params)
    out = jax.block_until_ready(out)
    assert out.shape == (B, 1) and out.dtype == jnp.float32

    # --- reference 1: pure-JAX with the SAME folded bf16 weights / f32 accumulation ----
    (wf_b, w1f_b, w1m_b, w2_b, small) = fused_params
    t1f = small[:, :H1]
    t2f = small[:, H1:H1 + H2]
    w3r = small[:, H1 + H2:H1 + 2 * H2]
    b3v = small[0, H1 + 2 * H2]
    x_flat = x.reshape(B, -1)
    meta = jnp.concatenate([label_vec, variety_vec, grvi_scalar], axis=1)
    meta_padded = jnp.zeros((B, META_PAD), jnp.float32).at[:, :meta.shape[1]].set(meta)
    feat = jnp.dot(x_flat.astype(jnp.bfloat16), wf_b, preferred_element_type=jnp.float32)
    h = jnp.dot(feat.astype(jnp.bfloat16), w1f_b, preferred_element_type=jnp.float32)
    h = h + jnp.dot(meta_padded.astype(jnp.bfloat16), w1m_b,
                    preferred_element_type=jnp.float32)
    h = jnp.maximum(h + t1f, 0.0)
    h = jnp.dot(h.astype(jnp.bfloat16), w2_b, preferred_element_type=jnp.float32)
    h = jnp.maximum(h + t2f, 0.0)
    ref_bf = jnp.sum(h * w3r, axis=-1, keepdims=True) + b3v
    assert jnp.allclose(out, ref_bf, atol=1e-2, rtol=1e-2)

    # --- reference 2: original full-f32 module math (loose tol for bf16 weights) --------
    (w1, b1, s1, t1, w2, b2, s2, t2, w3, b3) = head_params
    feats32 = x_flat @ w_feat
    comb = jnp.concatenate([feats32, meta], axis=1)
    h = jnp.maximum((comb @ w1 + b1) * s1 + t1, 0.0)
    h = jnp.maximum((h @ w2 + b2) * s2 + t2, 0.0)
    ref32 = h @ w3 + b3
    assert jnp.allclose(out, ref32, atol=5e-2, rtol=5e-2)

    print("KERNEL_OK")
</pallas_src>

<mosaic_0001>
module attributes {stable_mosaic.version = 11 : i64} {
  func.func @fused_forward_kernel(%arg0: i32, %arg1: memref<16x768xbf16, #tpu.memory_space<vmem>>, %arg2: memref<16x128xbf16, #tpu.memory_space<vmem>>, %arg3: memref<768x1280xbf16, #tpu.memory_space<vmem>>, %arg4: memref<1280x512xbf16, #tpu.memory_space<vmem>>, %arg5: memref<128x512xbf16, #tpu.memory_space<vmem>>, %arg6: memref<512x256xbf16, #tpu.memory_space<vmem>>, %arg7: memref<1x1152xf32, #tpu.memory_space<vmem>>, %arg8: memref<16x128xf32, #tpu.memory_space<vmem>>) attributes {dimension_semantics = [#tpu.dimension_semantics<parallel>], iteration_bounds = array<i64: 1>, scalar_prefetch = 0 : i64, scratch_operands = 0 : i64, tpu.core_type = #tpu.core_type<tc>, window_params = [{transform_indices = @transform_0, window_bounds = array<i64: 16, 768>}, {transform_indices = @transform_1, window_bounds = array<i64: 16, 128>}, {pipeline_mode = #tpu.pipeline_mode<synchronous>, transform_indices = @transform_2, window_bounds = array<i64: 768, 1280>}, {pipeline_mode = #tpu.pipeline_mode<synchronous>, transform_indices = @transform_3, window_bounds = array<i64: 1280, 512>}, {pipeline_mode = #tpu.pipeline_mode<synchronous>, transform_indices = @transform_4, window_bounds = array<i64: 128, 512>}, {pipeline_mode = #tpu.pipeline_mode<synchronous>, transform_indices = @transform_5, window_bounds = array<i64: 512, 256>}, {pipeline_mode = #tpu.pipeline_mode<synchronous>, transform_indices = @transform_6, window_bounds = array<i64: 1, 1152>}, {transform_indices = @transform_7, window_bounds = array<i64: 16, 128>}]} {
    %c0 = arith.constant 0 : index
    %c0_0 = arith.constant 0 : index
    %0 = vector.load %arg1[%c0, %c0_0] : memref<16x768xbf16, #tpu.memory_space<vmem>>, vector<16x768xbf16>
    %c0_1 = arith.constant 0 : index
    %c0_2 = arith.constant 0 : index
    %1 = vector.load %arg3[%c0_1, %c0_2] : memref<768x1280xbf16, #tpu.memory_space<vmem>>, vector<768x1280xbf16>
    %cst = arith.constant dense<0.000000e+00> : vector<16x1280xf32>
    %2 = tpu.matmul %0, %1, %cst {dimension_numbers = #tpu.dot_dimension_numbers<[1], [0], [0], [1], [0, 0, 1, 1], [], []>} : vector<16x768xbf16>, vector<768x1280xbf16>, vector<16x1280xf32> -> vector<16x1280xf32>
    %3 = arith.truncf %2 : vector<16x1280xf32> to vector<16x1280xbf16>
    %c0_3 = arith.constant 0 : index
    %c0_4 = arith.constant 0 : index
    %4 = vector.load %arg4[%c0_3, %c0_4] : memref<1280x512xbf16, #tpu.memory_space<vmem>>, vector<1280x512xbf16>
    %cst_5 = arith.constant dense<0.000000e+00> : vector<16x512xf32>
    %5 = tpu.matmul %3, %4, %cst_5 {dimension_numbers = #tpu.dot_dimension_numbers<[1], [0], [0], [1], [0, 0, 1, 1], [], []>} : vector<16x1280xbf16>, vector<1280x512xbf16>, vector<16x512xf32> -> vector<16x512xf32>
    %c0_6 = arith.constant 0 : index
    %c0_7 = arith.constant 0 : index
    %6 = vector.load %arg2[%c0_6, %c0_7] : memref<16x128xbf16, #tpu.memory_space<vmem>>, vector<16x128xbf16>
    %c0_8 = arith.constant 0 : index
    %c0_9 = arith.constant 0 : index
    %7 = vector.load %arg5[%c0_8, %c0_9] : memref<128x512xbf16, #tpu.memory_space<vmem>>, vector<128x512xbf16>
    %cst_10 = arith.constant dense<0.000000e+00> : vector<16x512xf32>
    %8 = tpu.matmul %6, %7, %cst_10 {dimension_numbers = #tpu.dot_dimension_numbers<[1], [0], [0], [1], [0, 0, 1, 1], [], []>} : vector<16x128xbf16>, vector<128x512xbf16>, vector<16x512xf32> -> vector<16x512xf32>
    %9 = arith.addf %5, %8 : vector<16x512xf32>
    %c0_11 = arith.constant 0 : index
    %c0_12 = arith.constant 0 : index
    %10 = vector.load %arg7[%c0_11, %c0_12] : memref<1x1152xf32, #tpu.memory_space<vmem>>, vector<1x512xf32>
    %11 = vector.broadcast %10 : vector<1x512xf32> to vector<16x512xf32>
    %12 = arith.addf %9, %11 : vector<16x512xf32>
    %cst_13 = arith.constant 0.000000e+00 : f32
    %13 = vector.broadcast %cst_13 : f32 to vector<16x512xf32>
    %14 = arith.maximumf %12, %13 : vector<16x512xf32>
    %15 = arith.truncf %14 : vector<16x512xf32> to vector<16x512xbf16>
    %c0_14 = arith.constant 0 : index
    %c0_15 = arith.constant 0 : index
    %16 = vector.load %arg6[%c0_14, %c0_15] : memref<512x256xbf16, #tpu.memory_space<vmem>>, vector<512x256xbf16>
    %cst_16 = arith.constant dense<0.000000e+00> : vector<16x256xf32>
    %17 = tpu.matmul %15, %16, %cst_16 {dimension_numbers = #tpu.dot_dimension_numbers<[1], [0], [0], [1], [0, 0, 1, 1], [], []>} : vector<16x512xbf16>, vector<512x256xbf16>, vector<16x256xf32> -> vector<16x256xf32>
    %c0_17 = arith.constant 0 : index
    %c512 = arith.constant 512 : index
    %18 = vector.load %arg7[%c0_17, %c512] : memref<1x1152xf32, #tpu.memory_space<vmem>>, vector<1x256xf32>
    %19 = vector.broadcast %18 : vector<1x256xf32> to vector<16x256xf32>
    %20 = arith.addf %17, %19 : vector<16x256xf32>
    %cst_18 = arith.constant 0.000000e+00 : f32
    %21 = vector.broadcast %cst_18 : f32 to vector<16x256xf32>
    %22 = arith.maximumf %20, %21 : vector<16x256xf32>
    %c0_19 = arith.constant 0 : index
    %c768 = arith.constant 768 : index
    %23 = vector.load %arg7[%c0_19, %c768] : memref<1x1152xf32, #tpu.memory_space<vmem>>, vector<1x256xf32>
    %24 = vector.broadcast %23 : vector<1x256xf32> to vector<16x256xf32>
    %25 = arith.mulf %22, %24 : vector<16x256xf32>
    %cst_20 = arith.constant dense<0.000000e+00> : vector<16xf32>
    %26 = vector.multi_reduction <add>, %25, %cst_20 [1] : vector<16x256xf32> to vector<16xf32>
    %27 = vector.shape_cast %26 : vector<16xf32> to vector<16x1xf32>
    %28 = vector.shape_cast %27 : vector<16x1xf32> to vector<16x1xf32>
    %29 = vector.broadcast %28 : vector<16x1xf32> to vector<16x128xf32>
    %c0_21 = arith.constant 0 : index
    %c1024 = arith.constant 1024 : index
    %30 = vector.load %arg7[%c0_21, %c1024] : memref<1x1152xf32, #tpu.memory_space<vmem>>, vector<1x128xf32>
    %31 = vector.broadcast %30 : vector<1x128xf32> to vector<16x128xf32>
    %32 = arith.addf %29, %31 : vector<16x128xf32>
    %c0_22 = arith.constant 0 : index
    %c0_23 = arith.constant 0 : index
    %33 = vector.load %arg8[%c0_22, %c0_23] : memref<16x128xf32, #tpu.memory_space<vmem>>, vector<16x128xf32>
    tpu.vector_store %arg8[%c0_22, %c0_23], %32 {strides = array<i32>} : memref<16x128xf32, #tpu.memory_space<vmem>>, vector<16x128xf32>,
    return
  }
  func.func @transform_0(%arg0: i32) -> (i32, i32) {
    %c0_i32 = arith.constant 0 : i32
    %c0_i32_0 = arith.constant 0 : i32
    return %arg0, %c0_i32 : i32, i32
  }
  func.func @transform_1(%arg0: i32) -> (i32, i32) {
    %c0_i32 = arith.constant 0 : i32
    %c0_i32_0 = arith.constant 0 : i32
    return %arg0, %c0_i32 : i32, i32
  }
  func.func @transform_2(%arg0: i32) -> (i32, i32) {
    %c0_i32 = arith.constant 0 : i32
    %c0_i32_0 = arith.constant 0 : i32
    %c0_i32_1 = arith.constant 0 : i32
    return %c0_i32, %c0_i32_0 : i32, i32
  }
  func.func @transform_3(%arg0: i32) -> (i32, i32) {
    %c0_i32 = arith.constant 0 : i32
    %c0_i32_0 = arith.constant 0 : i32
    %c0_i32_1 = arith.constant 0 : i32
    return %c0_i32, %c0_i32_0 : i32, i32
  }
  func.func @transform_4(%arg0: i32) -> (i32, i32) {
    %c0_i32 = arith.constant 0 : i32
    %c0_i32_0 = arith.constant 0 : i32
    %c0_i32_1 = arith.constant 0 : i32
    return %c0_i32, %c0_i32_0 : i32, i32
  }
  func.func @transform_5(%arg0: i32) -> (i32, i32) {
    %c0_i32 = arith.constant 0 : i32
    %c0_i32_0 = arith.constant 0 : i32
    %c0_i32_1 = arith.constant 0 : i32
    return %c0_i32, %c0_i32_0 : i32, i32
  }
  func.func @transform_6(%arg0: i32) -> (i32, i32) {
    %c0_i32 = arith.constant 0 : i32
    %c0_i32_0 = arith.constant 0 : i32
    %c0_i32_1 = arith.constant 0 : i32
    return %c0_i32, %c0_i32_0 : i32, i32
  }
  func.func @transform_7(%arg0: i32) -> (i32, i32) {
    %c0_i32 = arith.constant 0 : i32
    %c0_i32_0 = arith.constant 0 : i32
    return %arg0, %c0_i32 : i32, i32
  }
}

</mosaic_0001>

<llo_original>
// kernel: tpu_custom_call.1
$region0: #{tpu_custom_call.1}
  #allocation0 [shape = 'u32[]', space=smem, size = 0x4, offset = 0x4, fixed_abs, tag = 'smem constant byte address 0x4 - core index']
  #allocation1 [shape = 'u32[144,128]{1,0:T(1,128)}', space=vmem, size = 0x12000, scoped, tag = 'internal scratch']
  %s0 = inlined_call_operand.hbm [shape: bf16[16,768], index: 0, kind: input, shape index: {}]
  %s1 = inlined_call_operand.hbm [shape: bf16[16,128], index: 1, kind: input, shape index: {}]
  %s2 = inlined_call_operand.hbm [shape: bf16[768,1280], index: 2, kind: input, shape index: {}]
  %s3 = inlined_call_operand.hbm [shape: bf16[1280,512], index: 3, kind: input, shape index: {}]
  %s4 = inlined_call_operand.hbm [shape: bf16[128,512], index: 4, kind: input, shape index: {}]
  %s5 = inlined_call_operand.hbm [shape: bf16[512,256], index: 5, kind: input, shape index: {}]
  %s6 = inlined_call_operand.hbm [shape: f32[1,1152], index: 6, kind: input, shape index: {}]
  %s7 = inlined_call_operand.hbm [shape: f32[16,128], index: 7, kind: output, shape index: {}]
  %s8 = sld [smem:[#allocation0]]
  $region66: #{tpu_custom_call.1} parent=0
    _
  %s10 = ssub.s32 1, %s8
  %s11 = scalar_select 0, %s10, %s8
  $region1: #{tpu_custom_call.1} parent=0
    #allocation2 [shape = 'u8[24576]{0}', space=vmem, size = 0x6000, scoped, tag = 'input window, operand 0, single buffered']
    #allocation3 [shape = 's32[1]{0}', space=sflag, size = 0x4, scoped, tag = 'scoped memory for tpu_custom_call.1']
    #allocation4 [shape = 's32[1]{0}', space=sflag, size = 0x4, scoped, tag = 'scoped memory for tpu_custom_call.1']
    #allocation5 [shape = 'u8[4096]{0}', space=vmem, size = 0x1000, scoped, tag = 'input window, operand 1, single buffered']
    #allocation6 [shape = 's32[1]{0}', space=sflag, size = 0x4, scoped, tag = 'scoped memory for tpu_custom_call.1']
    #allocation7 [shape = 'u8[1966080]{0}', space=vmem, size = 0x1e0000, scoped, tag = 'input window, operand 2, single buffered']
    #allocation8 [shape = 'u8[1310720]{0}', space=vmem, size = 0x140000, scoped, tag = 'input window, operand 3, single buffered']
    #allocation9 [shape = 's32[1]{0}', space=sflag, size = 0x4, scoped, tag = 'scoped memory for tpu_custom_call.1']
    #allocation10 [shape = 'u8[131072]{0}', space=vmem, size = 0x20000, scoped, tag = 'input window, operand 4, single buffered']
    #allocation11 [shape = 'u8[262144]{0}', space=vmem, size = 0x40000, scoped, tag = 'input window, operand 5, single buffered']
    #allocation12 [shape = 's32[1]{0}', space=sflag, size = 0x4, scoped, tag = 'scoped memory for tpu_custom_call.1']
    #allocation13 [shape = 'u8[4608]{0}', space=vmem, size = 0x1400, scoped, tag = 'input window, operand 6, single buffered']
    #allocation14 [shape = 'u8[8192]{0}', space=vmem, size = 0x2000, scoped, tag = 'output window, operand 0, single buffered']
    %12 = vsyncpa [#allocation3], 0
    %13 = vsyncpa [#allocation6], 0
    %14 = vsyncpa [#allocation9], 0
    %15 = vsyncpa [#allocation12], 0
    %16 = vsyncpa [#allocation4], 0
    // Predicated region
    $region2: #{tpu_custom_call.1} parent=1 // pred_check
      _
    $region3: #{tpu_custom_call.1} parent=1 // pred_check_branch
      %18 = sbr.rel (0) target = $region5
    $region4: #{tpu_custom_call.1} parent=1 // pred_region
      %s20 = ssub.s32 768, 768
      %21 = vsyncadd [#allocation3], %s20
      %s22 = sshll.u32 [#allocation2], 4
      %s23 = int_to_ptr.vmem [resolvable:$true] %s22
      %28 = dma.hbm_to_vmem [thread:$0]  %s0, 768, %s23, [#allocation3], 384, 384, 24
    $region5: #{tpu_custom_call.1} parent=1 // pred_fallthru
      _
    // Predicated region
    $region6: #{tpu_custom_call.1} parent=1 // pred_check
      _
    $region7: #{tpu_custom_call.1} parent=1 // pred_check_branch
      %30 = sbr.rel (0) target = $region9
    $region8: #{tpu_custom_call.1} parent=1 // pred_region
      %s32 = ssub.s32 128, 128
      %33 = vsyncadd [#allocation6], %s32
      %s34 = sshll.u32 [#allocation5], 4
      %s35 = int_to_ptr.vmem [resolvable:$true] %s34
      %40 = dma.hbm_to_vmem [thread:$0]  %s1, 128, %s35, [#allocation6], 64, 64, 4
    $region9: #{tpu_custom_call.1} parent=1 // pred_fallthru
      _
    // Predicated region
    $region10: #{tpu_custom_call.1} parent=1 // pred_check
      _
    $region11: #{tpu_custom_call.1} parent=1 // pred_check_branch
      %42 = sbr.rel (0) target = $region13
    $region12: #{tpu_custom_call.1} parent=1 // pred_region
      %s44 = ssub.s32 61440, 61440
      %45 = vsyncadd [#allocation6], %s44
      %s46 = sshll.u32 [#allocation7], 4
      %s47 = int_to_ptr.vmem [resolvable:$true] %s46
      %52 = dma.hbm_to_vmem [thread:$0]  %s2, 61440, %s47, [#allocation6], 640, 640, 40
    $region13: #{tpu_custom_call.1} parent=1 // pred_fallthru
      _
    // Predicated region
    $region14: #{tpu_custom_call.1} parent=1 // pred_check
      _
    $region15: #{tpu_custom_call.1} parent=1 // pred_check_branch
      %54 = sbr.rel (0) target = $region17
    $region16: #{tpu_custom_call.1} parent=1 // pred_region
      %s56 = ssub.s32 40960, 40960
      %57 = vsyncadd [#allocation9], %s56
      %s58 = sshll.u32 [#allocation8], 4
      %s59 = int_to_ptr.vmem [resolvable:$true] %s58
      %64 = dma.hbm_to_vmem [thread:$0]  %s3, 40960, %s59, [#allocation9], 256, 256, 16
    $region17: #{tpu_custom_call.1} parent=1 // pred_fallthru
      _
    // Predicated region
    $region18: #{tpu_custom_call.1} parent=1 // pred_check
      _
    $region19: #{tpu_custom_call.1} parent=1 // pred_check_branch
      %66 = sbr.rel (0) target = $region21
    $region20: #{tpu_custom_call.1} parent=1 // pred_region
      %s68 = ssub.s32 4096, 4096
      %69 = vsyncadd [#allocation9], %s68
      %s70 = sshll.u32 [#allocation10], 4
      %s71 = int_to_ptr.vmem [resolvable:$true] %s70
      %76 = dma.hbm_to_vmem [thread:$0]  %s4, 4096, %s71, [#allocation9], 256, 256, 16
    $region21: #{tpu_custom_call.1} parent=1 // pred_fallthru
      _
    // Predicated region
    $region22: #{tpu_custom_call.1} parent=1 // pred_check
      _
    $region23: #{tpu_custom_call.1} parent=1 // pred_check_branch
      %78 = sbr.rel (0) target = $region25
    $region24: #{tpu_custom_call.1} parent=1 // pred_region
      %s80 = ssub.s32 8192, 8192
      %81 = vsyncadd [#allocation12], %s80
      %s82 = sshll.u32 [#allocation11], 4
      %s83 = int_to_ptr.vmem [resolvable:$true] %s82
      %88 = dma.hbm_to_vmem [thread:$0]  %s5, 8192, %s83, [#allocation12], 128, 128, 8
    $region25: #{tpu_custom_call.1} parent=1 // pred_fallthru
      _
    // Predicated region
    $region26: #{tpu_custom_call.1} parent=1 // pred_check
      _
    $region27: #{tpu_custom_call.1} parent=1 // pred_check_branch
      %90 = sbr.rel (0) target = $region29
    $region28: #{tpu_custom_call.1} parent=1 // pred_region
      %s92 = ssub.s32 144, 144
      %93 = vsyncadd [#allocation12], %s92
      %s95 = sshll.u32 [#allocation13], 4
      %s96 = int_to_ptr.vmem [resolvable:$true] %s95
      %98 = dma.hbm_to_vmem [thread:$0]  %s6, 144, %s96, [#allocation12]
    $region29: #{tpu_custom_call.1} parent=1 // pred_fallthru
      _
    // Predicated region
    $region30: #{tpu_custom_call.1} parent=1 // pred_check
      _
    $region31: #{tpu_custom_call.1} parent=1 // pred_check_branch
      %100 = sbr.rel (0) target = $region33
    $region32: #{tpu_custom_call.1} parent=1 // pred_region
      %101 = dma.done [#allocation3], 768
    $region33: #{tpu_custom_call.1} parent=1 // pred_fallthru
      _
    // Predicated region
    $region34: #{tpu_custom_call.1} parent=1 // pred_check
      _
    $region35: #{tpu_custom_call.1} parent=1 // pred_check_branch
      %103 = sbr.rel (0) target = $region37
    $region36: #{tpu_custom_call.1} parent=1 // pred_region
      %104 = dma.done [#allocation6], 128
    $region37: #{tpu_custom_call.1} parent=1 // pred_fallthru
      _
    // Predicated region
    $region38: #{tpu_custom_call.1} parent=1 // pred_check
      _
    $region39: #{tpu_custom_call.1} parent=1 // pred_check_branch
      %106 = sbr.rel (0) target = $region41
    $region40: #{tpu_custom_call.1} parent=1 // pred_region
      %107 = dma.done [#allocation6], 61440
    $region41: #{tpu_custom_call.1} parent=1 // pred_fallthru
      _
    // Predicated region
    $region42: #{tpu_custom_call.1} parent=1 // pred_check
      _
    $region43: #{tpu_custom_call.1} parent=1 // pred_check_branch
      %109 = sbr.rel (0) target = $region45
    $region44: #{tpu_custom_call.1} parent=1 // pred_region
      %110 = dma.done [#allocation9], 40960
    $region45: #{tpu_custom_call.1} parent=1 // pred_fallthru
      _
    // Predicated region
    $region46: #{tpu_custom_call.1} parent=1 // pred_check
      _
    $region47: #{tpu_custom_call.1} parent=1 // pred_check_branch
      %112 = sbr.rel (0) target = $region49
    $region48: #{tpu_custom_call.1} parent=1 // pred_region
      %113 = dma.done [#allocation9], 4096
    $region49: #{tpu_custom_call.1} parent=1 // pred_fallthru
      _
    // Predicated region
    $region50: #{tpu_custom_call.1} parent=1 // pred_check
      _
    $region51: #{tpu_custom_call.1} parent=1 // pred_check_branch
      %115 = sbr.rel (0) target = $region53
    $region52: #{tpu_custom_call.1} parent=1 // pred_region
      %116 = dma.done [#allocation12], 8192
    $region53: #{tpu_custom_call.1} parent=1 // pred_fallthru
      _
    // Predicated region
    $region54: #{tpu_custom_call.1} parent=1 // pred_check
      _
    $region55: #{tpu_custom_call.1} parent=1 // pred_check_branch
      %118 = sbr.rel (0) target = $region57
    $region56: #{tpu_custom_call.1} parent=1 // pred_region
      %119 = dma.done [#allocation12], 144
    $region57: #{tpu_custom_call.1} parent=1 // pred_fallthru
      _
    %v121 = vld [vmem:[#allocation2] sm:$0xff]
    %v122 = vld [vmem:[#allocation2 + $0x8] sm:$0xff]
    %v123 = vld [vmem:[#allocation2 + $0x10] sm:$0xff]
    %v124 = vld [vmem:[#allocation2 + $0x18] sm:$0xff]
    %v125 = vld [vmem:[#allocation2 + $0x20] sm:$0xff]
    %v126 = vld [vmem:[#allocation2 + $0x28] sm:$0xff]
    %v127 = vld [vmem:[#allocation7] sm:$0xff]
    %v128 = vld [vmem:[#allocation7 + $0x8] sm:$0xff]
    %v129 = vld [vmem:[#allocation7 + $0x10] sm:$0xff]
    %v130 = vld [vmem:[#allocation7 + $0x18] sm:$0xff]
    %v131 = vld [vmem:[#allocation7 + $0x20] sm:$0xff]
    %v132 = vld [vmem:[#allocation7 + $0x28] sm:$0xff]
    %v133 = vld [vmem:[#allocation7 + $0x30] sm:$0xff]
    %v134 = vld [vmem:[#allocation7 + $0x38] sm:$0xff]
    %v135 = vld [vmem:[#allocation7 + $0x40] sm:$0xff]
    %v136 = vld [vmem:[#allocation7 + $0x48] sm:$0xff]
    %v137 = vld [vmem:[#allocation7 + $0x50] sm:$0xff]
    %v138 = vld [vmem:[#allocation7 + $0x58] sm:$0xff]
    %v139 = vld [vmem:[#allocation7 + $0x60] sm:$0xff]
    %v140 = vld [vmem:[#allocation7 + $0x68] sm:$0xff]
    %v141 = vld [vmem:[#allocation7 + $0x70] sm:$0xff]
    %v142 = vld [vmem:[#allocation7 + $0x78] sm:$0xff]
    %v143 = vld [vmem:[#allocation7 + $0x80] sm:$0xff]
    %v144 = vld [vmem:[#allocation7 + $0x88] sm:$0xff]
    %v145 = vld [vmem:[#allocation7 + $0x90] sm:$0xff]
    %v146 = vld [vmem:[#allocation7 + $0x98] sm:$0xff]
    %v147 = vld [vmem:[#allocation7 + $0xa0] sm:$0xff]
    %v148 = vld [vmem:[#allocation7 + $0xa8] sm:$0xff]
    %v149 = vld [vmem:[#allocation7 + $0xb0] sm:$0xff]
    %v150 = vld [vmem:[#allocation7 + $0xb8] sm:$0xff]
    %v151 = vld [vmem:[#allocation7 + $0xc0] sm:$0xff]
    %v152 = vld [vmem:[#allocation7 + $0xc8] sm:$0xff]
    %v153 = vld [vmem:[#allocation7 + $0xd0] sm:$0xff]
    %v154 = vld [vmem:[#allocation7 + $0xd8] sm:$0xff]
    %v155 = vld [vmem:[#allocation7 + $0xe0] sm:$0xff]
    %v156 = vld [vmem:[#allocation7 + $0xe8] sm:$0xff]
    %v157 = vld [vmem:[#allocation7 + $0xf0] sm:$0xff]
    %v158 = vld [vmem:[#allocation7 + $0xf8] sm:$0xff]
    %v159 = vld [vmem:[#allocation7 + $0x100] sm:$0xff]
    %v160 = vld [vmem:[#allocation7 + $0x108] sm:$0xff]
    %v161 = vld [vmem:[#allocation7 + $0x110] sm:$0xff]
    %v162 = vld [vmem:[#allocation7 + $0x118] sm:$0xff]
    %v163 = vld [vmem:[#allocation7 + $0x120] sm:$0xff]
    %v164 = vld [vmem:[#allocation7 + $0x128] sm:$0xff]
    %v165 = vld [vmem:[#allocation7 + $0x130] sm:$0xff]
    %v166 = vld [vmem:[#allocation7 + $0x138] sm:$0xff]
    %v167 = vld [vmem:[#allocation7 + $0x140] sm:$0xff]
    %v168 = vld [vmem:[#allocation7 + $0x148] sm:$0xff]
    %v169 = vld [vmem:[#allocation7 + $0x150] sm:$0xff]
    %v170 = vld [vmem:[#allocation7 + $0x158] sm:$0xff]
    %v171 = vld [vmem:[#allocation7 + $0x160] sm:$0xff]
    %v172 = vld [vmem:[#allocation7 + $0x168] sm:$0xff]
    %v173 = vld [vmem:[#allocation7 + $0x170] sm:$0xff]
    %v174 = vld [vmem:[#allocation7 + $0x178] sm:$0xff]
    %v175 = vld [vmem:[#allocation7 + $0x180] sm:$0xff]
    %v176 = vld [vmem:[#allocation7 + $0x188] sm:$0xff]
    %v177 = vld [vmem:[#allocation7 + $0x190] sm:$0xff]
    %v178 = vld [vmem:[#allocation7 + $0x198] sm:$0xff]
    %v179 = vld [vmem:[#allocation7 + $0x1a0] sm:$0xff]
    %v180 = vld [vmem:[#allocation7 + $0x1a8] sm:$0xff]
    %v181 = vld [vmem:[#allocation7 + $0x1b0] sm:$0xff]
    %v182 = vld [vmem:[#allocation7 + $0x1b8] sm:$0xff]
    %v183 = vld [vmem:[#allocation7 + $0x1c0] sm:$0xff]
    %v184 = vld [vmem:[#allocation7 + $0x1c8] sm:$0xff]
    %v185 = vld [vmem:[#allocation7 + $0x1d0] sm:$0xff]
    %v186 = vld [vmem:[#allocation7 + $0x1d8] sm:$0xff]
    %v187 = vld [vmem:[#allocation7 + $0x1e0] sm:$0xff]
    %v188 = vld [vmem:[#allocation7 + $0x1e8] sm:$0xff]
    %v189 = vld [vmem:[#allocation7 + $0x1f0] sm:$0xff]
    %v190 = vld [vmem:[#allocation7 + $0x1f8] sm:$0xff]
    %v191 = vld [vmem:[#allocation7 + $0x200] sm:$0xff]
    %v192 = vld [vmem:[#allocation7 + $0x208] sm:$0xff]
    %v193 = vld [vmem:[#allocation7 + $0x210] sm:$0xff]
    %v194 = vld [vmem:[#allocation7 + $0x218] sm:$0xff]
    %v195 = vld [vmem:[#allocation7 + $0x220] sm:$0xff]
    %v196 = vld [vmem:[#allocation7 + $0x228] sm:$0xff]
    %v197 = vld [vmem:[#allocation7 + $0x230] sm:$0xff]
    %v198 = vld [vmem:[#allocation7 + $0x238] sm:$0xff]
    %v199 = vld [vmem:[#allocation7 + $0x240] sm:$0xff]
    %v200 = vld [vmem:[#allocation7 + $0x248] sm:$0xff]
    %v201 = vld [vmem:[#allocation7 + $0x250] sm:$0xff]
    %v202 = vld [vmem:[#allocation7 + $0x258] sm:$0xff]
    %v203 = vld [vmem:[#allocation7 + $0x260] sm:$0xff]
    %v204 = vld [vmem:[#allocation7 + $0x268] sm:$0xff]
    %v205 = vld [vmem:[#allocation7 + $0x270] sm:$0xff]
    %v206 = vld [vmem:[#allocation7 + $0x278] sm:$0xff]
    %v207 = vld [vmem:[#allocation7 + $0x280] sm:$0xff]
    %v208 = vld [vmem:[#allocation7 + $0x288] sm:$0xff]
    %v209 = vld [vmem:[#allocation7 + $0x290] sm:$0xff]
    %v210 = vld [vmem:[#allocation7 + $0x298] sm:$0xff]
    %v211 = vld [vmem:[#allocation7 + $0x2a0] sm:$0xff]
    %v212 = vld [vmem:[#allocation7 + $0x2a8] sm:$0xff]
    %v213 = vld [vmem:[#allocation7 + $0x2b0] sm:$0xff]
    %v214 = vld [vmem:[#allocation7 + $0x2b8] sm:$0xff]
    %v215 = vld [vmem:[#allocation7 + $0x2c0] sm:$0xff]
    %v216 = vld [vmem:[#allocation7 + $0x2c8] sm:$0xff]
    %v217 = vld [vmem:[#allocation7 + $0x2d0] sm:$0xff]
    %v218 = vld [vmem:[#allocation7 + $0x2d8] sm:$0xff]
    %v219 = vld [vmem:[#allocation7 + $0x2e0] sm:$0xff]
    %v220 = vld [vmem:[#allocation7 + $0x2e8] sm:$0xff]
    %v221 = vld [vmem:[#allocation7 + $0x2f0] sm:$0xff]
    %v222 = vld [vmem:[#allocation7 + $0x2f8] sm:$0xff]
    %v223 = vld [vmem:[#allocation7 + $0x300] sm:$0xff]
    %v224 = vld [vmem:[#allocation7 + $0x308] sm:$0xff]
    %v225 = vld [vmem:[#allocation7 + $0x310] sm:$0xff]
    %v226 = vld [vmem:[#allocation7 + $0x318] sm:$0xff]
    %v227 = vld [vmem:[#allocation7 + $0x320] sm:$0xff]
    %v228 = vld [vmem:[#allocation7 + $0x328] sm:$0xff]
    %v229 = vld [vmem:[#allocation7 + $0x330] sm:$0xff]
    %v230 = vld [vmem:[#allocation7 + $0x338] sm:$0xff]
    %v231 = vld [vmem:[#allocation7 + $0x340] sm:$0xff]
    %v232 = vld [vmem:[#allocation7 + $0x348] sm:$0xff]
    %v233 = vld [vmem:[#allocation7 + $0x350] sm:$0xff]
    %v234 = vld [vmem:[#allocation7 + $0x358] sm:$0xff]
    %v235 = vld [vmem:[#allocation7 + $0x360] sm:$0xff]
    %v236 = vld [vmem:[#allocation7 + $0x368] sm:$0xff]
    %v237 = vld [vmem:[#allocation7 + $0x370] sm:$0xff]
    %v238 = vld [vmem:[#allocation7 + $0x378] sm:$0xff]
    %v239 = vld [vmem:[#allocation7 + $0x380] sm:$0xff]
    %v240 = vld [vmem:[#allocation7 + $0x388] sm:$0xff]
    %v241 = vld [vmem:[#allocation7 + $0x390] sm:$0xff]
    %v242 = vld [vmem:[#allocation7 + $0x398] sm:$0xff]
    %v243 = vld [vmem:[#allocation7 + $0x3a0] sm:$0xff]
    %v244 = vld [vmem:[#allocation7 + $0x3a8] sm:$0xff]
    %v245 = vld [vmem:[#allocation7 + $0x3b0] sm:$0xff]
    %v246 = vld [vmem:[#allocation7 + $0x3b8] sm:$0xff]
    %v247 = vld [vmem:[#allocation7 + $0x3c0] sm:$0xff]
    %v248 = vld [vmem:[#allocation7 + $0x3c8] sm:$0xff]
    %v249 = vld [vmem:[#allocation7 + $0x3d0] sm:$0xff]
    %v250 = vld [vmem:[#allocation7 + $0x3d8] sm:$0xff]
    %v251 = vld [vmem:[#allocation7 + $0x3e0] sm:$0xff]
    %v252 = vld [vmem:[#allocation7 + $0x3e8] sm:$0xff]
    %v253 = vld [vmem:[#allocation7 + $0x3f0] sm:$0xff]
    %v254 = vld [vmem:[#allocation7 + $0x3f8] sm:$0xff]
    %v255 = vld [vmem:[#allocation7 + $0x400] sm:$0xff]
    %v256 = vld [vmem:[#allocation7 + $0x408] sm:$0xff]
    %v257 = vld [vmem:[#allocation7 + $0x410] sm:$0xff]
    %v258 = vld [vmem:[#allocation7 + $0x418] sm:$0xff]
    %v259 = vld [vmem:[#allocation7 + $0x420] sm:$0xff]
    %v260 = vld [vmem:[#allocation7 + $0x428] sm:$0xff]
    %v261 = vld [vmem:[#allocation7 + $0x430] sm:$0xff]
    %v262 = vld [vmem:[#allocation7 + $0x438] sm:$0xff]
    %v263 = vld [vmem:[#allocation7 + $0x440] sm:$0xff]
    %v264 = vld [vmem:[#allocation7 + $0x448] sm:$0xff]
    %v265 = vld [vmem:[#allocation7 + $0x450] sm:$0xff]
    %v266 = vld [vmem:[#allocation7 + $0x458] sm:$0xff]
    %v267 = vld [vmem:[#allocation7 + $0x460] sm:$0xff]
    %v268 = vld [vmem:[#allocation7 + $0x468] sm:$0xff]
    %v269 = vld [vmem:[#allocation7 + $0x470] sm:$0xff]
    %v270 = vld [vmem:[#allocation7 + $0x478] sm:$0xff]
    %v271 = vld [vmem:[#allocation7 + $0x480] sm:$0xff]
    %v272 = vld [vmem:[#allocation7 + $0x488] sm:$0xff]
    %v273 = vld [vmem:[#allocation7 + $0x490] sm:$0xff]
    %v274 = vld [vmem:[#allocation7 + $0x498] sm:$0xff]
    %v275 = vld [vmem:[#allocation7 + $0x4a0] sm:$0xff]
    %v276 = vld [vmem:[#allocation7 + $0x4a8] sm:$0xff]
    %v277 = vld [vmem:[#allocation7 + $0x4b0] sm:$0xff]
    %v278 = vld [vmem:[#allocation7 + $0x4b8] sm:$0xff]
    %v279 = vld [vmem:[#allocation7 + $0x4c0] sm:$0xff]
    %v280 = vld [vmem:[#allocation7 + $0x4c8] sm:$0xff]
    %v281 = vld [vmem:[#allocation7 + $0x4d0] sm:$0xff]
    %v282 = vld [vmem:[#allocation7 + $0x4d8] sm:$0xff]
    %v283 = vld [vmem:[#allocation7 + $0x4e0] sm:$0xff]
    %v284 = vld [vmem:[#allocation7 + $0x4e8] sm:$0xff]
    %v285 = vld [vmem:[#allocation7 + $0x4f0] sm:$0xff]
    %v286 = vld [vmem:[#allocation7 + $0x4f8] sm:$0xff]
    %v287 = vld [vmem:[#allocation7 + $0x500] sm:$0xff]
    %v288 = vld [vmem:[#allocation7 + $0x508] sm:$0xff]
    %v289 = vld [vmem:[#allocation7 + $0x510] sm:$0xff]
    %v290 = vld [vmem:[#allocation7 + $0x518] sm:$0xff]
    %v291 = vld [vmem:[#allocation7 + $0x520] sm:$0xff]
    %v292 = vld [vmem:[#allocation7 + $0x528] sm:$0xff]
    %v293 = vld [vmem:[#allocation7 + $0x530] sm:$0xff]
    %v294 = vld [vmem:[#allocation7 + $0x538] sm:$0xff]
    %v295 = vld [vmem:[#allocation7 + $0x540] sm:$0xff]
    %v296 = vld [vmem:[#allocation7 + $0x548] sm:$0xff]
    %v297 = vld [vmem:[#allocation7 + $0x550] sm:$0xff]
    %v298 = vld [vmem:[#allocation7 + $0x558] sm:$0xff]
    %v299 = vld [vmem:[#allocation7 + $0x560] sm:$0xff]
    %v300 = vld [vmem:[#allocation7 + $0x568] sm:$0xff]
    %v301 = vld [vmem:[#allocation7 + $0x570] sm:$0xff]
    %v302 = vld [vmem:[#allocation7 + $0x578] sm:$0xff]
    %v303 = vld [vmem:[#allocation7 + $0x580] sm:$0xff]
    %v304 = vld [vmem:[#allocation7 + $0x588] sm:$0xff]
    %v305 = vld [vmem:[#allocation7 + $0x590] sm:$0xff]
    %v306 = vld [vmem:[#allocation7 + $0x598] sm:$0xff]
    %v307 = vld [vmem:[#allocation7 + $0x5a0] sm:$0xff]
    %v308 = vld [vmem:[#allocation7 + $0x5a8] sm:$0xff]
    %v309 = vld [vmem:[#allocation7 + $0x5b0] sm:$0xff]
    %v310 = vld [vmem:[#allocation7 + $0x5b8] sm:$0xff]
    %v311 = vld [vmem:[#allocation7 + $0x5c0] sm:$0xff]
    %v312 = vld [vmem:[#allocation7 + $0x5c8] sm:$0xff]
    %v313 = vld [vmem:[#allocation7 + $0x5d0] sm:$0xff]
    %v314 = vld [vmem:[#allocation7 + $0x5d8] sm:$0xff]
    %v315 = vld [vmem:[#allocation7 + $0x5e0] sm:$0xff]
    %v316 = vld [vmem:[#allocation7 + $0x5e8] sm:$0xff]
    %v317 = vld [vmem:[#allocation7 + $0x5f0] sm:$0xff]
    %v318 = vld [vmem:[#allocation7 + $0x5f8] sm:$0xff]
    %v319 = vld [vmem:[#allocation7 + $0x600] sm:$0xff]
    %v320 = vld [vmem:[#allocation7 + $0x608] sm:$0xff]
    %v321 = vld [vmem:[#allocation7 + $0x610] sm:$0xff]
    %v322 = vld [vmem:[#allocation7 + $0x618] sm:$0xff]
    %v323 = vld [vmem:[#allocation7 + $0x620] sm:$0xff]
    %v324 = vld [vmem:[#allocation7 + $0x628] sm:$0xff]
    %v325 = vld [vmem:[#allocation7 + $0x630] sm:$0xff]
    %v326 = vld [vmem:[#allocation7 + $0x638] sm:$0xff]
    %v327 = vld [vmem:[#allocation7 + $0x640] sm:$0xff]
    %v328 = vld [vmem:[#allocation7 + $0x648] sm:$0xff]
    %v329 = vld [vmem:[#allocation7 + $0x650] sm:$0xff]
    %v330 = vld [vmem:[#allocation7 + $0x658] sm:$0xff]
    %v331 = vld [vmem:[#allocation7 + $0x660] sm:$0xff]
    %v332 = vld [vmem:[#allocation7 + $0x668] sm:$0xff]
    %v333 = vld [vmem:[#allocation7 + $0x670] sm:$0xff]
    %v334 = vld [vmem:[#allocation7 + $0x678] sm:$0xff]
    %v335 = vld [vmem:[#allocation7 + $0x680] sm:$0xff]
    %v336 = vld [vmem:[#allocation7 + $0x688] sm:$0xff]
    %v337 = vld [vmem:[#allocation7 + $0x690] sm:$0xff]
    %v338 = vld [vmem:[#allocation7 + $0x698] sm:$0xff]
    %v339 = vld [vmem:[#allocation7 + $0x6a0] sm:$0xff]
    %v340 = vld [vmem:[#allocation7 + $0x6a8] sm:$0xff]
    %v341 = vld [vmem:[#allocation7 + $0x6b0] sm:$0xff]
    %v342 = vld [vmem:[#allocation7 + $0x6b8] sm:$0xff]
    %v343 = vld [vmem:[#allocation7 + $0x6c0] sm:$0xff]
    %v344 = vld [vmem:[#allocation7 + $0x6c8] sm:$0xff]
    %v345 = vld [vmem:[#allocation7 + $0x6d0] sm:$0xff]
    %v346 = vld [vmem:[#allocation7 + $0x6d8] sm:$0xff]
    %v347 = vld [vmem:[#allocation7 + $0x6e0] sm:$0xff]
    %v348 = vld [vmem:[#allocation7 + $0x6e8] sm:$0xff]
    %v349 = vld [vmem:[#allocation7 + $0x6f0] sm:$0xff]
    %v350 = vld [vmem:[#allocation7 + $0x6f8] sm:$0xff]
    %v351 = vld [vmem:[#allocation7 + $0x700] sm:$0xff]
    %v352 = vld [vmem:[#allocation7 + $0x708] sm:$0xff]
    %v353 = vld [vmem:[#allocation7 + $0x710] sm:$0xff]
    %v354 = vld [vmem:[#allocation7 + $0x718] sm:$0xff]
    %v355 = vld [vmem:[#allocation7 + $0x720] sm:$0xff]
    %v356 = vld [vmem:[#allocation7 + $0x728] sm:$0xff]
    %v357 = vld [vmem:[#allocation7 + $0x730] sm:$0xff]
    %v358 = vld [vmem:[#allocation7 + $0x738] sm:$0xff]
    %v359 = vld [vmem:[#allocation7 + $0x740] sm:$0xff]
    %v360 = vld [vmem:[#allocation7 + $0x748] sm:$0xff]
    %v361 = vld [vmem:[#allocation7 + $0x750] sm:$0xff]
    %v362 = vld [vmem:[#allocation7 + $0x758] sm:$0xff]
    %v363 = vld [vmem:[#allocation7 + $0x760] sm:$0xff]
    %v364 = vld [vmem:[#allocation7 + $0x768] sm:$0xff]
    %v365 = vld [vmem:[#allocation7 + $0x770] sm:$0xff]
    %v366 = vld [vmem:[#allocation7 + $0x778] sm:$0xff]
    %v367 = vld [vmem:[#allocation7 + $0x780] sm:$0xff]
    %v368 = vld [vmem:[#allocation7 + $0x788] sm:$0xff]
    %v369 = vld [vmem:[#allocation7 + $0x790] sm:$0xff]
    %v370 = vld [vmem:[#allocation7 + $0x798] sm:$0xff]
    %v371 = vld [vmem:[#allocation7 + $0x7a0] sm:$0xff]
    %v372 = vld [vmem:[#allocation7 + $0x7a8] sm:$0xff]
    %v373 = vld [vmem:[#allocation7 + $0x7b0] sm:$0xff]
    %v374 = vld [vmem:[#allocation7 + $0x7b8] sm:$0xff]
    %v375 = vld [vmem:[#allocation7 + $0x7c0] sm:$0xff]
    %v376 = vld [vmem:[#allocation7 + $0x7c8] sm:$0xff]
    %v377 = vld [vmem:[#allocation7 + $0x7d0] sm:$0xff]
    %v378 = vld [vmem:[#allocation7 + $0x7d8] sm:$0xff]
    %v379 = vld [vmem:[#allocation7 + $0x7e0] sm:$0xff]
    %v380 = vld [vmem:[#allocation7 + $0x7e8] sm:$0xff]
    %v381 = vld [vmem:[#allocation7 + $0x7f0] sm:$0xff]
    %v382 = vld [vmem:[#allocation7 + $0x7f8] sm:$0xff]
    %v383 = vld [vmem:[#allocation7 + $0x800] sm:$0xff]
    %v384 = vld [vmem:[#allocation7 + $0x808] sm:$0xff]
    %v385 = vld [vmem:[#allocation7 + $0x810] sm:$0xff]
    %v386 = vld [vmem:[#allocation7 + $0x818] sm:$0xff]
    %v387 = vld [vmem:[#allocation7 + $0x820] sm:$0xff]
    %v388 = vld [vmem:[#allocation7 + $0x828] sm:$0xff]
    %v389 = vld [vmem:[#allocation7 + $0x830] sm:$0xff]
    %v390 = vld [vmem:[#allocation7 + $0x838] sm:$0xff]
    %v391 = vld [vmem:[#allocation7 + $0x840] sm:$0xff]
    %v392 = vld [vmem:[#allocation7 + $0x848] sm:$0xff]
    %v393 = vld [vmem:[#allocation7 + $0x850] sm:$0xff]
    %v394 = vld [vmem:[#allocation7 + $0x858] sm:$0xff]
    %v395 = vld [vmem:[#allocation7 + $0x860] sm:$0xff]
    %v396 = vld [vmem:[#allocation7 + $0x868] sm:$0xff]
    %v397 = vld [vmem:[#allocation7 + $0x870] sm:$0xff]
    %v398 = vld [vmem:[#allocation7 + $0x878] sm:$0xff]
    %v399 = vld [vmem:[#allocation7 + $0x880] sm:$0xff]
    %v400 = vld [vmem:[#allocation7 + $0x888] sm:$0xff]
    %v401 = vld [vmem:[#allocation7 + $0x890] sm:$0xff]
    %v402 = vld [vmem:[#allocation7 + $0x898] sm:$0xff]
    %v403 = vld [vmem:[#allocation7 + $0x8a0] sm:$0xff]
    %v404 = vld [vmem:[#allocation7 + $0x8a8] sm:$0xff]
    %v405 = vld [vmem:[#allocation7 + $0x8b0] sm:$0xff]
    %v406 = vld [vmem:[#allocation7 + $0x8b8] sm:$0xff]
    %v407 = vld [vmem:[#allocation7 + $0x8c0] sm:$0xff]
    %v408 = vld [vmem:[#allocation7 + $0x8c8] sm:$0xff]
    %v409 = vld [vmem:[#allocation7 + $0x8d0] sm:$0xff]
    %v410 = vld [vmem:[#allocation7 + $0x8d8] sm:$0xff]
    %v411 = vld [vmem:[#allocation7 + $0x8e0] sm:$0xff]
    %v412 = vld [vmem:[#allocation7 + $0x8e8] sm:$0xff]
    %v413 = vld [vmem:[#allocation7 + $0x8f0] sm:$0xff]
    %v414 = vld [vmem:[#allocation7 + $0x8f8] sm:$0xff]
    %v415 = vld [vmem:[#allocation7 + $0x900] sm:$0xff]
    %v416 = vld [vmem:[#allocation7 + $0x908] sm:$0xff]
    %v417 = vld [vmem:[#allocation7 + $0x910] sm:$0xff]
    %v418 = vld [vmem:[#allocation7 + $0x918] sm:$0xff]
    %v419 = vld [vmem:[#allocation7 + $0x920] sm:$0xff]
    %v420 = vld [vmem:[#allocation7 + $0x928] sm:$0xff]
    %v421 = vld [vmem:[#allocation7 + $0x930] sm:$0xff]
    %v422 = vld [vmem:[#allocation7 + $0x938] sm:$0xff]
    %v423 = vld [vmem:[#allocation7 + $0x940] sm:$0xff]
    %v424 = vld [vmem:[#allocation7 + $0x948] sm:$0xff]
    %v425 = vld [vmem:[#allocation7 + $0x950] sm:$0xff]
    %v426 = vld [vmem:[#allocation7 + $0x958] sm:$0xff]
    %v427 = vld [vmem:[#allocation7 + $0x960] sm:$0xff]
    %v428 = vld [vmem:[#allocation7 + $0x968] sm:$0xff]
    %v429 = vld [vmem:[#allocation7 + $0x970] sm:$0xff]
    %v430 = vld [vmem:[#allocation7 + $0x978] sm:$0xff]
    %v431 = vld [vmem:[#allocation7 + $0x980] sm:$0xff]
    %v432 = vld [vmem:[#allocation7 + $0x988] sm:$0xff]
    %v433 = vld [vmem:[#allocation7 + $0x990] sm:$0xff]
    %v434 = vld [vmem:[#allocation7 + $0x998] sm:$0xff]
    %v435 = vld [vmem:[#allocation7 + $0x9a0] sm:$0xff]
    %v436 = vld [vmem:[#allocation7 + $0x9a8] sm:$0xff]
    %v437 = vld [vmem:[#allocation7 + $0x9b0] sm:$0xff]
    %v438 = vld [vmem:[#allocation7 + $0x9b8] sm:$0xff]
    %v439 = vld [vmem:[#allocation7 + $0x9c0] sm:$0xff]
    %v440 = vld [vmem:[#allocation7 + $0x9c8] sm:$0xff]
    %v441 = vld [vmem:[#allocation7 + $0x9d0] sm:$0xff]
    %v442 = vld [vmem:[#allocation7 + $0x9d8] sm:$0xff]
    %v443 = vld [vmem:[#allocation7 + $0x9e0] sm:$0xff]
    %v444 = vld [vmem:[#allocation7 + $0x9e8] sm:$0xff]
    %v445 = vld [vmem:[#allocation7 + $0x9f0] sm:$0xff]
    %v446 = vld [vmem:[#allocation7 + $0x9f8] sm:$0xff]
    %v447 = vld [vmem:[#allocation7 + $0xa00] sm:$0xff]
    %v448 = vld [vmem:[#allocation7 + $0xa08] sm:$0xff]
    %v449 = vld [vmem:[#allocation7 + $0xa10] sm:$0xff]
    %v450 = vld [vmem:[#allocation7 + $0xa18] sm:$0xff]
    %v451 = vld [vmem:[#allocation7 + $0xa20] sm:$0xff]
    %v452 = vld [vmem:[#allocation7 + $0xa28] sm:$0xff]
    %v453 = vld [vmem:[#allocation7 + $0xa30] sm:$0xff]
    %v454 = vld [vmem:[#allocation7 + $0xa38] sm:$0xff]
    %v455 = vld [vmem:[#allocation7 + $0xa40] sm:$0xff]
    %v456 = vld [vmem:[#allocation7 + $0xa48] sm:$0xff]
    %v457 = vld [vmem:[#allocation7 + $0xa50] sm:$0xff]
    %v458 = vld [vmem:[#allocation7 + $0xa58] sm:$0xff]
    %v459 = vld [vmem:[#allocation7 + $0xa60] sm:$0xff]
    %v460 = vld [vmem:[#allocation7 + $0xa68] sm:$0xff]
    %v461 = vld [vmem:[#allocation7 + $0xa70] sm:$0xff]
    %v462 = vld [vmem:[#allocation7 + $0xa78] sm:$0xff]
    %v463 = vld [vmem:[#allocation7 + $0xa80] sm:$0xff]
    %v464 = vld [vmem:[#allocation7 + $0xa88] sm:$0xff]
    %v465 = vld [vmem:[#allocation7 + $0xa90] sm:$0xff]
    %v466 = vld [vmem:[#allocation7 + $0xa98] sm:$0xff]
    %v467 = vld [vmem:[#allocation7 + $0xaa0] sm:$0xff]
    %v468 = vld [vmem:[#allocation7 + $0xaa8] sm:$0xff]
    %v469 = vld [vmem:[#allocation7 + $0xab0] sm:$0xff]
    %v470 = vld [vmem:[#allocation7 + $0xab8] sm:$0xff]
    %v471 = vld [vmem:[#allocation7 + $0xac0] sm:$0xff]
    %v472 = vld [vmem:[#allocation7 + $0xac8] sm:$0xff]
    %v473 = vld [vmem:[#allocation7 + $0xad0] sm:$0xff]
    %v474 = vld [vmem:[#allocation7 + $0xad8] sm:$0xff]
    %v475 = vld [vmem:[#allocation7 + $0xae0] sm:$0xff]
    %v476 = vld [vmem:[#allocation7 + $0xae8] sm:$0xff]
    %v477 = vld [vmem:[#allocation7 + $0xaf0] sm:$0xff]
    %v478 = vld [vmem:[#allocation7 + $0xaf8] sm:$0xff]
    %v479 = vld [vmem:[#allocation7 + $0xb00] sm:$0xff]
    %v480 = vld [vmem:[#allocation7 + $0xb08] sm:$0xff]
    %v481 = vld [vmem:[#allocation7 + $0xb10] sm:$0xff]
    %v482 = vld [vmem:[#allocation7 + $0xb18] sm:$0xff]
    %v483 = vld [vmem:[#allocation7 + $0xb20] sm:$0xff]
    %v484 = vld [vmem:[#allocation7 + $0xb28] sm:$0xff]
    %v485 = vld [vmem:[#allocation7 + $0xb30] sm:$0xff]
    %v486 = vld [vmem:[#allocation7 + $0xb38] sm:$0xff]
    %v487 = vld [vmem:[#allocation7 + $0xb40] sm:$0xff]
    %v488 = vld [vmem:[#allocation7 + $0xb48] sm:$0xff]
    %v489 = vld [vmem:[#allocation7 + $0xb50] sm:$0xff]
    %v490 = vld [vmem:[#allocation7 + $0xb58] sm:$0xff]
    %v491 = vld [vmem:[#allocation7 + $0xb60] sm:$0xff]
    %v492 = vld [vmem:[#allocation7 + $0xb68] sm:$0xff]
    %v493 = vld [vmem:[#allocation7 + $0xb70] sm:$0xff]
    %v494 = vld [vmem:[#allocation7 + $0xb78] sm:$0xff]
    %v495 = vld [vmem:[#allocation7 + $0xb80] sm:$0xff]
    %v496 = vld [vmem:[#allocation7 + $0xb88] sm:$0xff]
    %v497 = vld [vmem:[#allocation7 + $0xb90] sm:$0xff]
    %v498 = vld [vmem:[#allocation7 + $0xb98] sm:$0xff]
    %v499 = vld [vmem:[#allocation7 + $0xba0] sm:$0xff]
    %v500 = vld [vmem:[#allocation7 + $0xba8] sm:$0xff]
    %v501 = vld [vmem:[#allocation7 + $0xbb0] sm:$0xff]
    %v502 = vld [vmem:[#allocation7 + $0xbb8] sm:$0xff]
    %v503 = vld [vmem:[#allocation7 + $0xbc0] sm:$0xff]
    %v504 = vld [vmem:[#allocation7 + $0xbc8] sm:$0xff]
    %v505 = vld [vmem:[#allocation7 + $0xbd0] sm:$0xff]
    %v506 = vld [vmem:[#allocation7 + $0xbd8] sm:$0xff]
    %v507 = vld [vmem:[#allocation7 + $0xbe0] sm:$0xff]
    %v508 = vld [vmem:[#allocation7 + $0xbe8] sm:$0xff]
    %v509 = vld [vmem:[#allocation7 + $0xbf0] sm:$0xff]
    %v510 = vld [vmem:[#allocation7 + $0xbf8] sm:$0xff]
    %v511 = vld [vmem:[#allocation7 + $0xc00] sm:$0xff]
    %v512 = vld [vmem:[#allocation7 + $0xc08] sm:$0xff]
    %v513 = vld [vmem:[#allocation7 + $0xc10] sm:$0xff]
    %v514 = vld [vmem:[#allocation7 + $0xc18] sm:$0xff]
    %v515 = vld [vmem:[#allocation7 + $0xc20] sm:$0xff]
    %v516 = vld [vmem:[#allocation7 + $0xc28] sm:$0xff]
    %v517 = vld [vmem:[#allocation7 + $0xc30] sm:$0xff]
    %v518 = vld [vmem:[#allocation7 + $0xc38] sm:$0xff]
    %v519 = vld [vmem:[#allocation7 + $0xc40] sm:$0xff]
    %v520 = vld [vmem:[#allocation7 + $0xc48] sm:$0xff]
    %v521 = vld [vmem:[#allocation7 + $0xc50] sm:$0xff]
    %v522 = vld [vmem:[#allocation7 + $0xc58] sm:$0xff]
    %v523 = vld [vmem:[#allocation7 + $0xc60] sm:$0xff]
    %v524 = vld [vmem:[#allocation7 + $0xc68] sm:$0xff]
    %v525 = vld [vmem:[#allocation7 + $0xc70] sm:$0xff]
    %v526 = vld [vmem:[#allocation7 + $0xc78] sm:$0xff]
    %v527 = vld [vmem:[#allocation7 + $0xc80] sm:$0xff]
    %v528 = vld [vmem:[#allocation7 + $0xc88] sm:$0xff]
    %v529 = vld [vmem:[#allocation7 + $0xc90] sm:$0xff]
    %v530 = vld [vmem:[#allocation7 + $0xc98] sm:$0xff]
    %v531 = vld [vmem:[#allocation7 + $0xca0] sm:$0xff]
    %v532 = vld [vmem:[#allocation7 + $0xca8] sm:$0xff]
    %v533 = vld [vmem:[#allocation7 + $0xcb0] sm:$0xff]
    %v534 = vld [vmem:[#allocation7 + $0xcb8] sm:$0xff]
    %v535 = vld [vmem:[#allocation7 + $0xcc0] sm:$0xff]
    %v536 = vld [vmem:[#allocation7 + $0xcc8] sm:$0xff]
    %v537 = vld [vmem:[#allocation7 + $0xcd0] sm:$0xff]
    %v538 = vld [vmem:[#allocation7 + $0xcd8] sm:$0xff]
    %v539 = vld [vmem:[#allocation7 + $0xce0] sm:$0xff]
    %v540 = vld [vmem:[#allocation7 + $0xce8] sm:$0xff]
    %v541 = vld [vmem:[#allocation7 + $0xcf0] sm:$0xff]
    %v542 = vld [vmem:[#allocation7 + $0xcf8] sm:$0xff]
    %v543 = vld [vmem:[#allocation7 + $0xd00] sm:$0xff]
    %v544 = vld [vmem:[#allocation7 + $0xd08] sm:$0xff]
    %v545 = vld [vmem:[#allocation7 + $0xd10] sm:$0xff]
    %v546 = vld [vmem:[#allocation7 + $0xd18] sm:$0xff]
    %v547 = vld [vmem:[#allocation7 + $0xd20] sm:$0xff]
    %v548 = vld [vmem:[#allocation7 + $0xd28] sm:$0xff]
    %v549 = vld [vmem:[#allocation7 + $0xd30] sm:$0xff]
    %v550 = vld [vmem:[#allocation7 + $0xd38] sm:$0xff]
    %v551 = vld [vmem:[#allocation7 + $0xd40] sm:$0xff]
    %v552 = vld [vmem:[#allocation7 + $0xd48] sm:$0xff]
    %v553 = vld [vmem:[#allocation7 + $0xd50] sm:$0xff]
    %v554 = vld [vmem:[#allocation7 + $0xd58] sm:$0xff]
    %v555 = vld [vmem:[#allocation7 + $0xd60] sm:$0xff]
    %v556 = vld [vmem:[#allocation7 + $0xd68] sm:$0xff]
    %v557 = vld [vmem:[#allocation7 + $0xd70] sm:$0xff]
    %v558 = vld [vmem:[#allocation7 + $0xd78] sm:$0xff]
    %v559 = vld [vmem:[#allocation7 + $0xd80] sm:$0xff]
    %v560 = vld [vmem:[#allocation7 + $0xd88] sm:$0xff]
    %v561 = vld [vmem:[#allocation7 + $0xd90] sm:$0xff]
    %v562 = vld [vmem:[#allocation7 + $0xd98] sm:$0xff]
    %v563 = vld [vmem:[#allocation7 + $0xda0] sm:$0xff]
    %v564 = vld [vmem:[#allocation7 + $0xda8] sm:$0xff]
    %v565 = vld [vmem:[#allocation7 + $0xdb0] sm:$0xff]
    %v566 = vld [vmem:[#allocation7 + $0xdb8] sm:$0xff]
    %v567 = vld [vmem:[#allocation7 + $0xdc0] sm:$0xff]
    %v568 = vld [vmem:[#allocation7 + $0xdc8] sm:$0xff]
    %v569 = vld [vmem:[#allocation7 + $0xdd0] sm:$0xff]
    %v570 = vld [vmem:[#allocation7 + $0xdd8] sm:$0xff]
    %v571 = vld [vmem:[#allocation7 + $0xde0] sm:$0xff]
    %v572 = vld [vmem:[#allocation7 + $0xde8] sm:$0xff]
    %v573 = vld [vmem:[#allocation7 + $0xdf0] sm:$0xff]
    %v574 = vld [vmem:[#allocation7 + $0xdf8] sm:$0xff]
    %v575 = vld [vmem:[#allocation7 + $0xe00] sm:$0xff]
    %v576 = vld [vmem:[#allocation7 + $0xe08] sm:$0xff]
    %v577 = vld [vmem:[#allocation7 + $0xe10] sm:$0xff]
    %v578 = vld [vmem:[#allocation7 + $0xe18] sm:$0xff]
    %v579 = vld [vmem:[#allocation7 + $0xe20] sm:$0xff]
    %v580 = vld [vmem:[#allocation7 + $0xe28] sm:$0xff]
    %v581 = vld [vmem:[#allocation7 + $0xe30] sm:$0xff]
    %v582 = vld [vmem:[#allocation7 + $0xe38] sm:$0xff]
    %v583 = vld [vmem:[#allocation7 + $0xe40] sm:$0xff]
    %v584 = vld [vmem:[#allocation7 + $0xe48] sm:$0xff]
    %v585 = vld [vmem:[#allocation7 + $0xe50] sm:$0xff]
    %v586 = vld [vmem:[#allocation7 + $0xe58] sm:$0xff]
    %v587 = vld [vmem:[#allocation7 + $0xe60] sm:$0xff]
    %v588 = vld [vmem:[#allocation7 + $0xe68] sm:$0xff]
    %v589 = vld [vmem:[#allocation7 + $0xe70] sm:$0xff]
    %v590 = vld [vmem:[#allocation7 + $0xe78] sm:$0xff]
    %v591 = vld [vmem:[#allocation7 + $0xe80] sm:$0xff]
    %v592 = vld [vmem:[#allocation7 + $0xe88] sm:$0xff]
    %v593 = vld [vmem:[#allocation7 + $0xe90] sm:$0xff]
    %v594 = vld [vmem:[#allocation7 + $0xe98] sm:$0xff]
    %v595 = vld [vmem:[#allocation7 + $0xea0] sm:$0xff]
    %v596 = vld [vmem:[#allocation7 + $0xea8] sm:$0xff]
    %v597 = vld [vmem:[#allocation7 + $0xeb0] sm:$0xff]
    %v598 = vld [vmem:[#allocation7 + $0xeb8] sm:$0xff]
    %v599 = vld [vmem:[#allocation7 + $0xec0] sm:$0xff]
    %v600 = vld [vmem:[#allocation7 + $0xec8] sm:$0xff]
    %v601 = vld [vmem:[#allocation7 + $0xed0] sm:$0xff]
    %v602 = vld [vmem:[#allocation7 + $0xed8] sm:$0xff]
    %v603 = vld [vmem:[#allocation7 + $0xee0] sm:$0xff]
    %v604 = vld [vmem:[#allocation7 + $0xee8] sm:$0xff]
    %v605 = vld [vmem:[#allocation7 + $0xef0] sm:$0xff]
    %v606 = vld [vmem:[#allocation7 + $0xef8] sm:$0xff]
    %v613 = vunpack.c.l.b16 %v121
    %v614 = vunpack.c.h.b16 %v121
    %v615 = vunpack.c.l.b16 %v122
    %v616 = vunpack.c.h.b16 %v122
    %v617 = vunpack.c.l.b16 %v123
    %v618 = vunpack.c.h.b16 %v123
    %v619 = vunpack.c.l.b16 %v124
    %v620 = vunpack.c.h.b16 %v124
    %v621 = vunpack.c.l.b16 %v125
    %v622 = vunpack.c.h.b16 %v125
    %v623 = vunpack.c.l.b16 %v126
    %v624 = vunpack.c.h.b16 %v126
    %v625 = vpack.c.b16 %v619, %v613
    %v626 = vpack.c.b16 %v620, %v614
    %v627 = vpack.c.b16 %v621, %v615
    %v628 = vpack.c.b16 %v622, %v616
    %v629 = vpack.c.b16 %v623, %v617
    %v630 = vpack.c.b16 %v624, %v618
    %v1117 = vunpack.c.l.b16 %v127
    %v1118 = vunpack.c.h.b16 %v127
    %v1119 = vunpack.c.l.b16 %v128
    %v1120 = vunpack.c.h.b16 %v128
    %v1121 = vunpack.c.l.b16 %v129
    %v1122 = vunpack.c.h.b16 %v129
    %v1123 = vunpack.c.l.b16 %v130
    %v1124 = vunpack.c.h.b16 %v130
    %v1125 = vunpack.c.l.b16 %v131
    %v1126 = vunpack.c.h.b16 %v131
    %v1127 = vunpack.c.l.b16 %v132
    %v1128 = vunpack.c.h.b16 %v132
    %v1129 = vunpack.c.l.b16 %v133
    %v1130 = vunpack.c.h.b16 %v133
    %v1131 = vunpack.c.l.b16 %v134
    %v1132 = vunpack.c.h.b16 %v134
    %v1133 = vunpack.c.l.b16 %v135
    %v1134 = vunpack.c.h.b16 %v135
    %v1135 = vunpack.c.l.b16 %v136
    %v1136 = vunpack.c.h.b16 %v136
    %v1137 = vunpack.c.l.b16 %v137
    %v1138 = vunpack.c.h.b16 %v137
    %v1139 = vunpack.c.l.b16 %v138
    %v1140 = vunpack.c.h.b16 %v138
    %v1141 = vunpack.c.l.b16 %v139
    %v1142 = vunpack.c.h.b16 %v139
    %v1143 = vunpack.c.l.b16 %v140
    %v1144 = vunpack.c.h.b16 %v140
    %v1145 = vunpack.c.l.b16 %v141
    %v1146 = vunpack.c.h.b16 %v141
    %v1147 = vunpack.c.l.b16 %v142
    %v1148 = vunpack.c.h.b16 %v142
    %v1149 = vunpack.c.l.b16 %v143
    %v1150 = vunpack.c.h.b16 %v143
    %v1151 = vunpack.c.l.b16 %v144
    %v1152 = vunpack.c.h.b16 %v144
    %v1153 = vunpack.c.l.b16 %v145
    %v1154 = vunpack.c.h.b16 %v145
    %v1155 = vunpack.c.l.b16 %v146
    %v1156 = vunpack.c.h.b16 %v146
    %v1157 = vunpack.c.l.b16 %v147
    %v1158 = vunpack.c.h.b16 %v147
    %v1159 = vunpack.c.l.b16 %v148
    %v1160 = vunpack.c.h.b16 %v148
    %v1161 = vunpack.c.l.b16 %v149
    %v1162 = vunpack.c.h.b16 %v149
    %v1163 = vunpack.c.l.b16 %v150
    %v1164 = vunpack.c.h.b16 %v150
    %v1165 = vunpack.c.l.b16 %v151
    %v1166 = vunpack.c.h.b16 %v151
    %v1167 = vunpack.c.l.b16 %v152
    %v1168 = vunpack.c.h.b16 %v152
    %v1169 = vunpack.c.l.b16 %v153
    %v1170 = vunpack.c.h.b16 %v153
    %v1171 = vunpack.c.l.b16 %v154
    %v1172 = vunpack.c.h.b16 %v154
    %v1173 = vunpack.c.l.b16 %v155
    %v1174 = vunpack.c.h.b16 %v155
    %v1175 = vunpack.c.l.b16 %v156
    %v1176 = vunpack.c.h.b16 %v156
    %v1177 = vunpack.c.l.b16 %v157
    %v1178 = vunpack.c.h.b16 %v157
    %v1179 = vunpack.c.l.b16 %v158
    %v1180 = vunpack.c.h.b16 %v158
    %v1181 = vunpack.c.l.b16 %v159
    %v1182 = vunpack.c.h.b16 %v159
    %v1183 = vunpack.c.l.b16 %v160
    %v1184 = vunpack.c.h.b16 %v160
    %v1185 = vunpack.c.l.b16 %v161
    %v1186 = vunpack.c.h.b16 %v161
    %v1187 = vunpack.c.l.b16 %v162
    %v1188 = vunpack.c.h.b16 %v162
    %v1189 = vunpack.c.l.b16 %v163
    %v1190 = vunpack.c.h.b16 %v163
    %v1191 = vunpack.c.l.b16 %v164
    %v1192 = vunpack.c.h.b16 %v164
    %v1193 = vunpack.c.l.b16 %v165
    %v1194 = vunpack.c.h.b16 %v165
    %v1195 = vunpack.c.l.b16 %v166
    %v1196 = vunpack.c.h.b16 %v166
    %v1197 = vunpack.c.l.b16 %v167
    %v1198 = vunpack.c.h.b16 %v167
    %v1199 = vunpack.c.l.b16 %v168
    %v1200 = vunpack.c.h.b16 %v168
    %v1201 = vunpack.c.l.b16 %v169
    %v1202 = vunpack.c.h.b16 %v169
    %v1203 = vunpack.c.l.b16 %v170
    %v1204 = vunpack.c.h.b16 %v170
    %v1205 = vunpack.c.l.b16 %v171
    %v1206 = vunpack.c.h.b16 %v171
    %v1207 = vunpack.c.l.b16 %v172
    %v1208 = vunpack.c.h.b16 %v172
    %v1209 = vunpack.c.l.b16 %v173
    %v1210 = vunpack.c.h.b16 %v173
    %v1211 = vunpack.c.l.b16 %v174
    %v1212 = vunpack.c.h.b16 %v174
    %v1213 = vunpack.c.l.b16 %v175
    %v1214 = vunpack.c.h.b16 %v175
    %v1215 = vunpack.c.l.b16 %v176
    %v1216 = vunpack.c.h.b16 %v176
    %v1217 = vunpack.c.l.b16 %v177
    %v1218 = vunpack.c.h.b16 %v177
    %v1219 = vunpack.c.l.b16 %v178
    %v1220 = vunpack.c.h.b16 %v178
    %v1221 = vunpack.c.l.b16 %v179
    %v1222 = vunpack.c.h.b16 %v179
    %v1223 = vunpack.c.l.b16 %v180
    %v1224 = vunpack.c.h.b16 %v180
    %v1225 = vunpack.c.l.b16 %v181
    %v1226 = vunpack.c.h.b16 %v181
    %v1227 = vunpack.c.l.b16 %v182
    %v1228 = vunpack.c.h.b16 %v182
    %v1229 = vunpack.c.l.b16 %v183
    %v1230 = vunpack.c.h.b16 %v183
    %v1231 = vunpack.c.l.b16 %v184
    %v1232 = vunpack.c.h.b16 %v184
    %v1233 = vunpack.c.l.b16 %v185
    %v1234 = vunpack.c.h.b16 %v185
    %v1235 = vunpack.c.l.b16 %v186
    %v1236 = vunpack.c.h.b16 %v186
    %v1237 = vunpack.c.l.b16 %v187
    %v1238 = vunpack.c.h.b16 %v187
    %v1239 = vunpack.c.l.b16 %v188
    %v1240 = vunpack.c.h.b16 %v188
    %v1241 = vunpack.c.l.b16 %v189
    %v1242 = vunpack.c.h.b16 %v189
    %v1243 = vunpack.c.l.b16 %v190
    %v1244 = vunpack.c.h.b16 %v190
    %v1245 = vunpack.c.l.b16 %v191
    %v1246 = vunpack.c.h.b16 %v191
    %v1247 = vunpack.c.l.b16 %v192
    %v1248 = vunpack.c.h.b16 %v192
    %v1249 = vunpack.c.l.b16 %v193
    %v1250 = vunpack.c.h.b16 %v193
    %v1251 = vunpack.c.l.b16 %v194
    %v1252 = vunpack.c.h.b16 %v194
    %v1253 = vunpack.c.l.b16 %v195
    %v1254 = vunpack.c.h.b16 %v195
    %v1255 = vunpack.c.l.b16 %v196
    %v1256 = vunpack.c.h.b16 %v196
    %v1257 = vunpack.c.l.b16 %v197
    %v1258 = vunpack.c.h.b16 %v197
    %v1259 = vunpack.c.l.b16 %v198
    %v1260 = vunpack.c.h.b16 %v198
    %v1261 = vunpack.c.l.b16 %v199
    %v1262 = vunpack.c.h.b16 %v199
    %v1263 = vunpack.c.l.b16 %v200
    %v1264 = vunpack.c.h.b16 %v200
    %v1265 = vunpack.c.l.b16 %v201
    %v1266 = vunpack.c.h.b16 %v201
    %v1267 = vunpack.c.l.b16 %v202
    %v1268 = vunpack.c.h.b16 %v202
    %v1269 = vunpack.c.l.b16 %v203
    %v1270 = vunpack.c.h.b16 %v203
    %v1271 = vunpack.c.l.b16 %v204
    %v1272 = vunpack.c.h.b16 %v204
    %v1273 = vunpack.c.l.b16 %v205
    %v1274 = vunpack.c.h.b16 %v205
    %v1275 = vunpack.c.l.b16 %v206
    %v1276 = vunpack.c.h.b16 %v206
    %v1277 = vunpack.c.l.b16 %v207
    %v1278 = vunpack.c.h.b16 %v207
    %v1279 = vunpack.c.l.b16 %v208
    %v1280 = vunpack.c.h.b16 %v208
    %v1281 = vunpack.c.l.b16 %v209
    %v1282 = vunpack.c.h.b16 %v209
    %v1283 = vunpack.c.l.b16 %v210
    %v1284 = vunpack.c.h.b16 %v210
    %v1285 = vunpack.c.l.b16 %v211
    %v1286 = vunpack.c.h.b16 %v211
    %v1287 = vunpack.c.l.b16 %v212
    %v1288 = vunpack.c.h.b16 %v212
    %v1289 = vunpack.c.l.b16 %v213
    %v1290 = vunpack.c.h.b16 %v213
    %v1291 = vunpack.c.l.b16 %v214
    %v1292 = vunpack.c.h.b16 %v214
    %v1293 = vunpack.c.l.b16 %v215
    %v1294 = vunpack.c.h.b16 %v215
    %v1295 = vunpack.c.l.b16 %v216
    %v1296 = vunpack.c.h.b16 %v216
    %v1297 = vunpack.c.l.b16 %v217
    %v1298 = vunpack.c.h.b16 %v217
    %v1299 = vunpack.c.l.b16 %v218
    %v1300 = vunpack.c.h.b16 %v218
    %v1301 = vunpack.c.l.b16 %v219
    %v1302 = vunpack.c.h.b16 %v219
    %v1303 = vunpack.c.l.b16 %v220
    %v1304 = vunpack.c.h.b16 %v220
    %v1305 = vunpack.c.l.b16 %v221
    %v1306 = vunpack.c.h.b16 %v221
    %v1307 = vunpack.c.l.b16 %v222
    %v1308 = vunpack.c.h.b16 %v222
    %v1309 = vunpack.c.l.b16 %v223
    %v1310 = vunpack.c.h.b16 %v223
    %v1311 = vunpack.c.l.b16 %v224
    %v1312 = vunpack.c.h.b16 %v224
    %v1313 = vunpack.c.l.b16 %v225
    %v1314 = vunpack.c.h.b16 %v225
    %v1315 = vunpack.c.l.b16 %v226
    %v1316 = vunpack.c.h.b16 %v226
    %v1317 = vunpack.c.l.b16 %v227
    %v1318 = vunpack.c.h.b16 %v227
    %v1319 = vunpack.c.l.b16 %v228
    %v1320 = vunpack.c.h.b16 %v228
    %v1321 = vunpack.c.l.b16 %v229
    %v1322 = vunpack.c.h.b16 %v229
    %v1323 = vunpack.c.l.b16 %v230
    %v1324 = vunpack.c.h.b16 %v230
    %v1325 = vunpack.c.l.b16 %v231
    %v1326 = vunpack.c.h.b16 %v231
    %v1327 = vunpack.c.l.b16 %v232
    %v1328 = vunpack.c.h.b16 %v232
    %v1329 = vunpack.c.l.b16 %v233
    %v1330 = vunpack.c.h.b16 %v233
    %v1331 = vunpack.c.l.b16 %v234
    %v1332 = vunpack.c.h.b16 %v234
    %v1333 = vunpack.c.l.b16 %v235
    %v1334 = vunpack.c.h.b16 %v235
    %v1335 = vunpack.c.l.b16 %v236
    %v1336 = vunpack.c.h.b16 %v236
    %v1337 = vunpack.c.l.b16 %v237
    %v1338 = vunpack.c.h.b16 %v237
    %v1339 = vunpack.c.l.b16 %v238
    %v1340 = vunpack.c.h.b16 %v238
    %v1341 = vunpack.c.l.b16 %v239
    %v1342 = vunpack.c.h.b16 %v239
    %v1343 = vunpack.c.l.b16 %v240
    %v1344 = vunpack.c.h.b16 %v240
    %v1345 = vunpack.c.l.b16 %v241
    %v1346 = vunpack.c.h.b16 %v241
    %v1347 = vunpack.c.l.b16 %v242
    %v1348 = vunpack.c.h.b16 %v242
    %v1349 = vunpack.c.l.b16 %v243
    %v1350 = vunpack.c.h.b16 %v243
    %v1351 = vunpack.c.l.b16 %v244
    %v1352 = vunpack.c.h.b16 %v244
    %v1353 = vunpack.c.l.b16 %v245
    %v1354 = vunpack.c.h.b16 %v245
    %v1355 = vunpack.c.l.b16 %v246
    %v1356 = vunpack.c.h.b16 %v246
    %v1357 = vunpack.c.l.b16 %v247
    %v1358 = vunpack.c.h.b16 %v247
    %v1359 = vunpack.c.l.b16 %v248
    %v1360 = vunpack.c.h.b16 %v248
    %v1361 = vunpack.c.l.b16 %v249
    %v1362 = vunpack.c.h.b16 %v249
    %v1363 = vunpack.c.l.b16 %v250
    %v1364 = vunpack.c.h.b16 %v250
    %v1365 = vunpack.c.l.b16 %v251
    %v1366 = vunpack.c.h.b16 %v251
    %v1367 = vunpack.c.l.b16 %v252
    %v1368 = vunpack.c.h.b16 %v252
    %v1369 = vunpack.c.l.b16 %v253
    %v1370 = vunpack.c.h.b16 %v253
    %v1371 = vunpack.c.l.b16 %v254
    %v1372 = vunpack.c.h.b16 %v254
    %v1373 = vunpack.c.l.b16 %v255
    %v1374 = vunpack.c.h.b16 %v255
    %v1375 = vunpack.c.l.b16 %v256
    %v1376 = vunpack.c.h.b16 %v256
    %v1377 = vunpack.c.l.b16 %v257
    %v1378 = vunpack.c.h.b16 %v257
    %v1379 = vunpack.c.l.b16 %v258
    %v1380 = vunpack.c.h.b16 %v258
    %v1381 = vunpack.c.l.b16 %v259
    %v1382 = vunpack.c.h.b16 %v259
    %v1383 = vunpack.c.l.b16 %v260
    %v1384 = vunpack.c.h.b16 %v260
    %v1385 = vunpack.c.l.b16 %v261
    %v1386 = vunpack.c.h.b16 %v261
    %v1387 = vunpack.c.l.b16 %v262
    %v1388 = vunpack.c.h.b16 %v262
    %v1389 = vunpack.c.l.b16 %v263
    %v1390 = vunpack.c.h.b16 %v263
    %v1391 = vunpack.c.l.b16 %v264
    %v1392 = vunpack.c.h.b16 %v264
    %v1393 = vunpack.c.l.b16 %v265
    %v1394 = vunpack.c.h.b16 %v265
    %v1395 = vunpack.c.l.b16 %v266
    %v1396 = vunpack.c.h.b16 %v266
    %v1397 = vunpack.c.l.b16 %v267
    %v1398 = vunpack.c.h.b16 %v267
    %v1399 = vunpack.c.l.b16 %v268
    %v1400 = vunpack.c.h.b16 %v268
    %v1401 = vunpack.c.l.b16 %v269
    %v1402 = vunpack.c.h.b16 %v269
    %v1403 = vunpack.c.l.b16 %v270
    %v1404 = vunpack.c.h.b16 %v270
    %v1405 = vunpack.c.l.b16 %v271
    %v1406 = vunpack.c.h.b16 %v271
    %v1407 = vunpack.c.l.b16 %v272
    %v1408 = vunpack.c.h.b16 %v272
    %v1409 = vunpack.c.l.b16 %v273
    %v1410 = vunpack.c.h.b16 %v273
    %v1411 = vunpack.c.l.b16 %v274
    %v1412 = vunpack.c.h.b16 %v274
    %v1413 = vunpack.c.l.b16 %v275
    %v1414 = vunpack.c.h.b16 %v275
    %v1415 = vunpack.c.l.b16 %v276
    %v1416 = vunpack.c.h.b16 %v276
    %v1417 = vunpack.c.l.b16 %v277
    %v1418 = vunpack.c.h.b16 %v277
    %v1419 = vunpack.c.l.b16 %v278
    %v1420 = vunpack.c.h.b16 %v278
    %v1421 = vunpack.c.l.b16 %v279
    %v1422 = vunpack.c.h.b16 %v279
    %v1423 = vunpack.c.l.b16 %v280
    %v1424 = vunpack.c.h.b16 %v280
    %v1425 = vunpack.c.l.b16 %v281
    %v1426 = vunpack.c.h.b16 %v281
    %v1427 = vunpack.c.l.b16 %v282
    %v1428 = vunpack.c.h.b16 %v282
    %v1429 = vunpack.c.l.b16 %v283
    %v1430 = vunpack.c.h.b16 %v283
    %v1431 = vunpack.c.l.b16 %v284
    %v1432 = vunpack.c.h.b16 %v284
    %v1433 = vunpack.c.l.b16 %v285
    %v1434 = vunpack.c.h.b16 %v285
    %v1435 = vunpack.c.l.b16 %v286
    %v1436 = vunpack.c.h.b16 %v286
    %v1437 = vunpack.c.l.b16 %v287
    %v1438 = vunpack.c.h.b16 %v287
    %v1439 = vunpack.c.l.b16 %v288
    %v1440 = vunpack.c.h.b16 %v288
    %v1441 = vunpack.c.l.b16 %v289
    %v1442 = vunpack.c.h.b16 %v289
    %v1443 = vunpack.c.l.b16 %v290
    %v1444 = vunpack.c.h.b16 %v290
    %v1445 = vunpack.c.l.b16 %v291
    %v1446 = vunpack.c.h.b16 %v291
    %v1447 = vunpack.c.l.b16 %v292
    %v1448 = vunpack.c.h.b16 %v292
    %v1449 = vunpack.c.l.b16 %v293
    %v1450 = vunpack.c.h.b16 %v293
    %v1451 = vunpack.c.l.b16 %v294
    %v1452 = vunpack.c.h.b16 %v294
    %v1453 = vunpack.c.l.b16 %v295
    %v1454 = vunpack.c.h.b16 %v295
    %v1455 = vunpack.c.l.b16 %v296
    %v1456 = vunpack.c.h.b16 %v296
    %v1457 = vunpack.c.l.b16 %v297
    %v1458 = vunpack.c.h.b16 %v297
    %v1459 = vunpack.c.l.b16 %v298
    %v1460 = vunpack.c.h.b16 %v298
    %v1461 = vunpack.c.l.b16 %v299
    %v1462 = vunpack.c.h.b16 %v299
    %v1463 = vunpack.c.l.b16 %v300
    %v1464 = vunpack.c.h.b16 %v300
    %v1465 = vunpack.c.l.b16 %v301
    %v1466 = vunpack.c.h.b16 %v301
    %v1467 = vunpack.c.l.b16 %v302
    %v1468 = vunpack.c.h.b16 %v302
    %v1469 = vunpack.c.l.b16 %v303
    %v1470 = vunpack.c.h.b16 %v303
    %v1471 = vunpack.c.l.b16 %v304
    %v1472 = vunpack.c.h.b16 %v304
    %v1473 = vunpack.c.l.b16 %v305
    %v1474 = vunpack.c.h.b16 %v305
    %v1475 = vunpack.c.l.b16 %v306
    %v1476 = vunpack.c.h.b16 %v306
    %v1477 = vunpack.c.l.b16 %v307
    %v1478 = vunpack.c.h.b16 %v307
    %v1479 = vunpack.c.l.b16 %v308
    %v1480 = vunpack.c.h.b16 %v308
    %v1481 = vunpack.c.l.b16 %v309
    %v1482 = vunpack.c.h.b16 %v309
    %v1483 = vunpack.c.l.b16 %v310
    %v1484 = vunpack.c.h.b16 %v310
    %v1485 = vunpack.c.l.b16 %v311
    %v1486 = vunpack.c.h.b16 %v311
    %v1487 = vunpack.c.l.b16 %v312
    %v1488 = vunpack.c.h.b16 %v312
    %v1489 = vunpack.c.l.b16 %v313
    %v1490 = vunpack.c.h.b16 %v313
    %v1491 = vunpack.c.l.b16 %v314
    %v1492 = vunpack.c.h.b16 %v314
    %v1493 = vunpack.c.l.b16 %v315
    %v1494 = vunpack.c.h.b16 %v315
    %v1495 = vunpack.c.l.b16 %v316
    %v1496 = vunpack.c.h.b16 %v316
    %v1497 = vunpack.c.l.b16 %v317
    %v1498 = vunpack.c.h.b16 %v317
    %v1499 = vunpack.c.l.b16 %v318
    %v1500 = vunpack.c.h.b16 %v318
    %v1501 = vunpack.c.l.b16 %v319
    %v1502 = vunpack.c.h.b16 %v319
    %v1503 = vunpack.c.l.b16 %v320
    %v1504 = vunpack.c.h.b16 %v320
    %v1505 = vunpack.c.l.b16 %v321
    %v1506 = vunpack.c.h.b16 %v321
    %v1507 = vunpack.c.l.b16 %v322
    %v1508 = vunpack.c.h.b16 %v322
    %v1509 = vunpack.c.l.b16 %v323
    %v1510 = vunpack.c.h.b16 %v323
    %v1511 = vunpack.c.l.b16 %v324
    %v1512 = vunpack.c.h.b16 %v324
    %v1513 = vunpack.c.l.b16 %v325
    %v1514 = vunpack.c.h.b16 %v325
    %v1515 = vunpack.c.l.b16 %v326
    %v1516 = vunpack.c.h.b16 %v326
    %v1517 = vunpack.c.l.b16 %v327
    %v1518 = vunpack.c.h.b16 %v327
    %v1519 = vunpack.c.l.b16 %v328
    %v1520 = vunpack.c.h.b16 %v328
    %v1521 = vunpack.c.l.b16 %v329
    %v1522 = vunpack.c.h.b16 %v329
    %v1523 = vunpack.c.l.b16 %v330
    %v1524 = vunpack.c.h.b16 %v330
    %v1525 = vunpack.c.l.b16 %v331
    %v1526 = vunpack.c.h.b16 %v331
    %v1527 = vunpack.c.l.b16 %v332
    %v1528 = vunpack.c.h.b16 %v332
    %v1529 = vunpack.c.l.b16 %v333
    %v1530 = vunpack.c.h.b16 %v333
    %v1531 = vunpack.c.l.b16 %v334
    %v1532 = vunpack.c.h.b16 %v334
    %v1533 = vunpack.c.l.b16 %v335
    %v1534 = vunpack.c.h.b16 %v335
    %v1535 = vunpack.c.l.b16 %v336
    %v1536 = vunpack.c.h.b16 %v336
    %v1537 = vunpack.c.l.b16 %v337
    %v1538 = vunpack.c.h.b16 %v337
    %v1539 = vunpack.c.l.b16 %v338
    %v1540 = vunpack.c.h.b16 %v338
    %v1541 = vunpack.c.l.b16 %v339
    %v1542 = vunpack.c.h.b16 %v339
    %v1543 = vunpack.c.l.b16 %v340
    %v1544 = vunpack.c.h.b16 %v340
    %v1545 = vunpack.c.l.b16 %v341
    %v1546 = vunpack.c.h.b16 %v341
    %v1547 = vunpack.c.l.b16 %v342
    %v1548 = vunpack.c.h.b16 %v342
    %v1549 = vunpack.c.l.b16 %v343
    %v1550 = vunpack.c.h.b16 %v343
    %v1551 = vunpack.c.l.b16 %v344
    %v1552 = vunpack.c.h.b16 %v344
    %v1553 = vunpack.c.l.b16 %v345
    %v1554 = vunpack.c.h.b16 %v345
    %v1555 = vunpack.c.l.b16 %v346
    %v1556 = vunpack.c.h.b16 %v346
    %v1557 = vunpack.c.l.b16 %v347
    %v1558 = vunpack.c.h.b16 %v347
    %v1559 = vunpack.c.l.b16 %v348
    %v1560 = vunpack.c.h.b16 %v348
    %v1561 = vunpack.c.l.b16 %v349
    %v1562 = vunpack.c.h.b16 %v349
    %v1563 = vunpack.c.l.b16 %v350
    %v1564 = vunpack.c.h.b16 %v350
    %v1565 = vunpack.c.l.b16 %v351
    %v1566 = vunpack.c.h.b16 %v351
    %v1567 = vunpack.c.l.b16 %v352
    %v1568 = vunpack.c.h.b16 %v352
    %v1569 = vunpack.c.l.b16 %v353
    %v1570 = vunpack.c.h.b16 %v353
    %v1571 = vunpack.c.l.b16 %v354
    %v1572 = vunpack.c.h.b16 %v354
    %v1573 = vunpack.c.l.b16 %v355
    %v1574 = vunpack.c.h.b16 %v355
    %v1575 = vunpack.c.l.b16 %v356
    %v1576 = vunpack.c.h.b16 %v356
    %v1577 = vunpack.c.l.b16 %v357
    %v1578 = vunpack.c.h.b16 %v357
    %v1579 = vunpack.c.l.b16 %v358
    %v1580 = vunpack.c.h.b16 %v358
    %v1581 = vunpack.c.l.b16 %v359
    %v1582 = vunpack.c.h.b16 %v359
    %v1583 = vunpack.c.l.b16 %v360
    %v1584 = vunpack.c.h.b16 %v360
    %v1585 = vunpack.c.l.b16 %v361
    %v1586 = vunpack.c.h.b16 %v361
    %v1587 = vunpack.c.l.b16 %v362
    %v1588 = vunpack.c.h.b16 %v362
    %v1589 = vunpack.c.l.b16 %v363
    %v1590 = vunpack.c.h.b16 %v363
    %v1591 = vunpack.c.l.b16 %v364
    %v1592 = vunpack.c.h.b16 %v364
    %v1593 = vunpack.c.l.b16 %v365
    %v1594 = vunpack.c.h.b16 %v365
    %v1595 = vunpack.c.l.b16 %v366
    %v1596 = vunpack.c.h.b16 %v366
    %v1597 = vunpack.c.l.b16 %v367
    %v1598 = vunpack.c.h.b16 %v367
    %v1599 = vunpack.c.l.b16 %v368
    %v1600 = vunpack.c.h.b16 %v368
    %v1601 = vunpack.c.l.b16 %v369
    %v1602 = vunpack.c.h.b16 %v369
    %v1603 = vunpack.c.l.b16 %v370
    %v1604 = vunpack.c.h.b16 %v370
    %v1605 = vunpack.c.l.b16 %v371
    %v1606 = vunpack.c.h.b16 %v371
    %v1607 = vunpack.c.l.b16 %v372
    %v1608 = vunpack.c.h.b16 %v372
    %v1609 = vunpack.c.l.b16 %v373
    %v1610 = vunpack.c.h.b16 %v373
    %v1611 = vunpack.c.l.b16 %v374
    %v1612 = vunpack.c.h.b16 %v374
    %v1613 = vunpack.c.l.b16 %v375
    %v1614 = vunpack.c.h.b16 %v375
    %v1615 = vunpack.c.l.b16 %v376
    %v1616 = vunpack.c.h.b16 %v376
    %v1617 = vunpack.c.l.b16 %v377
    %v1618 = vunpack.c.h.b16 %v377
    %v1619 = vunpack.c.l.b16 %v378
    %v1620 = vunpack.c.h.b16 %v378
    %v1621 = vunpack.c.l.b16 %v379
    %v1622 = vunpack.c.h.b16 %v379
    %v1623 = vunpack.c.l.b16 %v380
    %v1624 = vunpack.c.h.b16 %v380
    %v1625 = vunpack.c.l.b16 %v381
    %v1626 = vunpack.c.h.b16 %v381
    %v1627 = vunpack.c.l.b16 %v382
    %v1628 = vunpack.c.h.b16 %v382
    %v1629 = vunpack.c.l.b16 %v383
    %v1630 = vunpack.c.h.b16 %v383
    %v1631 = vunpack.c.l.b16 %v384
    %v1632 = vunpack.c.h.b16 %v384
    %v1633 = vunpack.c.l.b16 %v385
    %v1634 = vunpack.c.h.b16 %v385
    %v1635 = vunpack.c.l.b16 %v386
    %v1636 = vunpack.c.h.b16 %v386
    %v1637 = vunpack.c.l.b16 %v387
    %v1638 = vunpack.c.h.b16 %v387
    %v1639 = vunpack.c.l.b16 %v388
    %v1640 = vunpack.c.h.b16 %v388
    %v1641 = vunpack.c.l.b16 %v389
    %v1642 = vunpack.c.h.b16 %v389
    %v1643 = vunpack.c.l.b16 %v390
    %v1644 = vunpack.c.h.b16 %v390
    %v1645 = vunpack.c.l.b16 %v391
    %v1646 = vunpack.c.h.b16 %v391
    %v1647 = vunpack.c.l.b16 %v392
    %v1648 = vunpack.c.h.b16 %v392
    %v1649 = vunpack.c.l.b16 %v393
    %v1650 = vunpack.c.h.b16 %v393
    %v1651 = vunpack.c.l.b16 %v394
    %v1652 = vunpack.c.h.b16 %v394
    %v1653 = vunpack.c.l.b16 %v395
    %v1654 = vunpack.c.h.b16 %v395
    %v1655 = vunpack.c.l.b16 %v396
    %v1656 = vunpack.c.h.b16 %v396
    %v1657 = vunpack.c.l.b16 %v397
    %v1658 = vunpack.c.h.b16 %v397
    %v1659 = vunpack.c.l.b16 %v398
    %v1660 = vunpack.c.h.b16 %v398
    %v1661 = vunpack.c.l.b16 %v399
    %v1662 = vunpack.c.h.b16 %v399
    %v1663 = vunpack.c.l.b16 %v400
    %v1664 = vunpack.c.h.b16 %v400
    %v1665 = vunpack.c.l.b16 %v401
    %v1666 = vunpack.c.h.b16 %v401
    %v1667 = vunpack.c.l.b16 %v402
    %v1668 = vunpack.c.h.b16 %v402
    %v1669 = vunpack.c.l.b16 %v403
    %v1670 = vunpack.c.h.b16 %v403
    %v1671 = vunpack.c.l.b16 %v404
    %v1672 = vunpack.c.h.b16 %v404
    %v1673 = vunpack.c.l.b16 %v405
    %v1674 = vunpack.c.h.b16 %v405
    %v1675 = vunpack.c.l.b16 %v406
    %v1676 = vunpack.c.h.b16 %v406
    %v1677 = vunpack.c.l.b16 %v407
    %v1678 = vunpack.c.h.b16 %v407
    %v1679 = vunpack.c.l.b16 %v408
    %v1680 = vunpack.c.h.b16 %v408
    %v1681 = vunpack.c.l.b16 %v409
    %v1682 = vunpack.c.h.b16 %v409
    %v1683 = vunpack.c.l.b16 %v410
    %v1684 = vunpack.c.h.b16 %v410
    %v1685 = vunpack.c.l.b16 %v411
    %v1686 = vunpack.c.h.b16 %v411
    %v1687 = vunpack.c.l.b16 %v412
    %v1688 = vunpack.c.h.b16 %v412
    %v1689 = vunpack.c.l.b16 %v413
    %v1690 = vunpack.c.h.b16 %v413
    %v1691 = vunpack.c.l.b16 %v414
    %v1692 = vunpack.c.h.b16 %v414
    %v1693 = vunpack.c.l.b16 %v415
    %v1694 = vunpack.c.h.b16 %v415
    %v1695 = vunpack.c.l.b16 %v416
    %v1696 = vunpack.c.h.b16 %v416
    %v1697 = vunpack.c.l.b16 %v417
    %v1698 = vunpack.c.h.b16 %v417
    %v1699 = vunpack.c.l.b16 %v418
    %v1700 = vunpack.c.h.b16 %v418
    %v1701 = vunpack.c.l.b16 %v419
    %v1702 = vunpack.c.h.b16 %v419
    %v1703 = vunpack.c.l.b16 %v420
    %v1704 = vunpack.c.h.b16 %v420
    %v1705 = vunpack.c.l.b16 %v421
    %v1706 = vunpack.c.h.b16 %v421
    %v1707 = vunpack.c.l.b16 %v422
    %v1708 = vunpack.c.h.b16 %v422
    %v1709 = vunpack.c.l.b16 %v423
    %v1710 = vunpack.c.h.b16 %v423
    %v1711 = vunpack.c.l.b16 %v424
    %v1712 = vunpack.c.h.b16 %v424
    %v1713 = vunpack.c.l.b16 %v425
    %v1714 = vunpack.c.h.b16 %v425
    %v1715 = vunpack.c.l.b16 %v426
    %v1716 = vunpack.c.h.b16 %v426
    %v1717 = vunpack.c.l.b16 %v427
    %v1718 = vunpack.c.h.b16 %v427
    %v1719 = vunpack.c.l.b16 %v428
    %v1720 = vunpack.c.h.b16 %v428
    %v1721 = vunpack.c.l.b16 %v429
    %v1722 = vunpack.c.h.b16 %v429
    %v1723 = vunpack.c.l.b16 %v430
    %v1724 = vunpack.c.h.b16 %v430
    %v1725 = vunpack.c.l.b16 %v431
    %v1726 = vunpack.c.h.b16 %v431
    %v1727 = vunpack.c.l.b16 %v432
    %v1728 = vunpack.c.h.b16 %v432
    %v1729 = vunpack.c.l.b16 %v433
    %v1730 = vunpack.c.h.b16 %v433
    %v1731 = vunpack.c.l.b16 %v434
    %v1732 = vunpack.c.h.b16 %v434
    %v1733 = vunpack.c.l.b16 %v435
    %v1734 = vunpack.c.h.b16 %v435
    %v1735 = vunpack.c.l.b16 %v436
    %v1736 = vunpack.c.h.b16 %v436
    %v1737 = vunpack.c.l.b16 %v437
    %v1738 = vunpack.c.h.b16 %v437
    %v1739 = vunpack.c.l.b16 %v438
    %v1740 = vunpack.c.h.b16 %v438
    %v1741 = vunpack.c.l.b16 %v439
    %v1742 = vunpack.c.h.b16 %v439
    %v1743 = vunpack.c.l.b16 %v440
    %v1744 = vunpack.c.h.b16 %v440
    %v1745 = vunpack.c.l.b16 %v441
    %v1746 = vunpack.c.h.b16 %v441
    %v1747 = vunpack.c.l.b16 %v442
    %v1748 = vunpack.c.h.b16 %v442
    %v1749 = vunpack.c.l.b16 %v443
    %v1750 = vunpack.c.h.b16 %v443
    %v1751 = vunpack.c.l.b16 %v444
    %v1752 = vunpack.c.h.b16 %v444
    %v1753 = vunpack.c.l.b16 %v445
    %v1754 = vunpack.c.h.b16 %v445
    %v1755 = vunpack.c.l.b16 %v446
    %v1756 = vunpack.c.h.b16 %v446
    %v1757 = vunpack.c.l.b16 %v447
    %v1758 = vunpack.c.h.b16 %v447
    %v1759 = vunpack.c.l.b16 %v448
    %v1760 = vunpack.c.h.b16 %v448
    %v1761 = vunpack.c.l.b16 %v449
    %v1762 = vunpack.c.h.b16 %v449
    %v1763 = vunpack.c.l.b16 %v450
    %v1764 = vunpack.c.h.b16 %v450
    %v1765 = vunpack.c.l.b16 %v451
    %v1766 = vunpack.c.h.b16 %v451
    %v1767 = vunpack.c.l.b16 %v452
    %v1768 = vunpack.c.h.b16 %v452
    %v1769 = vunpack.c.l.b16 %v453
    %v1770 = vunpack.c.h.b16 %v453
    %v1771 = vunpack.c.l.b16 %v454
    %v1772 = vunpack.c.h.b16 %v454
    %v1773 = vunpack.c.l.b16 %v455
    %v1774 = vunpack.c.h.b16 %v455
    %v1775 = vunpack.c.l.b16 %v456
    %v1776 = vunpack.c.h.b16 %v456
    %v1777 = vunpack.c.l.b16 %v457
    %v1778 = vunpack.c.h.b16 %v457
    %v1779 = vunpack.c.l.b16 %v458
    %v1780 = vunpack.c.h.b16 %v458
    %v1781 = vunpack.c.l.b16 %v459
    %v1782 = vunpack.c.h.b16 %v459
    %v1783 = vunpack.c.l.b16 %v460
    %v1784 = vunpack.c.h.b16 %v460
    %v1785 = vunpack.c.l.b16 %v461
    %v1786 = vunpack.c.h.b16 %v461
    %v1787 = vunpack.c.l.b16 %v462
    %v1788 = vunpack.c.h.b16 %v462
    %v1789 = vunpack.c.l.b16 %v463
    %v1790 = vunpack.c.h.b16 %v463
    %v1791 = vunpack.c.l.b16 %v464
    %v1792 = vunpack.c.h.b16 %v464
    %v1793 = vunpack.c.l.b16 %v465
    %v1794 = vunpack.c.h.b16 %v465
    %v1795 = vunpack.c.l.b16 %v466
    %v1796 = vunpack.c.h.b16 %v466
    %v1797 = vunpack.c.l.b16 %v467
    %v1798 = vunpack.c.h.b16 %v467
    %v1799 = vunpack.c.l.b16 %v468
    %v1800 = vunpack.c.h.b16 %v468
    %v1801 = vunpack.c.l.b16 %v469
    %v1802 = vunpack.c.h.b16 %v469
    %v1803 = vunpack.c.l.b16 %v470
    %v1804 = vunpack.c.h.b16 %v470
    %v1805 = vunpack.c.l.b16 %v471
    %v1806 = vunpack.c.h.b16 %v471
    %v1807 = vunpack.c.l.b16 %v472
    %v1808 = vunpack.c.h.b16 %v472
    %v1809 = vunpack.c.l.b16 %v473
    %v1810 = vunpack.c.h.b16 %v473
    %v1811 = vunpack.c.l.b16 %v474
    %v1812 = vunpack.c.h.b16 %v474
    %v1813 = vunpack.c.l.b16 %v475
    %v1814 = vunpack.c.h.b16 %v475
    %v1815 = vunpack.c.l.b16 %v476
    %v1816 = vunpack.c.h.b16 %v476
    %v1817 = vunpack.c.l.b16 %v477
    %v1818 = vunpack.c.h.b16 %v477
    %v1819 = vunpack.c.l.b16 %v478
    %v1820 = vunpack.c.h.b16 %v478
    %v1821 = vunpack.c.l.b16 %v479
    %v1822 = vunpack.c.h.b16 %v479
    %v1823 = vunpack.c.l.b16 %v480
    %v1824 = vunpack.c.h.b16 %v480
    %v1825 = vunpack.c.l.b16 %v481
    %v1826 = vunpack.c.h.b16 %v481
    %v1827 = vunpack.c.l.b16 %v482
    %v1828 = vunpack.c.h.b16 %v482
    %v1829 = vunpack.c.l.b16 %v483
    %v1830 = vunpack.c.h.b16 %v483
    %v1831 = vunpack.c.l.b16 %v484
    %v1832 = vunpack.c.h.b16 %v484
    %v1833 = vunpack.c.l.b16 %v485
    %v1834 = vunpack.c.h.b16 %v485
    %v1835 = vunpack.c.l.b16 %v486
    %v1836 = vunpack.c.h.b16 %v486
    %v1837 = vunpack.c.l.b16 %v487
    %v1838 = vunpack.c.h.b16 %v487
    %v1839 = vunpack.c.l.b16 %v488
    %v1840 = vunpack.c.h.b16 %v488
    %v1841 = vunpack.c.l.b16 %v489
    %v1842 = vunpack.c.h.b16 %v489
    %v1843 = vunpack.c.l.b16 %v490
    %v1844 = vunpack.c.h.b16 %v490
    %v1845 = vunpack.c.l.b16 %v491
    %v1846 = vunpack.c.h.b16 %v491
    %v1847 = vunpack.c.l.b16 %v492
    %v1848 = vunpack.c.h.b16 %v492
    %v1849 = vunpack.c.l.b16 %v493
    %v1850 = vunpack.c.h.b16 %v493
    %v1851 = vunpack.c.l.b16 %v494
    %v1852 = vunpack.c.h.b16 %v494
    %v1853 = vunpack.c.l.b16 %v495
    %v1854 = vunpack.c.h.b16 %v495
    %v1855 = vunpack.c.l.b16 %v496
    %v1856 = vunpack.c.h.b16 %v496
    %v1857 = vunpack.c.l.b16 %v497
    %v1858 = vunpack.c.h.b16 %v497
    %v1859 = vunpack.c.l.b16 %v498
    %v1860 = vunpack.c.h.b16 %v498
    %v1861 = vunpack.c.l.b16 %v499
    %v1862 = vunpack.c.h.b16 %v499
    %v1863 = vunpack.c.l.b16 %v500
    %v1864 = vunpack.c.h.b16 %v500
    %v1865 = vunpack.c.l.b16 %v501
    %v1866 = vunpack.c.h.b16 %v501
    %v1867 = vunpack.c.l.b16 %v502
    %v1868 = vunpack.c.h.b16 %v502
    %v1869 = vunpack.c.l.b16 %v503
    %v1870 = vunpack.c.h.b16 %v503
    %v1871 = vunpack.c.l.b16 %v504
    %v1872 = vunpack.c.h.b16 %v504
    %v1873 = vunpack.c.l.b16 %v505
    %v1874 = vunpack.c.h.b16 %v505
    %v1875 = vunpack.c.l.b16 %v506
    %v1876 = vunpack.c.h.b16 %v506
    %v1877 = vunpack.c.l.b16 %v507
    %v1878 = vunpack.c.h.b16 %v507
    %v1879 = vunpack.c.l.b16 %v508
    %v1880 = vunpack.c.h.b16 %v508
    %v1881 = vunpack.c.l.b16 %v509
    %v1882 = vunpack.c.h.b16 %v509
    %v1883 = vunpack.c.l.b16 %v510
    %v1884 = vunpack.c.h.b16 %v510
    %v1885 = vunpack.c.l.b16 %v511
    %v1886 = vunpack.c.h.b16 %v511
    %v1887 = vunpack.c.l.b16 %v512
    %v1888 = vunpack.c.h.b16 %v512
    %v1889 = vunpack.c.l.b16 %v513
    %v1890 = vunpack.c.h.b16 %v513
    %v1891 = vunpack.c.l.b16 %v514
    %v1892 = vunpack.c.h.b16 %v514
    %v1893 = vunpack.c.l.b16 %v515
    %v1894 = vunpack.c.h.b16 %v515
    %v1895 = vunpack.c.l.b16 %v516
    %v1896 = vunpack.c.h.b16 %v516
    %v1897 = vunpack.c.l.b16 %v517
    %v1898 = vunpack.c.h.b16 %v517
    %v1899 = vunpack.c.l.b16 %v518
    %v1900 = vunpack.c.h.b16 %v518
    %v1901 = vunpack.c.l.b16 %v519
    %v1902 = vunpack.c.h.b16 %v519
    %v1903 = vunpack.c.l.b16 %v520
    %v1904 = vunpack.c.h.b16 %v520
    %v1905 = vunpack.c.l.b16 %v521
    %v1906 = vunpack.c.h.b16 %v521
    %v1907 = vunpack.c.l.b16 %v522
    %v1908 = vunpack.c.h.b16 %v522
    %v1909 = vunpack.c.l.b16 %v523
    %v1910 = vunpack.c.h.b16 %v523
    %v1911 = vunpack.c.l.b16 %v524
    %v1912 = vunpack.c.h.b16 %v524
    %v1913 = vunpack.c.l.b16 %v525
    %v1914 = vunpack.c.h.b16 %v525
    %v1915 = vunpack.c.l.b16 %v526
    %v1916 = vunpack.c.h.b16 %v526
    %v1917 = vunpack.c.l.b16 %v527
    %v1918 = vunpack.c.h.b16 %v527
    %v1919 = vunpack.c.l.b16 %v528
    %v1920 = vunpack.c.h.b16 %v528
    %v1921 = vunpack.c.l.b16 %v529
    %v1922 = vunpack.c.h.b16 %v529
    %v1923 = vunpack.c.l.b16 %v530
    %v1924 = vunpack.c.h.b16 %v530
    %v1925 = vunpack.c.l.b16 %v531
    %v1926 = vunpack.c.h.b16 %v531
    %v1927 = vunpack.c.l.b16 %v532
    %v1928 = vunpack.c.h.b16 %v532
    %v1929 = vunpack.c.l.b16 %v533
    %v1930 = vunpack.c.h.b16 %v533
    %v1931 = vunpack.c.l.b16 %v534
    %v1932 = vunpack.c.h.b16 %v534
    %v1933 = vunpack.c.l.b16 %v535
    %v1934 = vunpack.c.h.b16 %v535
    %v1935 = vunpack.c.l.b16 %v536
    %v1936 = vunpack.c.h.b16 %v536
    %v1937 = vunpack.c.l.b16 %v537
    %v1938 = vunpack.c.h.b16 %v537
    %v1939 = vunpack.c.l.b16 %v538
    %v1940 = vunpack.c.h.b16 %v538
    %v1941 = vunpack.c.l.b16 %v539
    %v1942 = vunpack.c.h.b16 %v539
    %v1943 = vunpack.c.l.b16 %v540
    %v1944 = vunpack.c.h.b16 %v540
    %v1945 = vunpack.c.l.b16 %v541
    %v1946 = vunpack.c.h.b16 %v541
    %v1947 = vunpack.c.l.b16 %v542
    %v1948 = vunpack.c.h.b16 %v542
    %v1949 = vunpack.c.l.b16 %v543
    %v1950 = vunpack.c.h.b16 %v543
    %v1951 = vunpack.c.l.b16 %v544
    %v1952 = vunpack.c.h.b16 %v544
    %v1953 = vunpack.c.l.b16 %v545
    %v1954 = vunpack.c.h.b16 %v545
    %v1955 = vunpack.c.l.b16 %v546
    %v1956 = vunpack.c.h.b16 %v546
    %v1957 = vunpack.c.l.b16 %v547
    %v1958 = vunpack.c.h.b16 %v547
    %v1959 = vunpack.c.l.b16 %v548
    %v1960 = vunpack.c.h.b16 %v548
    %v1961 = vunpack.c.l.b16 %v549
    %v1962 = vunpack.c.h.b16 %v549
    %v1963 = vunpack.c.l.b16 %v550
    %v1964 = vunpack.c.h.b16 %v550
    %v1965 = vunpack.c.l.b16 %v551
    %v1966 = vunpack.c.h.b16 %v551
    %v1967 = vunpack.c.l.b16 %v552
    %v1968 = vunpack.c.h.b16 %v552
    %v1969 = vunpack.c.l.b16 %v553
    %v1970 = vunpack.c.h.b16 %v553
    %v1971 = vunpack.c.l.b16 %v554
    %v1972 = vunpack.c.h.b16 %v554
    %v1973 = vunpack.c.l.b16 %v555
    %v1974 = vunpack.c.h.b16 %v555
    %v1975 = vunpack.c.l.b16 %v556
    %v1976 = vunpack.c.h.b16 %v556
    %v1977 = vunpack.c.l.b16 %v557
    %v1978 = vunpack.c.h.b16 %v557
    %v1979 = vunpack.c.l.b16 %v558
    %v1980 = vunpack.c.h.b16 %v558
    %v1981 = vunpack.c.l.b16 %v559
    %v1982 = vunpack.c.h.b16 %v559
    %v1983 = vunpack.c.l.b16 %v560
    %v1984 = vunpack.c.h.b16 %v560
    %v1985 = vunpack.c.l.b16 %v561
    %v1986 = vunpack.c.h.b16 %v561
    %v1987 = vunpack.c.l.b16 %v562
    %v1988 = vunpack.c.h.b16 %v562
    %v1989 = vunpack.c.l.b16 %v563
    %v1990 = vunpack.c.h.b16 %v563
    %v1991 = vunpack.c.l.b16 %v564
    %v1992 = vunpack.c.h.b16 %v564
    %v1993 = vunpack.c.l.b16 %v565
    %v1994 = vunpack.c.h.b16 %v565
    %v1995 = vunpack.c.l.b16 %v566
    %v1996 = vunpack.c.h.b16 %v566
    %v1997 = vunpack.c.l.b16 %v567
    %v1998 = vunpack.c.h.b16 %v567
    %v1999 = vunpack.c.l.b16 %v568
    %v2000 = vunpack.c.h.b16 %v568
    %v2001 = vunpack.c.l.b16 %v569
    %v2002 = vunpack.c.h.b16 %v569
    %v2003 = vunpack.c.l.b16 %v570
    %v2004 = vunpack.c.h.b16 %v570
    %v2005 = vunpack.c.l.b16 %v571
    %v2006 = vunpack.c.h.b16 %v571
    %v2007 = vunpack.c.l.b16 %v572
    %v2008 = vunpack.c.h.b16 %v572
    %v2009 = vunpack.c.l.b16 %v573
    %v2010 = vunpack.c.h.b16 %v573
    %v2011 = vunpack.c.l.b16 %v574
    %v2012 = vunpack.c.h.b16 %v574
    %v2013 = vunpack.c.l.b16 %v575
    %v2014 = vunpack.c.h.b16 %v575
    %v2015 = vunpack.c.l.b16 %v576
    %v2016 = vunpack.c.h.b16 %v576
    %v2017 = vunpack.c.l.b16 %v577
    %v2018 = vunpack.c.h.b16 %v577
    %v2019 = vunpack.c.l.b16 %v578
    %v2020 = vunpack.c.h.b16 %v578
    %v2021 = vunpack.c.l.b16 %v579
    %v2022 = vunpack.c.h.b16 %v579
    %v2023 = vunpack.c.l.b16 %v580
    %v2024 = vunpack.c.h.b16 %v580
    %v2025 = vunpack.c.l.b16 %v581
    %v2026 = vunpack.c.h.b16 %v581
    %v2027 = vunpack.c.l.b16 %v582
    %v2028 = vunpack.c.h.b16 %v582
    %v2029 = vunpack.c.l.b16 %v583
    %v2030 = vunpack.c.h.b16 %v583
    %v2031 = vunpack.c.l.b16 %v584
    %v2032 = vunpack.c.h.b16 %v584
    %v2033 = vunpack.c.l.b16 %v585
    %v2034 = vunpack.c.h.b16 %v585
    %v2035 = vunpack.c.l.b16 %v586
    %v2036 = vunpack.c.h.b16 %v586
    %v2037 = vunpack.c.l.b16 %v587
    %v2038 = vunpack.c.h.b16 %v587
    %v2039 = vunpack.c.l.b16 %v588
    %v2040 = vunpack.c.h.b16 %v588
    %v2041 = vunpack.c.l.b16 %v589
    %v2042 = vunpack.c.h.b16 %v589
    %v2043 = vunpack.c.l.b16 %v590
    %v2044 = vunpack.c.h.b16 %v590
    %v2045 = vunpack.c.l.b16 %v591
    %v2046 = vunpack.c.h.b16 %v591
    %v2047 = vunpack.c.l.b16 %v592
    %v2048 = vunpack.c.h.b16 %v592
    %v2049 = vunpack.c.l.b16 %v593
    %v2050 = vunpack.c.h.b16 %v593
    %v2051 = vunpack.c.l.b16 %v594
    %v2052 = vunpack.c.h.b16 %v594
    %v2053 = vunpack.c.l.b16 %v595
    %v2054 = vunpack.c.h.b16 %v595
    %v2055 = vunpack.c.l.b16 %v596
    %v2056 = vunpack.c.h.b16 %v596
    %v2057 = vunpack.c.l.b16 %v597
    %v2058 = vunpack.c.h.b16 %v597
    %v2059 = vunpack.c.l.b16 %v598
    %v2060 = vunpack.c.h.b16 %v598
    %v2061 = vunpack.c.l.b16 %v599
    %v2062 = vunpack.c.h.b16 %v599
    %v2063 = vunpack.c.l.b16 %v600
    %v2064 = vunpack.c.h.b16 %v600
    %v2065 = vunpack.c.l.b16 %v601
    %v2066 = vunpack.c.h.b16 %v601
    %v2067 = vunpack.c.l.b16 %v602
    %v2068 = vunpack.c.h.b16 %v602
    %v2069 = vunpack.c.l.b16 %v603
    %v2070 = vunpack.c.h.b16 %v603
    %v2071 = vunpack.c.l.b16 %v604
    %v2072 = vunpack.c.h.b16 %v604
    %v2073 = vunpack.c.l.b16 %v605
    %v2074 = vunpack.c.h.b16 %v605
    %v2075 = vunpack.c.l.b16 %v606
    %v2076 = vunpack.c.h.b16 %v606
    %v2077 = vpack.c.b16 %v1127, %v1117
    %v2078 = vpack.c.b16 %v1128, %v1118
    %v2079 = vpack.c.b16 %v1129, %v1119
    %v2080 = vpack.c.b16 %v1130, %v1120
    %v2081 = vpack.c.b16 %v1131, %v1121
    %v2082 = vpack.c.b16 %v1132, %v1122
    %v2083 = vpack.c.b16 %v1133, %v1123
    %v2084 = vpack.c.b16 %v1134, %v1124
    %v2085 = vpack.c.b16 %v1135, %v1125
    %v2086 = vpack.c.b16 %v1136, %v1126
    %v2087 = vpack.c.b16 %v1147, %v1137
    %v2088 = vpack.c.b16 %v1148, %v1138
    %v2089 = vpack.c.b16 %v1149, %v1139
    %v2090 = vpack.c.b16 %v1150, %v1140
    %v2091 = vpack.c.b16 %v1151, %v1141
    %v2092 = vpack.c.b16 %v1152, %v1142
    %v2093 = vpack.c.b16 %v1153, %v1143
    %v2094 = vpack.c.b16 %v1154, %v1144
    %v2095 = vpack.c.b16 %v1155, %v1145
    %v2096 = vpack.c.b16 %v1156, %v1146
    %v2097 = vpack.c.b16 %v1167, %v1157
    %v2098 = vpack.c.b16 %v1168, %v1158
    %v2099 = vpack.c.b16 %v1169, %v1159
    %v2100 = vpack.c.b16 %v1170, %v1160
    %v2101 = vpack.c.b16 %v1171, %v1161
    %v2102 = vpack.c.b16 %v1172, %v1162
    %v2103 = vpack.c.b16 %v1173, %v1163
    %v2104 = vpack.c.b16 %v1174, %v1164
    %v2105 = vpack.c.b16 %v1175, %v1165
    %v2106 = vpack.c.b16 %v1176, %v1166
    %v2107 = vpack.c.b16 %v1187, %v1177
    %v2108 = vpack.c.b16 %v1188, %v1178
    %v2109 = vpack.c.b16 %v1189, %v1179
    %v2110 = vpack.c.b16 %v1190, %v1180
    %v2111 = vpack.c.b16 %v1191, %v1181
    %v2112 = vpack.c.b16 %v1192, %v1182
    %v2113 = vpack.c.b16 %v1193, %v1183
    %v2114 = vpack.c.b16 %v1194, %v1184
    %v2115 = vpack.c.b16 %v1195, %v1185
    %v2116 = vpack.c.b16 %v1196, %v1186
    %v2117 = vpack.c.b16 %v1207, %v1197
    %v2118 = vpack.c.b16 %v1208, %v1198
    %v2119 = vpack.c.b16 %v1209, %v1199
    %v2120 = vpack.c.b16 %v1210, %v1200
    %v2121 = vpack.c.b16 %v1211, %v1201
    %v2122 = vpack.c.b16 %v1212, %v1202
    %v2123 = vpack.c.b16 %v1213, %v1203
    %v2124 = vpack.c.b16 %v1214, %v1204
    %v2125 = vpack.c.b16 %v1215, %v1205
    %v2126 = vpack.c.b16 %v1216, %v1206
    %v2127 = vpack.c.b16 %v1227, %v1217
    %v2128 = vpack.c.b16 %v1228, %v1218
    %v2129 = vpack.c.b16 %v1229, %v1219
    %v2130 = vpack.c.b16 %v1230, %v1220
    %v2131 = vpack.c.b16 %v1231, %v1221
    %v2132 = vpack.c.b16 %v1232, %v1222
    %v2133 = vpack.c.b16 %v1233, %v1223
    %v2134 = vpack.c.b16 %v1234, %v1224
    %v2135 = vpack.c.b16 %v1235, %v1225
    %v2136 = vpack.c.b16 %v1236, %v1226
    %v2137 = vpack.c.b16 %v1247, %v1237
    %v2138 = vpack.c.b16 %v1248, %v1238
    %v2139 = vpack.c.b16 %v1249, %v1239
    %v2140 = vpack.c.b16 %v1250, %v1240
    %v2141 = vpack.c.b16 %v1251, %v1241
    %v2142 = vpack.c.b16 %v1252, %v1242
    %v2143 = vpack.c.b16 %v1253, %v1243
    %v2144 = vpack.c.b16 %v1254, %v1244
    %v2145 = vpack.c.b16 %v1255, %v1245
    %v2146 = vpack.c.b16 %v1256, %v1246
    %v2147 = vpack.c.b16 %v1267, %v1257
    %v2148 = vpack.c.b16 %v1268, %v1258
    %v2149 = vpack.c.b16 %v1269, %v1259
    %v2150 = vpack.c.b16 %v1270, %v1260
    %v2151 = vpack.c.b16 %v1271, %v1261
    %v2152 = vpack.c.b16 %v1272, %v1262
    %v2153 = vpack.c.b16 %v1273, %v1263
    %v2154 = vpack.c.b16 %v1274, %v1264
    %v2155 = vpack.c.b16 %v1275, %v1265
    %v2156 = vpack.c.b16 %v1276, %v1266
    %v2157 = vpack.c.b16 %v1287, %v1277
    %v2158 = vpack.c.b16 %v1288, %v1278
    %v2159 = vpack.c.b16 %v1289, %v1279
    %v2160 = vpack.c.b16 %v1290, %v1280
    %v2161 = vpack.c.b16 %v1291, %v1281
    %v2162 = vpack.c.b16 %v1292, %v1282
    %v2163 = vpack.c.b16 %v1293, %v1283
    %v2164 = vpack.c.b16 %v1294, %v1284
    %v2165 = vpack.c.b16 %v1295, %v1285
    %v2166 = vpack.c.b16 %v1296, %v1286
    %v2167 = vpack.c.b16 %v1307, %v1297
    %v2168 = vpack.c.b16 %v1308, %v1298
    %v2169 = vpack.c.b16 %v1309, %v1299
    %v2170 = vpack.c.b16 %v1310, %v1300
    %v2171 = vpack.c.b16 %v1311, %v1301
    %v2172 = vpack.c.b16 %v1312, %v1302
    %v2173 = vpack.c.b16 %v1313, %v1303
    %v2174 = vpack.c.b16 %v1314, %v1304
    %v2175 = vpack.c.b16 %v1315, %v1305
    %v2176 = vpack.c.b16 %v1316, %v1306
    %v2177 = vpack.c.b16 %v1327, %v1317
    %v2178 = vpack.c.b16 %v1328, %v1318
    %v2179 = vpack.c.b16 %v1329, %v1319
    %v2180 = vpack.c.b16 %v1330, %v1320
    %v2181 = vpack.c.b16 %v1331, %v1321
    %v2182 = vpack.c.b16 %v1332, %v1322
    %v2183 = vpack.c.b16 %v1333, %v1323
    %v2184 = vpack.c.b16 %v1334, %v1324
    %v2185 = vpack.c.b16 %v1335, %v1325
    %v2186 = vpack.c.b16 %v1336, %v1326
    %v2187 = vpack.c.b16 %v1347, %v1337
    %v2188 = vpack.c.b16 %v1348, %v1338
    %v2189 = vpack.c.b16 %v1349, %v1339
    %v2190 = vpack.c.b16 %v1350, %v1340
    %v2191 = vpack.c.b16 %v1351, %v1341
    %v2192 = vpack.c.b16 %v1352, %v1342
    %v2193 = vpack.c.b16 %v1353, %v1343
    %v2194 = vpack.c.b16 %v1354, %v1344
    %v2195 = vpack.c.b16 %v1355, %v1345
    %v2196 = vpack.c.b16 %v1356, %v1346
    %v2197 = vpack.c.b16 %v1367, %v1357
    %v2198 = vpack.c.b16 %v1368, %v1358
    %v2199 = vpack.c.b16 %v1369, %v1359
    %v2200 = vpack.c.b16 %v1370, %v1360
    %v2201 = vpack.c.b16 %v1371, %v1361
    %v2202 = vpack.c.b16 %v1372, %v1362
    %v2203 = vpack.c.b16 %v1373, %v1363
    %v2204 = vpack.c.b16 %v1374, %v1364
    %v2205 = vpack.c.b16 %v1375, %v1365
    %v2206 = vpack.c.b16 %v1376, %v1366
    %v2207 = vpack.c.b16 %v1387, %v1377
    %v2208 = vpack.c.b16 %v1388, %v1378
    %v2209 = vpack.c.b16 %v1389, %v1379
    %v2210 = vpack.c.b16 %v1390, %v1380
    %v2211 = vpack.c.b16 %v1391, %v1381
    %v2212 = vpack.c.b16 %v1392, %v1382
    %v2213 = vpack.c.b16 %v1393, %v1383
    %v2214 = vpack.c.b16 %v1394, %v1384
    %v2215 = vpack.c.b16 %v1395, %v1385
    %v2216 = vpack.c.b16 %v1396, %v1386
    %v2217 = vpack.c.b16 %v1407, %v1397
    %v2218 = vpack.c.b16 %v1408, %v1398
    %v2219 = vpack.c.b16 %v1409, %v1399
    %v2220 = vpack.c.b16 %v1410, %v1400
    %v2221 = vpack.c.b16 %v1411, %v1401
    %v2222 = vpack.c.b16 %v1412, %v1402
    %v2223 = vpack.c.b16 %v1413, %v1403
    %v2224 = vpack.c.b16 %v1414, %v1404
    %v2225 = vpack.c.b16 %v1415, %v1405
    %v2226 = vpack.c.b16 %v1416, %v1406
    %v2227 = vpack.c.b16 %v1427, %v1417
    %v2228 = vpack.c.b16 %v1428, %v1418
    %v2229 = vpack.c.b16 %v1429, %v1419
    %v2230 = vpack.c.b16 %v1430, %v1420
    %v2231 = vpack.c.b16 %v1431, %v1421
    %v2232 = vpack.c.b16 %v1432, %v1422
    %v2233 = vpack.c.b16 %v1433, %v1423
    %v2234 = vpack.c.b16 %v1434, %v1424
    %v2235 = vpack.c.b16 %v1435, %v1425
    %v2236 = vpack.c.b16 %v1436, %v1426
    %v2237 = vpack.c.b16 %v1447, %v1437
    %v2238 = vpack.c.b16 %v1448, %v1438
    %v2239 = vpack.c.b16 %v1449, %v1439
    %v2240 = vpack.c.b16 %v1450, %v1440
    %v2241 = vpack.c.b16 %v1451, %v1441
    %v2242 = vpack.c.b16 %v1452, %v1442
    %v2243 = vpack.c.b16 %v1453, %v1443
    %v2244 = vpack.c.b16 %v1454, %v1444
    %v2245 = vpack.c.b16 %v1455, %v1445
    %v2246 = vpack.c.b16 %v1456, %v1446
    %v2247 = vpack.c.b16 %v1467, %v1457
    %v2248 = vpack.c.b16 %v1468, %v1458
    %v2249 = vpack.c.b16 %v1469, %v1459
    %v2250 = vpack.c.b16 %v1470, %v1460
    %v2251 = vpack.c.b16 %v1471, %v1461
    %v2252 = vpack.c.b16 %v1472, %v1462
    %v2253 = vpack.c.b16 %v1473, %v1463
    %v2254 = vpack.c.b16 %v1474, %v1464
    %v2255 = vpack.c.b16 %v1475, %v1465
    %v2256 = vpack.c.b16 %v1476, %v1466
    %v2257 = vpack.c.b16 %v1487, %v1477
    %v2258 = vpack.c.b16 %v1488, %v1478
    %v2259 = vpack.c.b16 %v1489, %v1479
    %v2260 = vpack.c.b16 %v1490, %v1480
    %v2261 = vpack.c.b16 %v1491, %v1481
    %v2262 = vpack.c.b16 %v1492, %v1482
    %v2263 = vpack.c.b16 %v1493, %v1483
    %v2264 = vpack.c.b16 %v1494, %v1484
    %v2265 = vpack.c.b16 %v1495, %v1485
    %v2266 = vpack.c.b16 %v1496, %v1486
    %v2267 = vpack.c.b16 %v1507, %v1497
    %v2268 = vpack.c.b16 %v1508, %v1498
    %v2269 = vpack.c.b16 %v1509, %v1499
    %v2270 = vpack.c.b16 %v1510, %v1500
    %v2271 = vpack.c.b16 %v1511, %v1501
    %v2272 = vpack.c.b16 %v1512, %v1502
    %v2273 = vpack.c.b16 %v1513, %v1503
    %v2274 = vpack.c.b16 %v1514, %v1504
    %v2275 = vpack.c.b16 %v1515, %v1505
    %v2276 = vpack.c.b16 %v1516, %v1506
    %v2277 = vpack.c.b16 %v1527, %v1517
    %v2278 = vpack.c.b16 %v1528, %v1518
    %v2279 = vpack.c.b16 %v1529, %v1519
    %v2280 = vpack.c.b16 %v1530, %v1520
    %v2281 = vpack.c.b16 %v1531, %v1521
    %v2282 = vpack.c.b16 %v1532, %v1522
    %v2283 = vpack.c.b16 %v1533, %v1523
    %v2284 = vpack.c.b16 %v1534, %v1524
    %v2285 = vpack.c.b16 %v1535, %v1525
    %v2286 = vpack.c.b16 %v1536, %v1526
    %v2287 = vpack.c.b16 %v1547, %v1537
    %v2288 = vpack.c.b16 %v1548, %v1538
    %v2289 = vpack.c.b16 %v1549, %v1539
    %v2290 = vpack.c.b16 %v1550, %v1540
    %v2291 = vpack.c.b16 %v1551, %v1541
    %v2292 = vpack.c.b16 %v1552, %v1542
    %v2293 = vpack.c.b16 %v1553, %v1543
    %v2294 = vpack.c.b16 %v1554, %v1544
    %v2295 = vpack.c.b16 %v1555, %v1545
    %v2296 = vpack.c.b16 %v1556, %v1546
    %v2297 = vpack.c.b16 %v1567, %v1557
    %v2298 = vpack.c.b16 %v1568, %v1558
    %v2299 = vpack.c.b16 %v1569, %v1559
    %v2300 = vpack.c.b16 %v1570, %v1560
    %v2301 = vpack.c.b16 %v1571, %v1561
    %v2302 = vpack.c.b16 %v1572, %v1562
    %v2303 = vpack.c.b16 %v1573, %v1563
    %v2304 = vpack.c.b16 %v1574, %v1564
    %v2305 = vpack.c.b16 %v1575, %v1565
    %v2306 = vpack.c.b16 %v1576, %v1566
    %v2307 = vpack.c.b16 %v1587, %v1577
    %v2308 = vpack.c.b16 %v1588, %v1578
    %v2309 = vpack.c.b16 %v1589, %v1579
    %v2310 = vpack.c.b16 %v1590, %v1580
    %v2311 = vpack.c.b16 %v1591, %v1581
    %v2312 = vpack.c.b16 %v1592, %v1582
    %v2313 = vpack.c.b16 %v1593, %v1583
    %v2314 = vpack.c.b16 %v1594, %v1584
    %v2315 = vpack.c.b16 %v1595, %v1585
    %v2316 = vpack.c.b16 %v1596, %v1586
    %v2317 = vpack.c.b16 %v1607, %v1597
    %v2318 = vpack.c.b16 %v1608, %v1598
    %v2319 = vpack.c.b16 %v1609, %v1599
    %v2320 = vpack.c.b16 %v1610, %v1600
    %v2321 = vpack.c.b16 %v1611, %v1601
    %v2322 = vpack.c.b16 %v1612, %v1602
    %v2323 = vpack.c.b16 %v1613, %v1603
    %v2324 = vpack.c.b16 %v1614, %v1604
    %v2325 = vpack.c.b16 %v1615, %v1605
    %v2326 = vpack.c.b16 %v1616, %v1606
    %v2327 = vpack.c.b16 %v1627, %v1617
    %v2328 = vpack.c.b16 %v1628, %v1618
    %v2329 = vpack.c.b16 %v1629, %v1619
    %v2330 = vpack.c.b16 %v1630, %v1620
    %v2331 = vpack.c.b16 %v1631, %v1621
    %v2332 = vpack.c.b16 %v1632, %v1622
    %v2333 = vpack.c.b16 %v1633, %v1623
    %v2334 = vpack.c.b16 %v1634, %v1624
    %v2335 = vpack.c.b16 %v1635, %v1625
    %v2336 = vpack.c.b16 %v1636, %v1626
    %v2337 = vpack.c.b16 %v1647, %v1637
    %v2338 = vpack.c.b16 %v1648, %v1638
    %v2339 = vpack.c.b16 %v1649, %v1639
    %v2340 = vpack.c.b16 %v1650, %v1640
    %v2341 = vpack.c.b16 %v1651, %v1641
    %v2342 = vpack.c.b16 %v1652, %v1642
    %v2343 = vpack.c.b16 %v1653, %v1643
    %v2344 = vpack.c.b16 %v1654, %v1644
    %v2345 = vpack.c.b16 %v1655, %v1645
    %v2346 = vpack.c.b16 %v1656, %v1646
    %v2347 = vpack.c.b16 %v1667, %v1657
    %v2348 = vpack.c.b16 %v1668, %v1658
    %v2349 = vpack.c.b16 %v1669, %v1659
    %v2350 = vpack.c.b16 %v1670, %v1660
    %v2351 = vpack.c.b16 %v1671, %v1661
    %v2352 = vpack.c.b16 %v1672, %v1662
    %v2353 = vpack.c.b16 %v1673, %v1663
    %v2354 = vpack.c.b16 %v1674, %v1664
    %v2355 = vpack.c.b16 %v1675, %v1665
    %v2356 = vpack.c.b16 %v1676, %v1666
    %v2357 = vpack.c.b16 %v1687, %v1677
    %v2358 = vpack.c.b16 %v1688, %v1678
    %v2359 = vpack.c.b16 %v1689, %v1679
    %v2360 = vpack.c.b16 %v1690, %v1680
    %v2361 = vpack.c.b16 %v1691, %v1681
    %v2362 = vpack.c.b16 %v1692, %v1682
    %v2363 = vpack.c.b16 %v1693, %v1683
    %v2364 = vpack.c.b16 %v1694, %v1684
    %v2365 = vpack.c.b16 %v1695, %v1685
    %v2366 = vpack.c.b16 %v1696, %v1686
    %v2367 = vpack.c.b16 %v1707, %v1697
    %v2368 = vpack.c.b16 %v1708, %v1698
    %v2369 = vpack.c.b16 %v1709, %v1699
    %v2370 = vpack.c.b16 %v1710, %v1700
    %v2371 = vpack.c.b16 %v1711, %v1701
    %v2372 = vpack.c.b16 %v1712, %v1702
    %v2373 = vpack.c.b16 %v1713, %v1703
    %v2374 = vpack.c.b16 %v1714, %v1704
    %v2375 = vpack.c.b16 %v1715, %v1705
    %v2376 = vpack.c.b16 %v1716, %v1706
    %v2377 = vpack.c.b16 %v1727, %v1717
    %v2378 = vpack.c.b16 %v1728, %v1718
    %v2379 = vpack.c.b16 %v1729, %v1719
    %v2380 = vpack.c.b16 %v1730, %v1720
    %v2381 = vpack.c.b16 %v1731, %v1721
    %v2382 = vpack.c.b16 %v1732, %v1722
    %v2383 = vpack.c.b16 %v1733, %v1723
    %v2384 = vpack.c.b16 %v1734, %v1724
    %v2385 = vpack.c.b16 %v1735, %v1725
    %v2386 = vpack.c.b16 %v1736, %v1726
    %v2387 = vpack.c.b16 %v1747, %v1737
    %v2388 = vpack.c.b16 %v1748, %v1738
    %v2389 = vpack.c.b16 %v1749, %v1739
    %v2390 = vpack.c.b16 %v1750, %v1740
    %v2391 = vpack.c.b16 %v1751, %v1741
    %v2392 = vpack.c.b16 %v1752, %v1742
    %v2393 = vpack.c.b16 %v1753, %v1743
    %v2394 = vpack.c.b16 %v1754, %v1744
    %v2395 = vpack.c.b16 %v1755, %v1745
    %v2396 = vpack.c.b16 %v1756, %v1746
    %v2397 = vpack.c.b16 %v1767, %v1757
    %v2398 = vpack.c.b16 %v1768, %v1758
    %v2399 = vpack.c.b16 %v1769, %v1759
    %v2400 = vpack.c.b16 %v1770, %v1760
    %v2401 = vpack.c.b16 %v1771, %v1761
    %v2402 = vpack.c.b16 %v1772, %v1762
    %v2403 = vpack.c.b16 %v1773, %v1763
    %v2404 = vpack.c.b16 %v1774, %v1764
    %v2405 = vpack.c.b16 %v1775, %v1765
    %v2406 = vpack.c.b16 %v1776, %v1766
    %v2407 = vpack.c.b16 %v1787, %v1777
    %v2408 = vpack.c.b16 %v1788, %v1778
    %v2409 = vpack.c.b16 %v1789, %v1779
    %v2410 = vpack.c.b16 %v1790, %v1780
    %v2411 = vpack.c.b16 %v1791, %v1781
    %v2412 = vpack.c.b16 %v1792, %v1782
    %v2413 = vpack.c.b16 %v1793, %v1783
    %v2414 = vpack.c.b16 %v1794, %v1784
    %v2415 = vpack.c.b16 %v1795, %v1785
    %v2416 = vpack.c.b16 %v1796, %v1786
    %v2417 = vpack.c.b16 %v1807, %v1797
    %v2418 = vpack.c.b16 %v1808, %v1798
    %v2419 = vpack.c.b16 %v1809, %v1799
    %v2420 = vpack.c.b16 %v1810, %v1800
    %v2421 = vpack.c.b16 %v1811, %v1801
    %v2422 = vpack.c.b16 %v1812, %v1802
    %v2423 = vpack.c.b16 %v1813, %v1803
    %v2424 = vpack.c.b16 %v1814, %v1804
    %v2425 = vpack.c.b16 %v1815, %v1805
    %v2426 = vpack.c.b16 %v1816, %v1806
    %v2427 = vpack.c.b16 %v1827, %v1817
    %v2428 = vpack.c.b16 %v1828, %v1818
    %v2429 = vpack.c.b16 %v1829, %v1819
    %v2430 = vpack.c.b16 %v1830, %v1820
    %v2431 = vpack.c.b16 %v1831, %v1821
    %v2432 = vpack.c.b16 %v1832, %v1822
    %v2433 = vpack.c.b16 %v1833, %v1823
    %v2434 = vpack.c.b16 %v1834, %v1824
    %v2435 = vpack.c.b16 %v1835, %v1825
    %v2436 = vpack.c.b16 %v1836, %v1826
    %v2437 = vpack.c.b16 %v1847, %v1837
    %v2438 = vpack.c.b16 %v1848, %v1838
    %v2439 = vpack.c.b16 %v1849, %v1839
    %v2440 = vpack.c.b16 %v1850, %v1840
    %v2441 = vpack.c.b16 %v1851, %v1841
    %v2442 = vpack.c.b16 %v1852, %v1842
    %v2443 = vpack.c.b16 %v1853, %v1843
    %v2444 = vpack.c.b16 %v1854, %v1844
    %v2445 = vpack.c.b16 %v1855, %v1845
    %v2446 = vpack.c.b16 %v1856, %v1846
    %v2447 = vpack.c.b16 %v1867, %v1857
    %v2448 = vpack.c.b16 %v1868, %v1858
    %v2449 = vpack.c.b16 %v1869, %v1859
    %v2450 = vpack.c.b16 %v1870, %v1860
    %v2451 = vpack.c.b16 %v1871, %v1861
    %v2452 = vpack.c.b16 %v1872, %v1862
    %v2453 = vpack.c.b16 %v1873, %v1863
    %v2454 = vpack.c.b16 %v1874, %v1864
    %v2455 = vpack.c.b16 %v1875, %v1865
    %v2456 = vpack.c.b16 %v1876, %v1866
    %v2457 = vpack.c.b16 %v1887, %v1877
    %v2458 = vpack.c.b16 %v1888, %v1878
    %v2459 = vpack.c.b16 %v1889, %v1879
    %v2460 = vpack.c.b16 %v1890, %v1880
    %v2461 = vpack.c.b16 %v1891, %v1881
    %v2462 = vpack.c.b16 %v1892, %v1882
    %v2463 = vpack.c.b16 %v1893, %v1883
    %v2464 = vpack.c.b16 %v1894, %v1884
    %v2465 = vpack.c.b16 %v1895, %v1885
    %v2466 = vpack.c.b16 %v1896, %v1886
    %v2467 = vpack.c.b16 %v1907, %v1897
    %v2468 = vpack.c.b16 %v1908, %v1898
    %v2469 = vpack.c.b16 %v1909, %v1899
    %v2470 = vpack.c.b16 %v1910, %v1900
    %v2471 = vpack.c.b16 %v1911, %v1901
    %v2472 = vpack.c.b16 %v1912, %v1902
    %v2473 = vpack.c.b16 %v1913, %v1903
    %v2474 = vpack.c.b16 %v1914, %v1904
    %v2475 = vpack.c.b16 %v1915, %v1905
    %v2476 = vpack.c.b16 %v1916, %v1906
    %v2477 = vpack.c.b16 %v1927, %v1917
    %v2478 = vpack.c.b16 %v1928, %v1918
    %v2479 = vpack.c.b16 %v1929, %v1919
    %v2480 = vpack.c.b16 %v1930, %v1920
    %v2481 = vpack.c.b16 %v1931, %v1921
    %v2482 = vpack.c.b16 %v1932, %v1922
    %v2483 = vpack.c.b16 %v1933, %v1923
    %v2484 = vpack.c.b16 %v1934, %v1924
    %v2485 = vpack.c.b16 %v1935, %v1925
    %v2486 = vpack.c.b16 %v1936, %v1926
    %v2487 = vpack.c.b16 %v1947, %v1937
    %v2488 = vpack.c.b16 %v1948, %v1938
    %v2489 = vpack.c.b16 %v1949, %v1939
    %v2490 = vpack.c.b16 %v1950, %v1940
    %v2491 = vpack.c.b16 %v1951, %v1941
    %v2492 = vpack.c.b16 %v1952, %v1942
    %v2493 = vpack.c.b16 %v1953, %v1943
    %v2494 = vpack.c.b16 %v1954, %v1944
    %v2495 = vpack.c.b16 %v1955, %v1945
    %v2496 = vpack.c.b16 %v1956, %v1946
    %v2497 = vpack.c.b16 %v1967, %v1957
    %v2498 = vpack.c.b16 %v1968, %v1958
    %v2499 = vpack.c.b16 %v1969, %v1959
    %v2500 = vpack.c.b16 %v1970, %v1960
    %v2501 = vpack.c.b16 %v1971, %v1961
    %v2502 = vpack.c.b16 %v1972, %v1962
    %v2503 = vpack.c.b16 %v1973, %v1963
    %v2504 = vpack.c.b16 %v1974, %v1964
    %v2505 = vpack.c.b16 %v1975, %v1965
    %v2506 = vpack.c.b16 %v1976, %v1966
    %v2507 = vpack.c.b16 %v1987, %v1977
    %v2508 = vpack.c.b16 %v1988, %v1978
    %v2509 = vpack.c.b16 %v1989, %v1979
    %v2510 = vpack.c.b16 %v1990, %v1980
    %v2511 = vpack.c.b16 %v1991, %v1981
    %v2512 = vpack.c.b16 %v1992, %v1982
    %v2513 = vpack.c.b16 %v1993, %v1983
    %v2514 = vpack.c.b16 %v1994, %v1984
    %v2515 = vpack.c.b16 %v1995, %v1985
    %v2516 = vpack.c.b16 %v1996, %v1986
    %v2517 = vpack.c.b16 %v2007, %v1997
    %v2518 = vpack.c.b16 %v2008, %v1998
    %v2519 = vpack.c.b16 %v2009, %v1999
    %v2520 = vpack.c.b16 %v2010, %v2000
    %v2521 = vpack.c.b16 %v2011, %v2001
    %v2522 = vpack.c.b16 %v2012, %v2002
    %v2523 = vpack.c.b16 %v2013, %v2003
    %v2524 = vpack.c.b16 %v2014, %v2004
    %v2525 = vpack.c.b16 %v2015, %v2005
    %v2526 = vpack.c.b16 %v2016, %v2006
    %v2527 = vpack.c.b16 %v2027, %v2017
    %v2528 = vpack.c.b16 %v2028, %v2018
    %v2529 = vpack.c.b16 %v2029, %v2019
    %v2530 = vpack.c.b16 %v2030, %v2020
    %v2531 = vpack.c.b16 %v2031, %v2021
    %v2532 = vpack.c.b16 %v2032, %v2022
    %v2533 = vpack.c.b16 %v2033, %v2023
    %v2534 = vpack.c.b16 %v2034, %v2024
    %v2535 = vpack.c.b16 %v2035, %v2025
    %v2536 = vpack.c.b16 %v2036, %v2026
    %v2537 = vpack.c.b16 %v2047, %v2037
    %v2538 = vpack.c.b16 %v2048, %v2038
    %v2539 = vpack.c.b16 %v2049, %v2039
    %v2540 = vpack.c.b16 %v2050, %v2040
    %v2541 = vpack.c.b16 %v2051, %v2041
    %v2542 = vpack.c.b16 %v2052, %v2042
    %v2543 = vpack.c.b16 %v2053, %v2043
    %v2544 = vpack.c.b16 %v2054, %v2044
    %v2545 = vpack.c.b16 %v2055, %v2045
    %v2546 = vpack.c.b16 %v2056, %v2046
    %v2547 = vpack.c.b16 %v2067, %v2057
    %v2548 = vpack.c.b16 %v2068, %v2058
    %v2549 = vpack.c.b16 %v2069, %v2059
    %v2550 = vpack.c.b16 %v2070, %v2060
    %v2551 = vpack.c.b16 %v2071, %v2061
    %v2552 = vpack.c.b16 %v2072, %v2062
    %v2553 = vpack.c.b16 %v2073, %v2063
    %v2554 = vpack.c.b16 %v2074, %v2064
    %v2555 = vpack.c.b16 %v2075, %v2065
    %v2556 = vpack.c.b16 %v2076, %v2066
    %3037 = vmatprep.subr.bf16.mxu0 %v2148
    %3038 = vmatpush1.bf16.msra.mxu0 %v2147
    %3039 = vmatprep.subr.bf16.mxu0 %v2138
    %3040 = vmatpush1.bf16.msra.mxu0 %v2137
    %3041 = vmatprep.subr.bf16.mxu0 %v2128
    %3042 = vmatpush1.bf16.msra.mxu0 %v2127
    %3043 = vmatprep.subr.bf16.mxu0 %v2118
    %3044 = vmatpush1.bf16.msra.mxu0 %v2117
    %3045 = vmatprep.subr.bf16.mxu0 %v2108
    %3046 = vmatpush1.bf16.msra.mxu0 %v2107
    %3047 = vmatprep.subr.bf16.mxu0 %v2098
    %3048 = vmatpush1.bf16.msra.mxu0 %v2097
    %3049 = vmatprep.subr.bf16.mxu0 %v2088
    %3050 = vmatpush1.bf16.msra.mxu0 %v2087
    %3051 = vmatprep.subr.bf16.mxu0 %v2078
    %3052 = vmatpush1.bf16.msra.mxu0 %v2077
    %3053 = vmatprep.subr.bf16.mxu0 %v2228
    %3054 = vmatpush2.bf16.msra.mxu0 %v2227
    %3055 = vmatprep.subr.bf16.mxu0 %v2218
    %3056 = vmatpush2.bf16.msra.mxu0 %v2217
    %3057 = vmatprep.subr.bf16.mxu0 %v2208
    %3058 = vmatpush2.bf16.msra.mxu0 %v2207
    %3059 = vmatprep.subr.bf16.mxu0 %v2198
    %3060 = vmatpush2.bf16.msra.mxu0 %v2197
    %3061 = vmatprep.subr.bf16.mxu0 %v2188
    %3062 = vmatpush2.bf16.msra.mxu0 %v2187
    %3063 = vmatprep.subr.bf16.mxu0 %v2178
    %3064 = vmatpush2.bf16.msra.mxu0 %v2177
    %3065 = vmatprep.subr.bf16.mxu0 %v2168
    %3066 = vmatpush2.bf16.msra.mxu0 %v2167
    %3067 = vmatprep.subr.bf16.mxu0 %v2158
    %3068 = vmatpush2.bf16.msra.mxu0 %v2157
    %3069 = vmatprep.mubr.bf16.mxu0 %v626
    %3070 = vmatmul.mubr.bf16.gmra.mxu0 %v625
    %v3071 = vpop.f32.mrf.mxu0
    %v3072 = vadd.f32 0.0, %v3071
    %v3073 = vpop.f32.mrf.mxu0
    %v3074 = vadd.f32 0.0, %v3073
    %v3075 = vpop.f32.mrf.mxu0
    %v3076 = vadd.f32 0.0, %v3075
    %v3077 = vpop.f32.mrf.mxu0
    %v3078 = vadd.f32 0.0, %v3077
    %3079 = vdwg.mxu0
    %3080 = vmatprep.subr.bf16.mxu0 %v2308
    %3081 = vmatpush1.bf16.msra.mxu0 %v2307
    %3082 = vmatprep.subr.bf16.mxu0 %v2298
    %3083 = vmatpush1.bf16.msra.mxu0 %v2297
    %3084 = vmatprep.subr.bf16.mxu0 %v2288
    %3085 = vmatpush1.bf16.msra.mxu0 %v2287
    %3086 = vmatprep.subr.bf16.mxu0 %v2278
    %3087 = vmatpush1.bf16.msra.mxu0 %v2277
    %3088 = vmatprep.subr.bf16.mxu0 %v2268
    %3089 = vmatpush1.bf16.msra.mxu0 %v2267
    %3090 = vmatprep.subr.bf16.mxu0 %v2258
    %3091 = vmatpush1.bf16.msra.mxu0 %v2257
    %3092 = vmatprep.subr.bf16.mxu0 %v2248
    %3093 = vmatpush1.bf16.msra.mxu0 %v2247
    %3094 = vmatprep.subr.bf16.mxu0 %v2238
    %3095 = vmatpush1.bf16.msra.mxu0 %v2237
    %3096 = vmatprep.subr.bf16.mxu0 %v2388
    %3097 = vmatpush2.bf16.msra.mxu0 %v2387
    %3098 = vmatprep.subr.bf16.mxu0 %v2378
    %3099 = vmatpush2.bf16.msra.mxu0 %v2377
    %3100 = vmatprep.subr.bf16.mxu0 %v2368
    %3101 = vmatpush2.bf16.msra.mxu0 %v2367
    %3102 = vmatprep.subr.bf16.mxu0 %v2358
    %3103 = vmatpush2.bf16.msra.mxu0 %v2357
    %3104 = vmatprep.subr.bf16.mxu0 %v2348
    %3105 = vmatpush2.bf16.msra.mxu0 %v2347
    %3106 = vmatprep.subr.bf16.mxu0 %v2338
    %3107 = vmatpush2.bf16.msra.mxu0 %v2337
    %3108 = vmatprep.subr.bf16.mxu0 %v2328
    %3109 = vmatpush2.bf16.msra.mxu0 %v2327
    %3110 = vmatprep.subr.bf16.mxu0 %v2318
    %3111 = vmatpush2.bf16.msra.mxu0 %v2317
    %3112 = vmatprep.mubr.bf16.mxu0 %v628
    %3113 = vmatmul.mubr.bf16.gmra.mxu0 %v627
    %v3114 = vpop.f32.mrf.mxu0
    %v3115 = vadd.f32 %v3072, %v3114
    %v3116 = vpop.f32.mrf.mxu0
    %v3117 = vadd.f32 %v3074, %v3116
    %v3118 = vpop.f32.mrf.mxu0
    %v3119 = vadd.f32 %v3076, %v3118
    %v3120 = vpop.f32.mrf.mxu0
    %v3121 = vadd.f32 %v3078, %v3120
    %3122 = vdwg.mxu0
    %3123 = vmatprep.subr.bf16.mxu0 %v2468
    %3124 = vmatpush1.bf16.msra.mxu0 %v2467
    %3125 = vmatprep.subr.bf16.mxu0 %v2458
    %3126 = vmatpush1.bf16.msra.mxu0 %v2457
    %3127 = vmatprep.subr.bf16.mxu0 %v2448
    %3128 = vmatpush1.bf16.msra.mxu0 %v2447
    %3129 = vmatprep.subr.bf16.mxu0 %v2438
    %3130 = vmatpush1.bf16.msra.mxu0 %v2437
    %3131 = vmatprep.subr.bf16.mxu0 %v2428
    %3132 = vmatpush1.bf16.msra.mxu0 %v2427
    %3133 = vmatprep.subr.bf16.mxu0 %v2418
    %3134 = vmatpush1.bf16.msra.mxu0 %v2417
    %3135 = vmatprep.subr.bf16.mxu0 %v2408
    %3136 = vmatpush1.bf16.msra.mxu0 %v2407
    %3137 = vmatprep.subr.bf16.mxu0 %v2398
    %3138 = vmatpush1.bf16.msra.mxu0 %v2397
    %3139 = vmatprep.subr.bf16.mxu0 %v2548
    %3140 = vmatpush2.bf16.msra.mxu0 %v2547
    %3141 = vmatprep.subr.bf16.mxu0 %v2538
    %3142 = vmatpush2.bf16.msra.mxu0 %v2537
    %3143 = vmatprep.subr.bf16.mxu0 %v2528
    %3144 = vmatpush2.bf16.msra.mxu0 %v2527
    %3145 = vmatprep.subr.bf16.mxu0 %v2518
    %3146 = vmatpush2.bf16.msra.mxu0 %v2517
    %3147 = vmatprep.subr.bf16.mxu0 %v2508
    %3148 = vmatpush2.bf16.msra.mxu0 %v2507
    %3149 = vmatprep.subr.bf16.mxu0 %v2498
    %3150 = vmatpush2.bf16.msra.mxu0 %v2497
    %3151 = vmatprep.subr.bf16.mxu0 %v2488
    %3152 = vmatpush2.bf16.msra.mxu0 %v2487
    %3153 = vmatprep.subr.bf16.mxu0 %v2478
    %3154 = vmatpush2.bf16.msra.mxu0 %v2477
    %3155 = vmatprep.mubr.bf16.mxu0 %v630
    %3156 = vmatmul.mubr.bf16.gmra.mxu0 %v629
    %v3157 = vpop.f32.mrf.mxu0
    %v3158 = vadd.f32 %v3115, %v3157
    %v3159 = vpop.f32.mrf.mxu0
    %v3160 = vadd.f32 %v3117, %v3159
    %v3161 = vpop.f32.mrf.mxu0
    %v3162 = vadd.f32 %v3119, %v3161
    %v3163 = vpop.f32.mrf.mxu0
    %v3164 = vadd.f32 %v3121, %v3163
    %3165 = vdwg.mxu0
    %3166 = vmatprep.subr.bf16.mxu0 %v2150
    %3167 = vmatpush1.bf16.msra.mxu0 %v2149
    %3168 = vmatprep.subr.bf16.mxu0 %v2140
    %3169 = vmatpush1.bf16.msra.mxu0 %v2139
    %3170 = vmatprep.subr.bf16.mxu0 %v2130
    %3171 = vmatpush1.bf16.msra.mxu0 %v2129
    %3172 = vmatprep.subr.bf16.mxu0 %v2120
    %3173 = vmatpush1.bf16.msra.mxu0 %v2119
    %3174 = vmatprep.subr.bf16.mxu0 %v2110
    %3175 = vmatpush1.bf16.msra.mxu0 %v2109
    %3176 = vmatprep.subr.bf16.mxu0 %v2100
    %3177 = vmatpush1.bf16.msra.mxu0 %v2099
    %3178 = vmatprep.subr.bf16.mxu0 %v2090
    %3179 = vmatpush1.bf16.msra.mxu0 %v2089
    %3180 = vmatprep.subr.bf16.mxu0 %v2080
    %3181 = vmatpush1.bf16.msra.mxu0 %v2079
    %3182 = vmatprep.subr.bf16.mxu0 %v2230
    %3183 = vmatpush2.bf16.msra.mxu0 %v2229
    %3184 = vmatprep.subr.bf16.mxu0 %v2220
    %3185 = vmatpush2.bf16.msra.mxu0 %v2219
    %3186 = vmatprep.subr.bf16.mxu0 %v2210
    %3187 = vmatpush2.bf16.msra.mxu0 %v2209
    %3188 = vmatprep.subr.bf16.mxu0 %v2200
    %3189 = vmatpush2.bf16.msra.mxu0 %v2199
    %3190 = vmatprep.subr.bf16.mxu0 %v2190
    %3191 = vmatpush2.bf16.msra.mxu0 %v2189
    %3192 = vmatprep.subr.bf16.mxu0 %v2180
    %3193 = vmatpush2.bf16.msra.mxu0 %v2179
    %3194 = vmatprep.subr.bf16.mxu0 %v2170
    %3195 = vmatpush2.bf16.msra.mxu0 %v2169
    %3196 = vmatprep.subr.bf16.mxu0 %v2160
    %3197 = vmatpush2.bf16.msra.mxu0 %v2159
    %3198 = vmatprep.mubr.bf16.mxu0 %v626
    %3199 = vmatmul.mubr.bf16.gmra.mxu0 %v625
    %v3200 = vpop.f32.mrf.mxu0
    %v3201 = vadd.f32 0.0, %v3200
    %v3202 = vpop.f32.mrf.mxu0
    %v3203 = vadd.f32 0.0, %v3202
    %v3204 = vpop.f32.mrf.mxu0
    %v3205 = vadd.f32 0.0, %v3204
    %v3206 = vpop.f32.mrf.mxu0
    %v3207 = vadd.f32 0.0, %v3206
    %3208 = vdwg.mxu0
    %3209 = vmatprep.subr.bf16.mxu0 %v2310
    %3210 = vmatpush1.bf16.msra.mxu0 %v2309
    %3211 = vmatprep.subr.bf16.mxu0 %v2300
    %3212 = vmatpush1.bf16.msra.mxu0 %v2299
    %3213 = vmatprep.subr.bf16.mxu0 %v2290
    %3214 = vmatpush1.bf16.msra.mxu0 %v2289
    %3215 = vmatprep.subr.bf16.mxu0 %v2280
    %3216 = vmatpush1.bf16.msra.mxu0 %v2279
    %3217 = vmatprep.subr.bf16.mxu0 %v2270
    %3218 = vmatpush1.bf16.msra.mxu0 %v2269
    %3219 = vmatprep.subr.bf16.mxu0 %v2260
    %3220 = vmatpush1.bf16.msra.mxu0 %v2259
    %3221 = vmatprep.subr.bf16.mxu0 %v2250
    %3222 = vmatpush1.bf16.msra.mxu0 %v2249
    %3223 = vmatprep.subr.bf16.mxu0 %v2240
    %3224 = vmatpush1.bf16.msra.mxu0 %v2239
    %3225 = vmatprep.subr.bf16.mxu0 %v2390
    %3226 = vmatpush2.bf16.msra.mxu0 %v2389
    %3227 = vmatprep.subr.bf16.mxu0 %v2380
    %3228 = vmatpush2.bf16.msra.mxu0 %v2379
    %3229 = vmatprep.subr.bf16.mxu0 %v2370
    %3230 = vmatpush2.bf16.msra.mxu0 %v2369
    %3231 = vmatprep.subr.bf16.mxu0 %v2360
    %3232 = vmatpush2.bf16.msra.mxu0 %v2359
    %3233 = vmatprep.subr.bf16.mxu0 %v2350
    %3234 = vmatpush2.bf16.msra.mxu0 %v2349
    %3235 = vmatprep.subr.bf16.mxu0 %v2340
    %3236 = vmatpush2.bf16.msra.mxu0 %v2339
    %3237 = vmatprep.subr.bf16.mxu0 %v2330
    %3238 = vmatpush2.bf16.msra.mxu0 %v2329
    %3239 = vmatprep.subr.bf16.mxu0 %v2320
    %3240 = vmatpush2.bf16.msra.mxu0 %v2319
    %3241 = vmatprep.mubr.bf16.mxu0 %v628
    %3242 = vmatmul.mubr.bf16.gmra.mxu0 %v627
    %v3243 = vpop.f32.mrf.mxu0
    %v3244 = vadd.f32 %v3201, %v3243
    %v3245 = vpop.f32.mrf.mxu0
    %v3246 = vadd.f32 %v3203, %v3245
    %v3247 = vpop.f32.mrf.mxu0
    %v3248 = vadd.f32 %v3205, %v3247
    %v3249 = vpop.f32.mrf.mxu0
    %v3250 = vadd.f32 %v3207, %v3249
    %3251 = vdwg.mxu0
    %3252 = vmatprep.subr.bf16.mxu0 %v2470
    %3253 = vmatpush1.bf16.msra.mxu0 %v2469
    %3254 = vmatprep.subr.bf16.mxu0 %v2460
    %3255 = vmatpush1.bf16.msra.mxu0 %v2459
    %3256 = vmatprep.subr.bf16.mxu0 %v2450
    %3257 = vmatpush1.bf16.msra.mxu0 %v2449
    %3258 = vmatprep.subr.bf16.mxu0 %v2440
    %3259 = vmatpush1.bf16.msra.mxu0 %v2439
    %3260 = vmatprep.subr.bf16.mxu0 %v2430
    %3261 = vmatpush1.bf16.msra.mxu0 %v2429
    %3262 = vmatprep.subr.bf16.mxu0 %v2420
    %3263 = vmatpush1.bf16.msra.mxu0 %v2419
    %3264 = vmatprep.subr.bf16.mxu0 %v2410
    %3265 = vmatpush1.bf16.msra.mxu0 %v2409
    %3266 = vmatprep.subr.bf16.mxu0 %v2400
    %3267 = vmatpush1.bf16.msra.mxu0 %v2399
    %3268 = vmatprep.subr.bf16.mxu0 %v2550
    %3269 = vmatpush2.bf16.msra.mxu0 %v2549
    %3270 = vmatprep.subr.bf16.mxu0 %v2540
    %3271 = vmatpush2.bf16.msra.mxu0 %v2539
    %3272 = vmatprep.subr.bf16.mxu0 %v2530
    %3273 = vmatpush2.bf16.msra.mxu0 %v2529
    %3274 = vmatprep.subr.bf16.mxu0 %v2520
    %3275 = vmatpush2.bf16.msra.mxu0 %v2519
    %3276 = vmatprep.subr.bf16.mxu0 %v2510
    %3277 = vmatpush2.bf16.msra.mxu0 %v2509
    %3278 = vmatprep.subr.bf16.mxu0 %v2500
    %3279 = vmatpush2.bf16.msra.mxu0 %v2499
    %3280 = vmatprep.subr.bf16.mxu0 %v2490
    %3281 = vmatpush2.bf16.msra.mxu0 %v2489
    %3282 = vmatprep.subr.bf16.mxu0 %v2480
    %3283 = vmatpush2.bf16.msra.mxu0 %v2479
    %3284 = vmatprep.mubr.bf16.mxu0 %v630
    %3285 = vmatmul.mubr.bf16.gmra.mxu0 %v629
    %v3286 = vpop.f32.mrf.mxu0
    %v3287 = vadd.f32 %v3244, %v3286
    %v3288 = vpop.f32.mrf.mxu0
    %v3289 = vadd.f32 %v3246, %v3288
    %v3290 = vpop.f32.mrf.mxu0
    %v3291 = vadd.f32 %v3248, %v3290
    %v3292 = vpop.f32.mrf.mxu0
    %v3293 = vadd.f32 %v3250, %v3292
    %3294 = vdwg.mxu0
    %3295 = vmatprep.subr.bf16.mxu0 %v2152
    %3296 = vmatpush1.bf16.msra.mxu0 %v2151
    %3297 = vmatprep.subr.bf16.mxu0 %v2142
    %3298 = vmatpush1.bf16.msra.mxu0 %v2141
    %3299 = vmatprep.subr.bf16.mxu0 %v2132
    %3300 = vmatpush1.bf16.msra.mxu0 %v2131
    %3301 = vmatprep.subr.bf16.mxu0 %v2122
    %3302 = vmatpush1.bf16.msra.mxu0 %v2121
    %3303 = vmatprep.subr.bf16.mxu0 %v2112
    %3304 = vmatpush1.bf16.msra.mxu0 %v2111
    %3305 = vmatprep.subr.bf16.mxu0 %v2102
    %3306 = vmatpush1.bf16.msra.mxu0 %v2101
    %3307 = vmatprep.subr.bf16.mxu0 %v2092
    %3308 = vmatpush1.bf16.msra.mxu0 %v2091
    %3309 = vmatprep.subr.bf16.mxu0 %v2082
    %3310 = vmatpush1.bf16.msra.mxu0 %v2081
    %3311 = vmatprep.subr.bf16.mxu0 %v2232
    %3312 = vmatpush2.bf16.msra.mxu0 %v2231
    %3313 = vmatprep.subr.bf16.mxu0 %v2222
    %3314 = vmatpush2.bf16.msra.mxu0 %v2221
    %3315 = vmatprep.subr.bf16.mxu0 %v2212
    %3316 = vmatpush2.bf16.msra.mxu0 %v2211
    %3317 = vmatprep.subr.bf16.mxu0 %v2202
    %3318 = vmatpush2.bf16.msra.mxu0 %v2201
    %3319 = vmatprep.subr.bf16.mxu0 %v2192
    %3320 = vmatpush2.bf16.msra.mxu0 %v2191
    %3321 = vmatprep.subr.bf16.mxu0 %v2182
    %3322 = vmatpush2.bf16.msra.mxu0 %v2181
    %3323 = vmatprep.subr.bf16.mxu0 %v2172
    %3324 = vmatpush2.bf16.msra.mxu0 %v2171
    %3325 = vmatprep.subr.bf16.mxu0 %v2162
    %3326 = vmatpush2.bf16.msra.mxu0 %v2161
    %3327 = vmatprep.mubr.bf16.mxu0 %v626
    %3328 = vmatmul.mubr.bf16.gmra.mxu0 %v625
    %v3329 = vpop.f32.mrf.mxu0
    %v3330 = vadd.f32 0.0, %v3329
    %v3331 = vpop.f32.mrf.mxu0
    %v3332 = vadd.f32 0.0, %v3331
    %v3333 = vpop.f32.mrf.mxu0
    %v3334 = vadd.f32 0.0, %v3333
    %v3335 = vpop.f32.mrf.mxu0
    %v3336 = vadd.f32 0.0, %v3335
    %3337 = vdwg.mxu0
    %3338 = vmatprep.subr.bf16.mxu0 %v2312
    %3339 = vmatpush1.bf16.msra.mxu0 %v2311
    %3340 = vmatprep.subr.bf16.mxu0 %v2302
    %3341 = vmatpush1.bf16.msra.mxu0 %v2301
    %3342 = vmatprep.subr.bf16.mxu0 %v2292
    %3343 = vmatpush1.bf16.msra.mxu0 %v2291
    %3344 = vmatprep.subr.bf16.mxu0 %v2282
    %3345 = vmatpush1.bf16.msra.mxu0 %v2281
    %3346 = vmatprep.subr.bf16.mxu0 %v2272
    %3347 = vmatpush1.bf16.msra.mxu0 %v2271
    %3348 = vmatprep.subr.bf16.mxu0 %v2262
    %3349 = vmatpush1.bf16.msra.mxu0 %v2261
    %3350 = vmatprep.subr.bf16.mxu0 %v2252
    %3351 = vmatpush1.bf16.msra.mxu0 %v2251
    %3352 = vmatprep.subr.bf16.mxu0 %v2242
    %3353 = vmatpush1.bf16.msra.mxu0 %v2241
    %3354 = vmatprep.subr.bf16.mxu0 %v2392
    %3355 = vmatpush2.bf16.msra.mxu0 %v2391
    %3356 = vmatprep.subr.bf16.mxu0 %v2382
    %3357 = vmatpush2.bf16.msra.mxu0 %v2381
    %3358 = vmatprep.subr.bf16.mxu0 %v2372
    %3359 = vmatpush2.bf16.msra.mxu0 %v2371
    %3360 = vmatprep.subr.bf16.mxu0 %v2362
    %3361 = vmatpush2.bf16.msra.mxu0 %v2361
    %3362 = vmatprep.subr.bf16.mxu0 %v2352
    %3363 = vmatpush2.bf16.msra.mxu0 %v2351
    %3364 = vmatprep.subr.bf16.mxu0 %v2342
    %3365 = vmatpush2.bf16.msra.mxu0 %v2341
    %3366 = vmatprep.subr.bf16.mxu0 %v2332
    %3367 = vmatpush2.bf16.msra.mxu0 %v2331
    %3368 = vmatprep.subr.bf16.mxu0 %v2322
    %3369 = vmatpush2.bf16.msra.mxu0 %v2321
    %3370 = vmatprep.mubr.bf16.mxu0 %v628
    %3371 = vmatmul.mubr.bf16.gmra.mxu0 %v627
    %v3372 = vpop.f32.mrf.mxu0
    %v3373 = vadd.f32 %v3330, %v3372
    %v3374 = vpop.f32.mrf.mxu0
    %v3375 = vadd.f32 %v3332, %v3374
    %v3376 = vpop.f32.mrf.mxu0
    %v3377 = vadd.f32 %v3334, %v3376
    %v3378 = vpop.f32.mrf.mxu0
    %v3379 = vadd.f32 %v3336, %v3378
    %3380 = vdwg.mxu0
    %3381 = vmatprep.subr.bf16.mxu0 %v2472
    %3382 = vmatpush1.bf16.msra.mxu0 %v2471
    %3383 = vmatprep.subr.bf16.mxu0 %v2462
    %3384 = vmatpush1.bf16.msra.mxu0 %v2461
    %3385 = vmatprep.subr.bf16.mxu0 %v2452
    %3386 = vmatpush1.bf16.msra.mxu0 %v2451
    %3387 = vmatprep.subr.bf16.mxu0 %v2442
    %3388 = vmatpush1.bf16.msra.mxu0 %v2441
    %3389 = vmatprep.subr.bf16.mxu0 %v2432
    %3390 = vmatpush1.bf16.msra.mxu0 %v2431
    %3391 = vmatprep.subr.bf16.mxu0 %v2422
    %3392 = vmatpush1.bf16.msra.mxu0 %v2421
    %3393 = vmatprep.subr.bf16.mxu0 %v2412
    %3394 = vmatpush1.bf16.msra.mxu0 %v2411
    %3395 = vmatprep.subr.bf16.mxu0 %v2402
    %3396 = vmatpush1.bf16.msra.mxu0 %v2401
    %3397 = vmatprep.subr.bf16.mxu0 %v2552
    %3398 = vmatpush2.bf16.msra.mxu0 %v2551
    %3399 = vmatprep.subr.bf16.mxu0 %v2542
    %3400 = vmatpush2.bf16.msra.mxu0 %v2541
    %3401 = vmatprep.subr.bf16.mxu0 %v2532
    %3402 = vmatpush2.bf16.msra.mxu0 %v2531
    %3403 = vmatprep.subr.bf16.mxu0 %v2522
    %3404 = vmatpush2.bf16.msra.mxu0 %v2521
    %3405 = vmatprep.subr.bf16.mxu0 %v2512
    %3406 = vmatpush2.bf16.msra.mxu0 %v2511
    %3407 = vmatprep.subr.bf16.mxu0 %v2502
    %3408 = vmatpush2.bf16.msra.mxu0 %v2501
    %3409 = vmatprep.subr.bf16.mxu0 %v2492
    %3410 = vmatpush2.bf16.msra.mxu0 %v2491
    %3411 = vmatprep.subr.bf16.mxu0 %v2482
    %3412 = vmatpush2.bf16.msra.mxu0 %v2481
    %3413 = vmatprep.mubr.bf16.mxu0 %v630
    %3414 = vmatmul.mubr.bf16.gmra.mxu0 %v629
    %v3415 = vpop.f32.mrf.mxu0
    %v3416 = vadd.f32 %v3373, %v3415
    %v3417 = vpop.f32.mrf.mxu0
    %v3418 = vadd.f32 %v3375, %v3417
    %v3419 = vpop.f32.mrf.mxu0
    %v3420 = vadd.f32 %v3377, %v3419
    %v3421 = vpop.f32.mrf.mxu0
    %v3422 = vadd.f32 %v3379, %v3421
    %3423 = vdwg.mxu0
    %3424 = vmatprep.subr.bf16.mxu0 %v2154
    %3425 = vmatpush1.bf16.msra.mxu0 %v2153
    %3426 = vmatprep.subr.bf16.mxu0 %v2144
    %3427 = vmatpush1.bf16.msra.mxu0 %v2143
    %3428 = vmatprep.subr.bf16.mxu0 %v2134
    %3429 = vmatpush1.bf16.msra.mxu0 %v2133
    %3430 = vmatprep.subr.bf16.mxu0 %v2124
    %3431 = vmatpush1.bf16.msra.mxu0 %v2123
    %3432 = vmatprep.subr.bf16.mxu0 %v2114
    %3433 = vmatpush1.bf16.msra.mxu0 %v2113
    %3434 = vmatprep.subr.bf16.mxu0 %v2104
    %3435 = vmatpush1.bf16.msra.mxu0 %v2103
    %3436 = vmatprep.subr.bf16.mxu0 %v2094
    %3437 = vmatpush1.bf16.msra.mxu0 %v2093
    %3438 = vmatprep.subr.bf16.mxu0 %v2084
    %3439 = vmatpush1.bf16.msra.mxu0 %v2083
    %3440 = vmatprep.subr.bf16.mxu0 %v2234
    %3441 = vmatpush2.bf16.msra.mxu0 %v2233
    %3442 = vmatprep.subr.bf16.mxu0 %v2224
    %3443 = vmatpush2.bf16.msra.mxu0 %v2223
    %3444 = vmatprep.subr.bf16.mxu0 %v2214
    %3445 = vmatpush2.bf16.msra.mxu0 %v2213
    %3446 = vmatprep.subr.bf16.mxu0 %v2204
    %3447 = vmatpush2.bf16.msra.mxu0 %v2203
    %3448 = vmatprep.subr.bf16.mxu0 %v2194
    %3449 = vmatpush2.bf16.msra.mxu0 %v2193
    %3450 = vmatprep.subr.bf16.mxu0 %v2184
    %3451 = vmatpush2.bf16.msra.mxu0 %v2183
    %3452 = vmatprep.subr.bf16.mxu0 %v2174
    %3453 = vmatpush2.bf16.msra.mxu0 %v2173
    %3454 = vmatprep.subr.bf16.mxu0 %v2164
    %3455 = vmatpush2.bf16.msra.mxu0 %v2163
    %3456 = vmatprep.mubr.bf16.mxu0 %v626
    %3457 = vmatmul.mubr.bf16.gmra.mxu0 %v625
    %v3458 = vpop.f32.mrf.mxu0
    %v3459 = vadd.f32 0.0, %v3458
    %v3460 = vpop.f32.mrf.mxu0
    %v3461 = vadd.f32 0.0, %v3460
    %v3462 = vpop.f32.mrf.mxu0
    %v3463 = vadd.f32 0.0, %v3462
    %v3464 = vpop.f32.mrf.mxu0
    %v3465 = vadd.f32 0.0, %v3464
    %3466 = vdwg.mxu0
    %3467 = vmatprep.subr.bf16.mxu0 %v2314
    %3468 = vmatpush1.bf16.msra.mxu0 %v2313
    %3469 = vmatprep.subr.bf16.mxu0 %v2304
    %3470 = vmatpush1.bf16.msra.mxu0 %v2303
    %3471 = vmatprep.subr.bf16.mxu0 %v2294
    %3472 = vmatpush1.bf16.msra.mxu0 %v2293
    %3473 = vmatprep.subr.bf16.mxu0 %v2284
    %3474 = vmatpush1.bf16.msra.mxu0 %v2283
    %3475 = vmatprep.subr.bf16.mxu0 %v2274
    %3476 = vmatpush1.bf16.msra.mxu0 %v2273
    %3477 = vmatprep.subr.bf16.mxu0 %v2264
    %3478 = vmatpush1.bf16.msra.mxu0 %v2263
    %3479 = vmatprep.subr.bf16.mxu0 %v2254
    %3480 = vmatpush1.bf16.msra.mxu0 %v2253
    %3481 = vmatprep.subr.bf16.mxu0 %v2244
    %3482 = vmatpush1.bf16.msra.mxu0 %v2243
    %3483 = vmatprep.subr.bf16.mxu0 %v2394
    %3484 = vmatpush2.bf16.msra.mxu0 %v2393
    %3485 = vmatprep.subr.bf16.mxu0 %v2384
    %3486 = vmatpush2.bf16.msra.mxu0 %v2383
    %3487 = vmatprep.subr.bf16.mxu0 %v2374
    %3488 = vmatpush2.bf16.msra.mxu0 %v2373
    %3489 = vmatprep.subr.bf16.mxu0 %v2364
    %3490 = vmatpush2.bf16.msra.mxu0 %v2363
    %3491 = vmatprep.subr.bf16.mxu0 %v2354
    %3492 = vmatpush2.bf16.msra.mxu0 %v2353
    %3493 = vmatprep.subr.bf16.mxu0 %v2344
    %3494 = vmatpush2.bf16.msra.mxu0 %v2343
    %3495 = vmatprep.subr.bf16.mxu0 %v2334
    %3496 = vmatpush2.bf16.msra.mxu0 %v2333
    %3497 = vmatprep.subr.bf16.mxu0 %v2324
    %3498 = vmatpush2.bf16.msra.mxu0 %v2323
    %3499 = vmatprep.mubr.bf16.mxu0 %v628
    %3500 = vmatmul.mubr.bf16.gmra.mxu0 %v627
    %v3501 = vpop.f32.mrf.mxu0
    %v3502 = vadd.f32 %v3459, %v3501
    %v3503 = vpop.f32.mrf.mxu0
    %v3504 = vadd.f32 %v3461, %v3503
    %v3505 = vpop.f32.mrf.mxu0
    %v3506 = vadd.f32 %v3463, %v3505
    %v3507 = vpop.f32.mrf.mxu0
    %v3508 = vadd.f32 %v3465, %v3507
    %3509 = vdwg.mxu0
    %3510 = vmatprep.subr.bf16.mxu0 %v2474
    %3511 = vmatpush1.bf16.msra.mxu0 %v2473
    %3512 = vmatprep.subr.bf16.mxu0 %v2464
    %3513 = vmatpush1.bf16.msra.mxu0 %v2463
    %3514 = vmatprep.subr.bf16.mxu0 %v2454
    %3515 = vmatpush1.bf16.msra.mxu0 %v2453
    %3516 = vmatprep.subr.bf16.mxu0 %v2444
    %3517 = vmatpush1.bf16.msra.mxu0 %v2443
    %3518 = vmatprep.subr.bf16.mxu0 %v2434
    %3519 = vmatpush1.bf16.msra.mxu0 %v2433
    %3520 = vmatprep.subr.bf16.mxu0 %v2424
    %3521 = vmatpush1.bf16.msra.mxu0 %v2423
    %3522 = vmatprep.subr.bf16.mxu0 %v2414
    %3523 = vmatpush1.bf16.msra.mxu0 %v2413
    %3524 = vmatprep.subr.bf16.mxu0 %v2404
    %3525 = vmatpush1.bf16.msra.mxu0 %v2403
    %3526 = vmatprep.subr.bf16.mxu0 %v2554
    %3527 = vmatpush2.bf16.msra.mxu0 %v2553
    %3528 = vmatprep.subr.bf16.mxu0 %v2544
    %3529 = vmatpush2.bf16.msra.mxu0 %v2543
    %3530 = vmatprep.subr.bf16.mxu0 %v2534
    %3531 = vmatpush2.bf16.msra.mxu0 %v2533
    %3532 = vmatprep.subr.bf16.mxu0 %v2524
    %3533 = vmatpush2.bf16.msra.mxu0 %v2523
    %3534 = vmatprep.subr.bf16.mxu0 %v2514
    %3535 = vmatpush2.bf16.msra.mxu0 %v2513
    %3536 = vmatprep.subr.bf16.mxu0 %v2504
    %3537 = vmatpush2.bf16.msra.mxu0 %v2503
    %3538 = vmatprep.subr.bf16.mxu0 %v2494
    %3539 = vmatpush2.bf16.msra.mxu0 %v2493
    %3540 = vmatprep.subr.bf16.mxu0 %v2484
    %3541 = vmatpush2.bf16.msra.mxu0 %v2483
    %3542 = vmatprep.mubr.bf16.mxu0 %v630
    %3543 = vmatmul.mubr.bf16.gmra.mxu0 %v629
    %v3544 = vpop.f32.mrf.mxu0
    %v3545 = vadd.f32 %v3502, %v3544
    %v3546 = vpop.f32.mrf.mxu0
    %v3547 = vadd.f32 %v3504, %v3546
    %v3548 = vpop.f32.mrf.mxu0
    %v3549 = vadd.f32 %v3506, %v3548
    %v3550 = vpop.f32.mrf.mxu0
    %v3551 = vadd.f32 %v3508, %v3550
    %3552 = vdwg.mxu0
    %3553 = vmatprep.subr.bf16.mxu0 %v2156
    %3554 = vmatpush1.bf16.msra.mxu0 %v2155
    %3555 = vmatprep.subr.bf16.mxu0 %v2146
    %3556 = vmatpush1.bf16.msra.mxu0 %v2145
    %3557 = vmatprep.subr.bf16.mxu0 %v2136
    %3558 = vmatpush1.bf16.msra.mxu0 %v2135
    %3559 = vmatprep.subr.bf16.mxu0 %v2126
    %3560 = vmatpush1.bf16.msra.mxu0 %v2125
    %3561 = vmatprep.subr.bf16.mxu0 %v2116
    %3562 = vmatpush1.bf16.msra.mxu0 %v2115
    %3563 = vmatprep.subr.bf16.mxu0 %v2106
    %3564 = vmatpush1.bf16.msra.mxu0 %v2105
    %3565 = vmatprep.subr.bf16.mxu0 %v2096
    %3566 = vmatpush1.bf16.msra.mxu0 %v2095
    %3567 = vmatprep.subr.bf16.mxu0 %v2086
    %3568 = vmatpush1.bf16.msra.mxu0 %v2085
    %3569 = vmatprep.subr.bf16.mxu0 %v2236
    %3570 = vmatpush2.bf16.msra.mxu0 %v2235
    %3571 = vmatprep.subr.bf16.mxu0 %v2226
    %3572 = vmatpush2.bf16.msra.mxu0 %v2225
    %3573 = vmatprep.subr.bf16.mxu0 %v2216
    %3574 = vmatpush2.bf16.msra.mxu0 %v2215
    %3575 = vmatprep.subr.bf16.mxu0 %v2206
    %3576 = vmatpush2.bf16.msra.mxu0 %v2205
    %3577 = vmatprep.subr.bf16.mxu0 %v2196
    %3578 = vmatpush2.bf16.msra.mxu0 %v2195
    %3579 = vmatprep.subr.bf16.mxu0 %v2186
    %3580 = vmatpush2.bf16.msra.mxu0 %v2185
    %3581 = vmatprep.subr.bf16.mxu0 %v2176
    %3582 = vmatpush2.bf16.msra.mxu0 %v2175
    %3583 = vmatprep.subr.bf16.mxu0 %v2166
    %3584 = vmatpush2.bf16.msra.mxu0 %v2165
    %3585 = vmatprep.mubr.bf16.mxu0 %v626
    %3586 = vmatmul.mubr.bf16.gmra.mxu0 %v625
    %v3587 = vpop.f32.mrf.mxu0
    %v3588 = vadd.f32 0.0, %v3587
    %v3589 = vpop.f32.mrf.mxu0
    %v3590 = vadd.f32 0.0, %v3589
    %v3591 = vpop.f32.mrf.mxu0
    %v3592 = vadd.f32 0.0, %v3591
    %v3593 = vpop.f32.mrf.mxu0
    %v3594 = vadd.f32 0.0, %v3593
    %3595 = vdwg.mxu0
    %3596 = vmatprep.subr.bf16.mxu0 %v2316
    %3597 = vmatpush1.bf16.msra.mxu0 %v2315
    %3598 = vmatprep.subr.bf16.mxu0 %v2306
    %3599 = vmatpush1.bf16.msra.mxu0 %v2305
    %3600 = vmatprep.subr.bf16.mxu0 %v2296
    %3601 = vmatpush1.bf16.msra.mxu0 %v2295
    %3602 = vmatprep.subr.bf16.mxu0 %v2286
    %3603 = vmatpush1.bf16.msra.mxu0 %v2285
    %3604 = vmatprep.subr.bf16.mxu0 %v2276
    %3605 = vmatpush1.bf16.msra.mxu0 %v2275
    %3606 = vmatprep.subr.bf16.mxu0 %v2266
    %3607 = vmatpush1.bf16.msra.mxu0 %v2265
    %3608 = vmatprep.subr.bf16.mxu0 %v2256
    %3609 = vmatpush1.bf16.msra.mxu0 %v2255
    %3610 = vmatprep.subr.bf16.mxu0 %v2246
    %3611 = vmatpush1.bf16.msra.mxu0 %v2245
    %3612 = vmatprep.subr.bf16.mxu0 %v2396
    %3613 = vmatpush2.bf16.msra.mxu0 %v2395
    %3614 = vmatprep.subr.bf16.mxu0 %v2386
    %3615 = vmatpush2.bf16.msra.mxu0 %v2385
    %3616 = vmatprep.subr.bf16.mxu0 %v2376
    %3617 = vmatpush2.bf16.msra.mxu0 %v2375
    %3618 = vmatprep.subr.bf16.mxu0 %v2366
    %3619 = vmatpush2.bf16.msra.mxu0 %v2365
    %3620 = vmatprep.subr.bf16.mxu0 %v2356
    %3621 = vmatpush2.bf16.msra.mxu0 %v2355
    %3622 = vmatprep.subr.bf16.mxu0 %v2346
    %3623 = vmatpush2.bf16.msra.mxu0 %v2345
    %3624 = vmatprep.subr.bf16.mxu0 %v2336
    %3625 = vmatpush2.bf16.msra.mxu0 %v2335
    %3626 = vmatprep.subr.bf16.mxu0 %v2326
    %3627 = vmatpush2.bf16.msra.mxu0 %v2325
    %3628 = vmatprep.mubr.bf16.mxu0 %v628
    %3629 = vmatmul.mubr.bf16.gmra.mxu0 %v627
    %v3630 = vpop.f32.mrf.mxu0
    %v3631 = vadd.f32 %v3588, %v3630
    %v3632 = vpop.f32.mrf.mxu0
    %v3633 = vadd.f32 %v3590, %v3632
    %v3634 = vpop.f32.mrf.mxu0
    %v3635 = vadd.f32 %v3592, %v3634
    %v3636 = vpop.f32.mrf.mxu0
    %v3637 = vadd.f32 %v3594, %v3636
    %3638 = vdwg.mxu0
    %3639 = vmatprep.subr.bf16.mxu0 %v2476
    %3640 = vmatpush1.bf16.msra.mxu0 %v2475
    %3641 = vmatprep.subr.bf16.mxu0 %v2466
    %3642 = vmatpush1.bf16.msra.mxu0 %v2465
    %3643 = vmatprep.subr.bf16.mxu0 %v2456
    %3644 = vmatpush1.bf16.msra.mxu0 %v2455
    %3645 = vmatprep.subr.bf16.mxu0 %v2446
    %3646 = vmatpush1.bf16.msra.mxu0 %v2445
    %3647 = vmatprep.subr.bf16.mxu0 %v2436
    %3648 = vmatpush1.bf16.msra.mxu0 %v2435
    %3649 = vmatprep.subr.bf16.mxu0 %v2426
    %3650 = vmatpush1.bf16.msra.mxu0 %v2425
    %3651 = vmatprep.subr.bf16.mxu0 %v2416
    %3652 = vmatpush1.bf16.msra.mxu0 %v2415
    %3653 = vmatprep.subr.bf16.mxu0 %v2406
    %3654 = vmatpush1.bf16.msra.mxu0 %v2405
    %3655 = vmatprep.subr.bf16.mxu0 %v2556
    %3656 = vmatpush2.bf16.msra.mxu0 %v2555
    %3657 = vmatprep.subr.bf16.mxu0 %v2546
    %3658 = vmatpush2.bf16.msra.mxu0 %v2545
    %3659 = vmatprep.subr.bf16.mxu0 %v2536
    %3660 = vmatpush2.bf16.msra.mxu0 %v2535
    %3661 = vmatprep.subr.bf16.mxu0 %v2526
    %3662 = vmatpush2.bf16.msra.mxu0 %v2525
    %3663 = vmatprep.subr.bf16.mxu0 %v2516
    %3664 = vmatpush2.bf16.msra.mxu0 %v2515
    %3665 = vmatprep.subr.bf16.mxu0 %v2506
    %3666 = vmatpush2.bf16.msra.mxu0 %v2505
    %3667 = vmatprep.subr.bf16.mxu0 %v2496
    %3668 = vmatpush2.bf16.msra.mxu0 %v2495
    %3669 = vmatprep.subr.bf16.mxu0 %v2486
    %3670 = vmatpush2.bf16.msra.mxu0 %v2485
    %3671 = vmatprep.mubr.bf16.mxu0 %v630
    %3672 = vmatmul.mubr.bf16.gmra.mxu0 %v629
    %v3673 = vpop.f32.mrf.mxu0
    %v3674 = vadd.f32 %v3631, %v3673
    %v3675 = vpop.f32.mrf.mxu0
    %v3676 = vadd.f32 %v3633, %v3675
    %v3677 = vpop.f32.mrf.mxu0
    %v3678 = vadd.f32 %v3635, %v3677
    %v3679 = vpop.f32.mrf.mxu0
    %v3680 = vadd.f32 %v3637, %v3679
    %3681 = vdwg.mxu0
    %v3682 = vpack.c.bf16 %v3162, %v3158
    %v3683 = vpack.c.bf16 %v3164, %v3160
    %v3684 = vpack.c.bf16 %v3291, %v3287
    %v3685 = vpack.c.bf16 %v3293, %v3289
    %v3686 = vpack.c.bf16 %v3420, %v3416
    %v3687 = vpack.c.bf16 %v3422, %v3418
    %v3688 = vpack.c.bf16 %v3549, %v3545
    %v3689 = vpack.c.bf16 %v3551, %v3547
    %v3690 = vpack.c.bf16 %v3678, %v3674
    %v3691 = vpack.c.bf16 %v3680, %v3676
    %v3692 = vld [vmem:[#allocation8] sm:$0xff]
    %v3693 = vld [vmem:[#allocation8 + $0x8] sm:$0xff]
    %v3694 = vld [vmem:[#allocation8 + $0x10] sm:$0xff]
    %v3695 = vld [vmem:[#allocation8 + $0x18] sm:$0xff]
    %v3696 = vld [vmem:[#allocation8 + $0x20] sm:$0xff]
    %v3697 = vld [vmem:[#allocation8 + $0x28] sm:$0xff]
    %v3698 = vld [vmem:[#allocation8 + $0x30] sm:$0xff]
    %v3699 = vld [vmem:[#allocation8 + $0x38] sm:$0xff]
    %v3700 = vld [vmem:[#allocation8 + $0x40] sm:$0xff]
    %v3701 = vld [vmem:[#allocation8 + $0x48] sm:$0xff]
    %v3702 = vld [vmem:[#allocation8 + $0x50] sm:$0xff]
    %v3703 = vld [vmem:[#allocation8 + $0x58] sm:$0xff]
    %v3704 = vld [vmem:[#allocation8 + $0x60] sm:$0xff]
    %v3705 = vld [vmem:[#allocation8 + $0x68] sm:$0xff]
    %v3706 = vld [vmem:[#allocation8 + $0x70] sm:$0xff]
    %v3707 = vld [vmem:[#allocation8 + $0x78] sm:$0xff]
    %v3708 = vld [vmem:[#allocation8 + $0x80] sm:$0xff]
    %v3709 = vld [vmem:[#allocation8 + $0x88] sm:$0xff]
    %v3710 = vld [vmem:[#allocation8 + $0x90] sm:$0xff]
    %v3711 = vld [vmem:[#allocation8 + $0x98] sm:$0xff]
    %v3712 = vld [vmem:[#allocation8 + $0xa0] sm:$0xff]
    %v3713 = vld [vmem:[#allocation8 + $0xa8] sm:$0xff]
    %v3714 = vld [vmem:[#allocation8 + $0xb0] sm:$0xff]
    %v3715 = vld [vmem:[#allocation8 + $0xb8] sm:$0xff]
    %v3716 = vld [vmem:[#allocation8 + $0xc0] sm:$0xff]
    %v3717 = vld [vmem:[#allocation8 + $0xc8] sm:$0xff]
    %v3718 = vld [vmem:[#allocation8 + $0xd0] sm:$0xff]
    %v3719 = vld [vmem:[#allocation8 + $0xd8] sm:$0xff]
    %v3720 = vld [vmem:[#allocation8 + $0xe0] sm:$0xff]
    %v3721 = vld [vmem:[#allocation8 + $0xe8] sm:$0xff]
    %v3722 = vld [vmem:[#allocation8 + $0xf0] sm:$0xff]
    %v3723 = vld [vmem:[#allocation8 + $0xf8] sm:$0xff]
    %v3724 = vld [vmem:[#allocation8 + $0x100] sm:$0xff]
    %v3725 = vld [vmem:[#allocation8 + $0x108] sm:$0xff]
    %v3726 = vld [vmem:[#allocation8 + $0x110] sm:$0xff]
    %v3727 = vld [vmem:[#allocation8 + $0x118] sm:$0xff]
    %v3728 = vld [vmem:[#allocation8 + $0x120] sm:$0xff]
    %v3729 = vld [vmem:[#allocation8 + $0x128] sm:$0xff]
    %v3730 = vld [vmem:[#allocation8 + $0x130] sm:$0xff]
    %v3731 = vld [vmem:[#allocation8 + $0x138] sm:$0xff]
    %v3732 = vld [vmem:[#allocation8 + $0x140] sm:$0xff]
    %v3733 = vld [vmem:[#allocation8 + $0x148] sm:$0xff]
    %v3734 = vld [vmem:[#allocation8 + $0x150] sm:$0xff]
    %v3735 = vld [vmem:[#allocation8 + $0x158] sm:$0xff]
    %v3736 = vld [vmem:[#allocation8 + $0x160] sm:$0xff]
    %v3737 = vld [vmem:[#allocation8 + $0x168] sm:$0xff]
    %v3738 = vld [vmem:[#allocation8 + $0x170] sm:$0xff]
    %v3739 = vld [vmem:[#allocation8 + $0x178] sm:$0xff]
    %v3740 = vld [vmem:[#allocation8 + $0x180] sm:$0xff]
    %v3741 = vld [vmem:[#allocation8 + $0x188] sm:$0xff]
    %v3742 = vld [vmem:[#allocation8 + $0x190] sm:$0xff]
    %v3743 = vld [vmem:[#allocation8 + $0x198] sm:$0xff]
    %v3744 = vld [vmem:[#allocation8 + $0x1a0] sm:$0xff]
    %v3745 = vld [vmem:[#allocation8 + $0x1a8] sm:$0xff]
    %v3746 = vld [vmem:[#allocation8 + $0x1b0] sm:$0xff]
    %v3747 = vld [vmem:[#allocation8 + $0x1b8] sm:$0xff]
    %v3748 = vld [vmem:[#allocation8 + $0x1c0] sm:$0xff]
    %v3749 = vld [vmem:[#allocation8 + $0x1c8] sm:$0xff]
    %v3750 = vld [vmem:[#allocation8 + $0x1d0] sm:$0xff]
    %v3751 = vld [vmem:[#allocation8 + $0x1d8] sm:$0xff]
    %v3752 = vld [vmem:[#allocation8 + $0x1e0] sm:$0xff]
    %v3753 = vld [vmem:[#allocation8 + $0x1e8] sm:$0xff]
    %v3754 = vld [vmem:[#allocation8 + $0x1f0] sm:$0xff]
    %v3755 = vld [vmem:[#allocation8 + $0x1f8] sm:$0xff]
    %v3756 = vld [vmem:[#allocation8 + $0x200] sm:$0xff]
    %v3757 = vld [vmem:[#allocation8 + $0x208] sm:$0xff]
    %v3758 = vld [vmem:[#allocation8 + $0x210] sm:$0xff]
    %v3759 = vld [vmem:[#allocation8 + $0x218] sm:$0xff]
    %v3760 = vld [vmem:[#allocation8 + $0x220] sm:$0xff]
    %v3761 = vld [vmem:[#allocation8 + $0x228] sm:$0xff]
    %v3762 = vld [vmem:[#allocation8 + $0x230] sm:$0xff]
    %v3763 = vld [vmem:[#allocation8 + $0x238] sm:$0xff]
    %v3764 = vld [vmem:[#allocation8 + $0x240] sm:$0xff]
    %v3765 = vld [vmem:[#allocation8 + $0x248] sm:$0xff]
    %v3766 = vld [vmem:[#allocation8 + $0x250] sm:$0xff]
    %v3767 = vld [vmem:[#allocation8 + $0x258] sm:$0xff]
    %v3768 = vld [vmem:[#allocation8 + $0x260] sm:$0xff]
    %v3769 = vld [vmem:[#allocation8 + $0x268] sm:$0xff]
    %v3770 = vld [vmem:[#allocation8 + $0x270] sm:$0xff]
    %v3771 = vld [vmem:[#allocation8 + $0x278] sm:$0xff]
    %v3772 = vld [vmem:[#allocation8 + $0x280] sm:$0xff]
    %v3773 = vld [vmem:[#allocation8 + $0x288] sm:$0xff]
    %v3774 = vld [vmem:[#allocation8 + $0x290] sm:$0xff]
    %v3775 = vld [vmem:[#allocation8 + $0x298] sm:$0xff]
    %v3776 = vld [vmem:[#allocation8 + $0x2a0] sm:$0xff]
    %v3777 = vld [vmem:[#allocation8 + $0x2a8] sm:$0xff]
    %v3778 = vld [vmem:[#allocation8 + $0x2b0] sm:$0xff]
    %v3779 = vld [vmem:[#allocation8 + $0x2b8] sm:$0xff]
    %v3780 = vld [vmem:[#allocation8 + $0x2c0] sm:$0xff]
    %v3781 = vld [vmem:[#allocation8 + $0x2c8] sm:$0xff]
    %v3782 = vld [vmem:[#allocation8 + $0x2d0] sm:$0xff]
    %v3783 = vld [vmem:[#allocation8 + $0x2d8] sm:$0xff]
    %v3784 = vld [vmem:[#allocation8 + $0x2e0] sm:$0xff]
    %v3785 = vld [vmem:[#allocation8 + $0x2e8] sm:$0xff]
    %v3786 = vld [vmem:[#allocation8 + $0x2f0] sm:$0xff]
    %v3787 = vld [vmem:[#allocation8 + $0x2f8] sm:$0xff]
    %v3788 = vld [vmem:[#allocation8 + $0x300] sm:$0xff]
    %v3789 = vld [vmem:[#allocation8 + $0x308] sm:$0xff]
    %v3790 = vld [vmem:[#allocation8 + $0x310] sm:$0xff]
    %v3791 = vld [vmem:[#allocation8 + $0x318] sm:$0xff]
    %v3792 = vld [vmem:[#allocation8 + $0x320] sm:$0xff]
    %v3793 = vld [vmem:[#allocation8 + $0x328] sm:$0xff]
    %v3794 = vld [vmem:[#allocation8 + $0x330] sm:$0xff]
    %v3795 = vld [vmem:[#allocation8 + $0x338] sm:$0xff]
    %v3796 = vld [vmem:[#allocation8 + $0x340] sm:$0xff]
    %v3797 = vld [vmem:[#allocation8 + $0x348] sm:$0xff]
    %v3798 = vld [vmem:[#allocation8 + $0x350] sm:$0xff]
    %v3799 = vld [vmem:[#allocation8 + $0x358] sm:$0xff]
    %v3800 = vld [vmem:[#allocation8 + $0x360] sm:$0xff]
    %v3801 = vld [vmem:[#allocation8 + $0x368] sm:$0xff]
    %v3802 = vld [vmem:[#allocation8 + $0x370] sm:$0xff]
    %v3803 = vld [vmem:[#allocation8 + $0x378] sm:$0xff]
    %v3804 = vld [vmem:[#allocation8 + $0x380] sm:$0xff]
    %v3805 = vld [vmem:[#allocation8 + $0x388] sm:$0xff]
    %v3806 = vld [vmem:[#allocation8 + $0x390] sm:$0xff]
    %v3807 = vld [vmem:[#allocation8 + $0x398] sm:$0xff]
    %v3808 = vld [vmem:[#allocation8 + $0x3a0] sm:$0xff]
    %v3809 = vld [vmem:[#allocation8 + $0x3a8] sm:$0xff]
    %v3810 = vld [vmem:[#allocation8 + $0x3b0] sm:$0xff]
    %v3811 = vld [vmem:[#allocation8 + $0x3b8] sm:$0xff]
    %v3812 = vld [vmem:[#allocation8 + $0x3c0] sm:$0xff]
    %v3813 = vld [vmem:[#allocation8 + $0x3c8] sm:$0xff]
    %v3814 = vld [vmem:[#allocation8 + $0x3d0] sm:$0xff]
    %v3815 = vld [vmem:[#allocation8 + $0x3d8] sm:$0xff]
    %v3816 = vld [vmem:[#allocation8 + $0x3e0] sm:$0xff]
    %v3817 = vld [vmem:[#allocation8 + $0x3e8] sm:$0xff]
    %v3818 = vld [vmem:[#allocation8 + $0x3f0] sm:$0xff]
    %v3819 = vld [vmem:[#allocation8 + $0x3f8] sm:$0xff]
    %v3820 = vld [vmem:[#allocation8 + $0x400] sm:$0xff]
    %v3821 = vld [vmem:[#allocation8 + $0x408] sm:$0xff]
    %v3822 = vld [vmem:[#allocation8 + $0x410] sm:$0xff]
    %v3823 = vld [vmem:[#allocation8 + $0x418] sm:$0xff]
    %v3824 = vld [vmem:[#allocation8 + $0x420] sm:$0xff]
    %v3825 = vld [vmem:[#allocation8 + $0x428] sm:$0xff]
    %v3826 = vld [vmem:[#allocation8 + $0x430] sm:$0xff]
    %v3827 = vld [vmem:[#allocation8 + $0x438] sm:$0xff]
    %v3828 = vld [vmem:[#allocation8 + $0x440] sm:$0xff]
    %v3829 = vld [vmem:[#allocation8 + $0x448] sm:$0xff]
    %v3830 = vld [vmem:[#allocation8 + $0x450] sm:$0xff]
    %v3831 = vld [vmem:[#allocation8 + $0x458] sm:$0xff]
    %v3832 = vld [vmem:[#allocation8 + $0x460] sm:$0xff]
    %v3833 = vld [vmem:[#allocation8 + $0x468] sm:$0xff]
    %v3834 = vld [vmem:[#allocation8 + $0x470] sm:$0xff]
    %v3835 = vld [vmem:[#allocation8 + $0x478] sm:$0xff]
    %v3836 = vld [vmem:[#allocation8 + $0x480] sm:$0xff]
    %v3837 = vld [vmem:[#allocation8 + $0x488] sm:$0xff]
    %v3838 = vld [vmem:[#allocation8 + $0x490] sm:$0xff]
    %v3839 = vld [vmem:[#allocation8 + $0x498] sm:$0xff]
    %v3840 = vld [vmem:[#allocation8 + $0x4a0] sm:$0xff]
    %v3841 = vld [vmem:[#allocation8 + $0x4a8] sm:$0xff]
    %v3842 = vld [vmem:[#allocation8 + $0x4b0] sm:$0xff]
    %v3843 = vld [vmem:[#allocation8 + $0x4b8] sm:$0xff]
    %v3844 = vld [vmem:[#allocation8 + $0x4c0] sm:$0xff]
    %v3845 = vld [vmem:[#allocation8 + $0x4c8] sm:$0xff]
    %v3846 = vld [vmem:[#allocation8 + $0x4d0] sm:$0xff]
    %v3847 = vld [vmem:[#allocation8 + $0x4d8] sm:$0xff]
    %v3848 = vld [vmem:[#allocation8 + $0x4e0] sm:$0xff]
    %v3849 = vld [vmem:[#allocation8 + $0x4e8] sm:$0xff]
    %v3850 = vld [vmem:[#allocation8 + $0x4f0] sm:$0xff]
    %v3851 = vld [vmem:[#allocation8 + $0x4f8] sm:$0xff]
    %v3852 = vld [vmem:[#allocation8 + $0x500] sm:$0xff]
    %v3853 = vld [vmem:[#allocation8 + $0x508] sm:$0xff]
    %v3854 = vld [vmem:[#allocation8 + $0x510] sm:$0xff]
    %v3855 = vld [vmem:[#allocation8 + $0x518] sm:$0xff]
    %v3856 = vld [vmem:[#allocation8 + $0x520] sm:$0xff]
    %v3857 = vld [vmem:[#allocation8 + $0x528] sm:$0xff]
    %v3858 = vld [vmem:[#allocation8 + $0x530] sm:$0xff]
    %v3859 = vld [vmem:[#allocation8 + $0x538] sm:$0xff]
    %v3860 = vld [vmem:[#allocation8 + $0x540] sm:$0xff]
    %v3861 = vld [vmem:[#allocation8 + $0x548] sm:$0xff]
    %v3862 = vld [vmem:[#allocation8 + $0x550] sm:$0xff]
    %v3863 = vld [vmem:[#allocation8 + $0x558] sm:$0xff]
    %v3864 = vld [vmem:[#allocation8 + $0x560] sm:$0xff]
    %v3865 = vld [vmem:[#allocation8 + $0x568] sm:$0xff]
    %v3866 = vld [vmem:[#allocation8 + $0x570] sm:$0xff]
    %v3867 = vld [vmem:[#allocation8 + $0x578] sm:$0xff]
    %v3868 = vld [vmem:[#allocation8 + $0x580] sm:$0xff]
    %v3869 = vld [vmem:[#allocation8 + $0x588] sm:$0xff]
    %v3870 = vld [vmem:[#allocation8 + $0x590] sm:$0xff]
    %v3871 = vld [vmem:[#allocation8 + $0x598] sm:$0xff]
    %v3872 = vld [vmem:[#allocation8 + $0x5a0] sm:$0xff]
    %v3873 = vld [vmem:[#allocation8 + $0x5a8] sm:$0xff]
    %v3874 = vld [vmem:[#allocation8 + $0x5b0] sm:$0xff]
    %v3875 = vld [vmem:[#allocation8 + $0x5b8] sm:$0xff]
    %v3876 = vld [vmem:[#allocation8 + $0x5c0] sm:$0xff]
    %v3877 = vld [vmem:[#allocation8 + $0x5c8] sm:$0xff]
    %v3878 = vld [vmem:[#allocation8 + $0x5d0] sm:$0xff]
    %v3879 = vld [vmem:[#allocation8 + $0x5d8] sm:$0xff]
    %v3880 = vld [vmem:[#allocation8 + $0x5e0] sm:$0xff]
    %v3881 = vld [vmem:[#allocation8 + $0x5e8] sm:$0xff]
    %v3882 = vld [vmem:[#allocation8 + $0x5f0] sm:$0xff]
    %v3883 = vld [vmem:[#allocation8 + $0x5f8] sm:$0xff]
    %v3884 = vld [vmem:[#allocation8 + $0x600] sm:$0xff]
    %v3885 = vld [vmem:[#allocation8 + $0x608] sm:$0xff]
    %v3886 = vld [vmem:[#allocation8 + $0x610] sm:$0xff]
    %v3887 = vld [vmem:[#allocation8 + $0x618] sm:$0xff]
    %v3888 = vld [vmem:[#allocation8 + $0x620] sm:$0xff]
    %v3889 = vld [vmem:[#allocation8 + $0x628] sm:$0xff]
    %v3890 = vld [vmem:[#allocation8 + $0x630] sm:$0xff]
    %v3891 = vld [vmem:[#allocation8 + $0x638] sm:$0xff]
    %v3892 = vld [vmem:[#allocation8 + $0x640] sm:$0xff]
    %v3893 = vld [vmem:[#allocation8 + $0x648] sm:$0xff]
    %v3894 = vld [vmem:[#allocation8 + $0x650] sm:$0xff]
    %v3895 = vld [vmem:[#allocation8 + $0x658] sm:$0xff]
    %v3896 = vld [vmem:[#allocation8 + $0x660] sm:$0xff]
    %v3897 = vld [vmem:[#allocation8 + $0x668] sm:$0xff]
    %v3898 = vld [vmem:[#allocation8 + $0x670] sm:$0xff]
    %v3899 = vld [vmem:[#allocation8 + $0x678] sm:$0xff]
    %v3900 = vld [vmem:[#allocation8 + $0x680] sm:$0xff]
    %v3901 = vld [vmem:[#allocation8 + $0x688] sm:$0xff]
    %v3902 = vld [vmem:[#allocation8 + $0x690] sm:$0xff]
    %v3903 = vld [vmem:[#allocation8 + $0x698] sm:$0xff]
    %v3904 = vld [vmem:[#allocation8 + $0x6a0] sm:$0xff]
    %v3905 = vld [vmem:[#allocation8 + $0x6a8] sm:$0xff]
    %v3906 = vld [vmem:[#allocation8 + $0x6b0] sm:$0xff]
    %v3907 = vld [vmem:[#allocation8 + $0x6b8] sm:$0xff]
    %v3908 = vld [vmem:[#allocation8 + $0x6c0] sm:$0xff]
    %v3909 = vld [vmem:[#allocation8 + $0x6c8] sm:$0xff]
    %v3910 = vld [vmem:[#allocation8 + $0x6d0] sm:$0xff]
    %v3911 = vld [vmem:[#allocation8 + $0x6d8] sm:$0xff]
    %v3912 = vld [vmem:[#allocation8 + $0x6e0] sm:$0xff]
    %v3913 = vld [vmem:[#allocation8 + $0x6e8] sm:$0xff]
    %v3914 = vld [vmem:[#allocation8 + $0x6f0] sm:$0xff]
    %v3915 = vld [vmem:[#allocation8 + $0x6f8] sm:$0xff]
    %v3916 = vld [vmem:[#allocation8 + $0x700] sm:$0xff]
    %v3917 = vld [vmem:[#allocation8 + $0x708] sm:$0xff]
    %v3918 = vld [vmem:[#allocation8 + $0x710] sm:$0xff]
    %v3919 = vld [vmem:[#allocation8 + $0x718] sm:$0xff]
    %v3920 = vld [vmem:[#allocation8 + $0x720] sm:$0xff]
    %v3921 = vld [vmem:[#allocation8 + $0x728] sm:$0xff]
    %v3922 = vld [vmem:[#allocation8 + $0x730] sm:$0xff]
    %v3923 = vld [vmem:[#allocation8 + $0x738] sm:$0xff]
    %v3924 = vld [vmem:[#allocation8 + $0x740] sm:$0xff]
    %v3925 = vld [vmem:[#allocation8 + $0x748] sm:$0xff]
    %v3926 = vld [vmem:[#allocation8 + $0x750] sm:$0xff]
    %v3927 = vld [vmem:[#allocation8 + $0x758] sm:$0xff]
    %v3928 = vld [vmem:[#allocation8 + $0x760] sm:$0xff]
    %v3929 = vld [vmem:[#allocation8 + $0x768] sm:$0xff]
    %v3930 = vld [vmem:[#allocation8 + $0x770] sm:$0xff]
    %v3931 = vld [vmem:[#allocation8 + $0x778] sm:$0xff]
    %v3932 = vld [vmem:[#allocation8 + $0x780] sm:$0xff]
    %v3933 = vld [vmem:[#allocation8 + $0x788] sm:$0xff]
    %v3934 = vld [vmem:[#allocation8 + $0x790] sm:$0xff]
    %v3935 = vld [vmem:[#allocation8 + $0x798] sm:$0xff]
    %v3936 = vld [vmem:[#allocation8 + $0x7a0] sm:$0xff]
    %v3937 = vld [vmem:[#allocation8 + $0x7a8] sm:$0xff]
    %v3938 = vld [vmem:[#allocation8 + $0x7b0] sm:$0xff]
    %v3939 = vld [vmem:[#allocation8 + $0x7b8] sm:$0xff]
    %v3940 = vld [vmem:[#allocation8 + $0x7c0] sm:$0xff]
    %v3941 = vld [vmem:[#allocation8 + $0x7c8] sm:$0xff]
    %v3942 = vld [vmem:[#allocation8 + $0x7d0] sm:$0xff]
    %v3943 = vld [vmem:[#allocation8 + $0x7d8] sm:$0xff]
    %v3944 = vld [vmem:[#allocation8 + $0x7e0] sm:$0xff]
    %v3945 = vld [vmem:[#allocation8 + $0x7e8] sm:$0xff]
    %v3946 = vld [vmem:[#allocation8 + $0x7f0] sm:$0xff]
    %v3947 = vld [vmem:[#allocation8 + $0x7f8] sm:$0xff]
    %v3948 = vld [vmem:[#allocation8 + $0x800] sm:$0xff]
    %v3949 = vld [vmem:[#allocation8 + $0x808] sm:$0xff]
    %v3950 = vld [vmem:[#allocation8 + $0x810] sm:$0xff]
    %v3951 = vld [vmem:[#allocation8 + $0x818] sm:$0xff]
    %v3952 = vld [vmem:[#allocation8 + $0x820] sm:$0xff]
    %v3953 = vld [vmem:[#allocation8 + $0x828] sm:$0xff]
    %v3954 = vld [vmem:[#allocation8 + $0x830] sm:$0xff]
    %v3955 = vld [vmem:[#allocation8 + $0x838] sm:$0xff]
    %v3956 = vld [vmem:[#allocation8 + $0x840] sm:$0xff]
    %v3957 = vld [vmem:[#allocation8 + $0x848] sm:$0xff]
    %v3958 = vld [vmem:[#allocation8 + $0x850] sm:$0xff]
    %v3959 = vld [vmem:[#allocation8 + $0x858] sm:$0xff]
    %v3960 = vld [vmem:[#allocation8 + $0x860] sm:$0xff]
    %v3961 = vld [vmem:[#allocation8 + $0x868] sm:$0xff]
    %v3962 = vld [vmem:[#allocation8 + $0x870] sm:$0xff]
    %v3963 = vld [vmem:[#allocation8 + $0x878] sm:$0xff]
    %v3964 = vld [vmem:[#allocation8 + $0x880] sm:$0xff]
    %v3965 = vld [vmem:[#allocation8 + $0x888] sm:$0xff]
    %v3966 = vld [vmem:[#allocation8 + $0x890] sm:$0xff]
    %v3967 = vld [vmem:[#allocation8 + $0x898] sm:$0xff]
    %v3968 = vld [vmem:[#allocation8 + $0x8a0] sm:$0xff]
    %v3969 = vld [vmem:[#allocation8 + $0x8a8] sm:$0xff]
    %v3970 = vld [vmem:[#allocation8 + $0x8b0] sm:$0xff]
    %v3971 = vld [vmem:[#allocation8 + $0x8b8] sm:$0xff]
    %v3972 = vld [vmem:[#allocation8 + $0x8c0] sm:$0xff]
    %v3973 = vld [vmem:[#allocation8 + $0x8c8] sm:$0xff]
    %v3974 = vld [vmem:[#allocation8 + $0x8d0] sm:$0xff]
    %v3975 = vld [vmem:[#allocation8 + $0x8d8] sm:$0xff]
    %v3976 = vld [vmem:[#allocation8 + $0x8e0] sm:$0xff]
    %v3977 = vld [vmem:[#allocation8 + $0x8e8] sm:$0xff]
    %v3978 = vld [vmem:[#allocation8 + $0x8f0] sm:$0xff]
    %v3979 = vld [vmem:[#allocation8 + $0x8f8] sm:$0xff]
    %v3980 = vld [vmem:[#allocation8 + $0x900] sm:$0xff]
    %v3981 = vld [vmem:[#allocation8 + $0x908] sm:$0xff]
    %v3982 = vld [vmem:[#allocation8 + $0x910] sm:$0xff]
    %v3983 = vld [vmem:[#allocation8 + $0x918] sm:$0xff]
    %v3984 = vld [vmem:[#allocation8 + $0x920] sm:$0xff]
    %v3985 = vld [vmem:[#allocation8 + $0x928] sm:$0xff]
    %v3986 = vld [vmem:[#allocation8 + $0x930] sm:$0xff]
    %v3987 = vld [vmem:[#allocation8 + $0x938] sm:$0xff]
    %v3988 = vld [vmem:[#allocation8 + $0x940] sm:$0xff]
    %v3989 = vld [vmem:[#allocation8 + $0x948] sm:$0xff]
    %v3990 = vld [vmem:[#allocation8 + $0x950] sm:$0xff]
    %v3991 = vld [vmem:[#allocation8 + $0x958] sm:$0xff]
    %v3992 = vld [vmem:[#allocation8 + $0x960] sm:$0xff]
    %v3993 = vld [vmem:[#allocation8 + $0x968] sm:$0xff]
    %v3994 = vld [vmem:[#allocation8 + $0x970] sm:$0xff]
    %v3995 = vld [vmem:[#allocation8 + $0x978] sm:$0xff]
    %v3996 = vld [vmem:[#allocation8 + $0x980] sm:$0xff]
    %v3997 = vld [vmem:[#allocation8 + $0x988] sm:$0xff]
    %v3998 = vld [vmem:[#allocation8 + $0x990] sm:$0xff]
    %v3999 = vld [vmem:[#allocation8 + $0x998] sm:$0xff]
    %v4000 = vld [vmem:[#allocation8 + $0x9a0] sm:$0xff]
    %v4001 = vld [vmem:[#allocation8 + $0x9a8] sm:$0xff]
    %v4002 = vld [vmem:[#allocation8 + $0x9b0] sm:$0xff]
    %v4003 = vld [vmem:[#allocation8 + $0x9b8] sm:$0xff]
    %v4004 = vld [vmem:[#allocation8 + $0x9c0] sm:$0xff]
    %v4005 = vld [vmem:[#allocation8 + $0x9c8] sm:$0xff]
    %v4006 = vld [vmem:[#allocation8 + $0x9d0] sm:$0xff]
    %v4007 = vld [vmem:[#allocation8 + $0x9d8] sm:$0xff]
    %v4008 = vld [vmem:[#allocation8 + $0x9e0] sm:$0xff]
    %v4009 = vld [vmem:[#allocation8 + $0x9e8] sm:$0xff]
    %v4010 = vld [vmem:[#allocation8 + $0x9f0] sm:$0xff]
    %v4011 = vld [vmem:[#allocation8 + $0x9f8] sm:$0xff]
    %v4012 = vld [vmem:[#allocation5] sm:$0xf]
    %v4013 = vld [vmem:[#allocation5 + $0x4] sm:$0xf]
    %v4014 = vld [vmem:[#allocation10] sm:$0xff]
    %v4015 = vld [vmem:[#allocation10 + $0x8] sm:$0xff]
    %v4016 = vld [vmem:[#allocation10 + $0x10] sm:$0xff]
    %v4017 = vld [vmem:[#allocation10 + $0x18] sm:$0xff]
    %v4018 = vld [vmem:[#allocation10 + $0x20] sm:$0xff]
    %v4019 = vld [vmem:[#allocation10 + $0x28] sm:$0xff]
    %v4020 = vld [vmem:[#allocation10 + $0x30] sm:$0xff]
    %v4021 = vld [vmem:[#allocation10 + $0x38] sm:$0xff]
    %v4022 = vld [vmem:[#allocation10 + $0x40] sm:$0xff]
    %v4023 = vld [vmem:[#allocation10 + $0x48] sm:$0xff]
    %v4024 = vld [vmem:[#allocation10 + $0x50] sm:$0xff]
    %v4025 = vld [vmem:[#allocation10 + $0x58] sm:$0xff]
    %v4026 = vld [vmem:[#allocation10 + $0x60] sm:$0xff]
    %v4027 = vld [vmem:[#allocation10 + $0x68] sm:$0xff]
    %v4028 = vld [vmem:[#allocation10 + $0x70] sm:$0xff]
    %v4029 = vld [vmem:[#allocation10 + $0x78] sm:$0xff]
    %v4030 = vld [vmem:[#allocation10 + $0x80] sm:$0xff]
    %v4031 = vld [vmem:[#allocation10 + $0x88] sm:$0xff]
    %v4032 = vld [vmem:[#allocation10 + $0x90] sm:$0xff]
    %v4033 = vld [vmem:[#allocation10 + $0x98] sm:$0xff]
    %v4034 = vld [vmem:[#allocation10 + $0xa0] sm:$0xff]
    %v4035 = vld [vmem:[#allocation10 + $0xa8] sm:$0xff]
    %v4036 = vld [vmem:[#allocation10 + $0xb0] sm:$0xff]
    %v4037 = vld [vmem:[#allocation10 + $0xb8] sm:$0xff]
    %v4038 = vld [vmem:[#allocation10 + $0xc0] sm:$0xff]
    %v4039 = vld [vmem:[#allocation10 + $0xc8] sm:$0xff]
    %v4040 = vld [vmem:[#allocation10 + $0xd0] sm:$0xff]
    %v4041 = vld [vmem:[#allocation10 + $0xd8] sm:$0xff]
    %v4042 = vld [vmem:[#allocation10 + $0xe0] sm:$0xff]
    %v4043 = vld [vmem:[#allocation10 + $0xe8] sm:$0xff]
    %v4044 = vld [vmem:[#allocation10 + $0xf0] sm:$0xff]
    %v4045 = vld [vmem:[#allocation10 + $0xf8] sm:$0xff]
    %v4048 = vunpack.c.l.b16 %v4012
    %v4049 = vunpack.c.l.b16 %v4013
    %v4050 = vpack.c.b16 %v4049, %v4048
    %v4084 = vunpack.c.l.b16 %v4014
    %v4085 = vunpack.c.h.b16 %v4014
    %v4086 = vunpack.c.l.b16 %v4015
    %v4087 = vunpack.c.h.b16 %v4015
    %v4088 = vunpack.c.l.b16 %v4016
    %v4089 = vunpack.c.h.b16 %v4016
    %v4090 = vunpack.c.l.b16 %v4017
    %v4091 = vunpack.c.h.b16 %v4017
    %v4092 = vunpack.c.l.b16 %v4018
    %v4093 = vunpack.c.h.b16 %v4018
    %v4094 = vunpack.c.l.b16 %v4019
    %v4095 = vunpack.c.h.b16 %v4019
    %v4096 = vunpack.c.l.b16 %v4020
    %v4097 = vunpack.c.h.b16 %v4020
    %v4098 = vunpack.c.l.b16 %v4021
    %v4099 = vunpack.c.h.b16 %v4021
    %v4100 = vunpack.c.l.b16 %v4022
    %v4101 = vunpack.c.h.b16 %v4022
    %v4102 = vunpack.c.l.b16 %v4023
    %v4103 = vunpack.c.h.b16 %v4023
    %v4104 = vunpack.c.l.b16 %v4024
    %v4105 = vunpack.c.h.b16 %v4024
    %v4106 = vunpack.c.l.b16 %v4025
    %v4107 = vunpack.c.h.b16 %v4025
    %v4108 = vunpack.c.l.b16 %v4026
    %v4109 = vunpack.c.h.b16 %v4026
    %v4110 = vunpack.c.l.b16 %v4027
    %v4111 = vunpack.c.h.b16 %v4027
    %v4112 = vunpack.c.l.b16 %v4028
    %v4113 = vunpack.c.h.b16 %v4028
    %v4114 = vunpack.c.l.b16 %v4029
    %v4115 = vunpack.c.h.b16 %v4029
    %v4116 = vunpack.c.l.b16 %v4030
    %v4117 = vunpack.c.h.b16 %v4030
    %v4118 = vunpack.c.l.b16 %v4031
    %v4119 = vunpack.c.h.b16 %v4031
    %v4120 = vunpack.c.l.b16 %v4032
    %v4121 = vunpack.c.h.b16 %v4032
    %v4122 = vunpack.c.l.b16 %v4033
    %v4123 = vunpack.c.h.b16 %v4033
    %v4124 = vunpack.c.l.b16 %v4034
    %v4125 = vunpack.c.h.b16 %v4034
    %v4126 = vunpack.c.l.b16 %v4035
    %v4127 = vunpack.c.h.b16 %v4035
    %v4128 = vunpack.c.l.b16 %v4036
    %v4129 = vunpack.c.h.b16 %v4036
    %v4130 = vunpack.c.l.b16 %v4037
    %v4131 = vunpack.c.h.b16 %v4037
    %v4132 = vunpack.c.l.b16 %v4038
    %v4133 = vunpack.c.h.b16 %v4038
    %v4134 = vunpack.c.l.b16 %v4039
    %v4135 = vunpack.c.h.b16 %v4039
    %v4136 = vunpack.c.l.b16 %v4040
    %v4137 = vunpack.c.h.b16 %v4040
    %v4138 = vunpack.c.l.b16 %v4041
    %v4139 = vunpack.c.h.b16 %v4041
    %v4140 = vunpack.c.l.b16 %v4042
    %v4141 = vunpack.c.h.b16 %v4042
    %v4142 = vunpack.c.l.b16 %v4043
    %v4143 = vunpack.c.h.b16 %v4043
    %v4144 = vunpack.c.l.b16 %v4044
    %v4145 = vunpack.c.h.b16 %v4044
    %v4146 = vunpack.c.l.b16 %v4045
    %v4147 = vunpack.c.h.b16 %v4045
    %v4148 = vpack.c.b16 %v4088, %v4084
    %v4149 = vpack.c.b16 %v4089, %v4085
    %v4150 = vpack.c.b16 %v4090, %v4086
    %v4151 = vpack.c.b16 %v4091, %v4087
    %v4152 = vpack.c.b16 %v4096, %v4092
    %v4153 = vpack.c.b16 %v4097, %v4093
    %v4154 = vpack.c.b16 %v4098, %v4094
    %v4155 = vpack.c.b16 %v4099, %v4095
    %v4156 = vpack.c.b16 %v4104, %v4100
    %v4157 = vpack.c.b16 %v4105, %v4101
    %v4158 = vpack.c.b16 %v4106, %v4102
    %v4159 = vpack.c.b16 %v4107, %v4103
    %v4160 = vpack.c.b16 %v4112, %v4108
    %v4161 = vpack.c.b16 %v4113, %v4109
    %v4162 = vpack.c.b16 %v4114, %v4110
    %v4163 = vpack.c.b16 %v4115, %v4111
    %v4164 = vpack.c.b16 %v4120, %v4116
    %v4165 = vpack.c.b16 %v4121, %v4117
    %v4166 = vpack.c.b16 %v4122, %v4118
    %v4167 = vpack.c.b16 %v4123, %v4119
    %v4168 = vpack.c.b16 %v4128, %v4124
    %v4169 = vpack.c.b16 %v4129, %v4125
    %v4170 = vpack.c.b16 %v4130, %v4126
    %v4171 = vpack.c.b16 %v4131, %v4127
    %v4172 = vpack.c.b16 %v4136, %v4132
    %v4173 = vpack.c.b16 %v4137, %v4133
    %v4174 = vpack.c.b16 %v4138, %v4134
    %v4175 = vpack.c.b16 %v4139, %v4135
    %v4176 = vpack.c.b16 %v4144, %v4140
    %v4177 = vpack.c.b16 %v4145, %v4141
    %v4178 = vpack.c.b16 %v4146, %v4142
    %v4179 = vpack.c.b16 %v4147, %v4143
    %4212 = vmatprep.subr.bf16.mxu0 %v4177
    %4213 = vmatpush1.bf16.msra.mxu0 %v4176
    %4214 = vmatprep.subr.bf16.mxu0 %v4173
    %4215 = vmatpush1.bf16.msra.mxu0 %v4172
    %4216 = vmatprep.subr.bf16.mxu0 %v4169
    %4217 = vmatpush1.bf16.msra.mxu0 %v4168
    %4218 = vmatprep.subr.bf16.mxu0 %v4165
    %4219 = vmatpush1.bf16.msra.mxu0 %v4164
    %4220 = vmatprep.subr.bf16.mxu0 %v4161
    %4221 = vmatpush1.bf16.msra.mxu0 %v4160
    %4222 = vmatprep.subr.bf16.mxu0 %v4157
    %4223 = vmatpush1.bf16.msra.mxu0 %v4156
    %4224 = vmatprep.subr.bf16.mxu0 %v4153
    %4225 = vmatpush1.bf16.msra.mxu0 %v4152
    %4226 = vmatprep.subr.bf16.mxu0 %v4149
    %4227 = vmatpush1.bf16.msra.mxu0 %v4148
    %4228 = vmatprep.subr.bf16.mxu0 0
    %4229 = vmatpush2.bf16.msra.mxu0 0
    %4230 = vmatprep.subr.bf16.mxu0 0
    %4231 = vmatpush2.bf16.msra.mxu0 0
    %4232 = vmatprep.subr.bf16.mxu0 0
    %4233 = vmatpush2.bf16.msra.mxu0 0
    %4234 = vmatprep.subr.bf16.mxu0 0
    %4235 = vmatpush2.bf16.msra.mxu0 0
    %4236 = vmatprep.subr.bf16.mxu0 0
    %4237 = vmatpush2.bf16.msra.mxu0 0
    %4238 = vmatprep.subr.bf16.mxu0 0
    %4239 = vmatpush2.bf16.msra.mxu0 0
    %4240 = vmatprep.subr.bf16.mxu0 0
    %4241 = vmatpush2.bf16.msra.mxu0 0
    %4242 = vmatprep.subr.bf16.mxu0 0
    %4243 = vmatpush2.bf16.msra.mxu0 0
    %4244 = vmatprep.mubr.bf16.mxu0 0
    %4245 = vmatmul.mubr.bf16.gmra.mxu0 %v4050
    %v4246 = vpop.f32.mrf.mxu0
    %v4247 = vadd.f32 0.0, %v4246
    %v4248 = vpop.f32.mrf.mxu0
    %v4249 = vadd.f32 0.0, %v4248
    %v4250 = vpop.f32.mrf.mxu0
    %v4251 = vadd.f32 0.0, %v4250
    %v4252 = vpop.f32.mrf.mxu0
    %v4253 = vadd.f32 0.0, %v4252
    %4254 = vdwg.mxu0
    %4255 = vmatprep.subr.bf16.mxu0 %v4179
    %4256 = vmatpush1.bf16.msra.mxu0 %v4178
    %4257 = vmatprep.subr.bf16.mxu0 %v4175
    %4258 = vmatpush1.bf16.msra.mxu0 %v4174
    %4259 = vmatprep.subr.bf16.mxu0 %v4171
    %4260 = vmatpush1.bf16.msra.mxu0 %v4170
    %4261 = vmatprep.subr.bf16.mxu0 %v4167
    %4262 = vmatpush1.bf16.msra.mxu0 %v4166
    %4263 = vmatprep.subr.bf16.mxu0 %v4163
    %4264 = vmatpush1.bf16.msra.mxu0 %v4162
    %4265 = vmatprep.subr.bf16.mxu0 %v4159
    %4266 = vmatpush1.bf16.msra.mxu0 %v4158
    %4267 = vmatprep.subr.bf16.mxu0 %v4155
    %4268 = vmatpush1.bf16.msra.mxu0 %v4154
    %4269 = vmatprep.subr.bf16.mxu0 %v4151
    %4270 = vmatpush1.bf16.msra.mxu0 %v4150
    %4271 = vmatprep.subr.bf16.mxu0 0
    %4272 = vmatpush2.bf16.msra.mxu0 0
    %4273 = vmatprep.subr.bf16.mxu0 0
    %4274 = vmatpush2.bf16.msra.mxu0 0
    %4275 = vmatprep.subr.bf16.mxu0 0
    %4276 = vmatpush2.bf16.msra.mxu0 0
    %4277 = vmatprep.subr.bf16.mxu0 0
    %4278 = vmatpush2.bf16.msra.mxu0 0
    %4279 = vmatprep.subr.bf16.mxu0 0
    %4280 = vmatpush2.bf16.msra.mxu0 0
    %4281 = vmatprep.subr.bf16.mxu0 0
    %4282 = vmatpush2.bf16.msra.mxu0 0
    %4283 = vmatprep.subr.bf16.mxu0 0
    %4284 = vmatpush2.bf16.msra.mxu0 0
    %4285 = vmatprep.subr.bf16.mxu0 0
    %4286 = vmatpush2.bf16.msra.mxu0 0
    %4287 = vmatprep.mubr.bf16.mxu0 0
    %4288 = vmatmul.mubr.bf16.gmra.mxu0 %v4050
    %v4289 = vpop.f32.mrf.mxu0
    %v4290 = vadd.f32 0.0, %v4289
    %v4291 = vpop.f32.mrf.mxu0
    %v4292 = vadd.f32 0.0, %v4291
    %v4293 = vpop.f32.mrf.mxu0
    %v4294 = vadd.f32 0.0, %v4293
    %v4295 = vpop.f32.mrf.mxu0
    %v4296 = vadd.f32 0.0, %v4295
    %4297 = vdwg.mxu0
    %v4618 = vunpack.c.l.b16 %v3692
    %v4619 = vunpack.c.h.b16 %v3692
    %v4620 = vunpack.c.l.b16 %v3693
    %v4621 = vunpack.c.h.b16 %v3693
    %v4622 = vunpack.c.l.b16 %v3694
    %v4623 = vunpack.c.h.b16 %v3694
    %v4624 = vunpack.c.l.b16 %v3695
    %v4625 = vunpack.c.h.b16 %v3695
    %v4626 = vunpack.c.l.b16 %v3696
    %v4627 = vunpack.c.h.b16 %v3696
    %v4628 = vunpack.c.l.b16 %v3697
    %v4629 = vunpack.c.h.b16 %v3697
    %v4630 = vunpack.c.l.b16 %v3698
    %v4631 = vunpack.c.h.b16 %v3698
    %v4632 = vunpack.c.l.b16 %v3699
    %v4633 = vunpack.c.h.b16 %v3699
    %v4634 = vunpack.c.l.b16 %v3700
    %v4635 = vunpack.c.h.b16 %v3700
    %v4636 = vunpack.c.l.b16 %v3701
    %v4637 = vunpack.c.h.b16 %v3701
    %v4638 = vunpack.c.l.b16 %v3702
    %v4639 = vunpack.c.h.b16 %v3702
    %v4640 = vunpack.c.l.b16 %v3703
    %v4641 = vunpack.c.h.b16 %v3703
    %v4642 = vunpack.c.l.b16 %v3704
    %v4643 = vunpack.c.h.b16 %v3704
    %v4644 = vunpack.c.l.b16 %v3705
    %v4645 = vunpack.c.h.b16 %v3705
    %v4646 = vunpack.c.l.b16 %v3706
    %v4647 = vunpack.c.h.b16 %v3706
    %v4648 = vunpack.c.l.b16 %v3707
    %v4649 = vunpack.c.h.b16 %v3707
    %v4650 = vunpack.c.l.b16 %v3708
    %v4651 = vunpack.c.h.b16 %v3708
    %v4652 = vunpack.c.l.b16 %v3709
    %v4653 = vunpack.c.h.b16 %v3709
    %v4654 = vunpack.c.l.b16 %v3710
    %v4655 = vunpack.c.h.b16 %v3710
    %v4656 = vunpack.c.l.b16 %v3711
    %v4657 = vunpack.c.h.b16 %v3711
    %v4658 = vunpack.c.l.b16 %v3712
    %v4659 = vunpack.c.h.b16 %v3712
    %v4660 = vunpack.c.l.b16 %v3713
    %v4661 = vunpack.c.h.b16 %v3713
    %v4662 = vunpack.c.l.b16 %v3714
    %v4663 = vunpack.c.h.b16 %v3714
    %v4664 = vunpack.c.l.b16 %v3715
    %v4665 = vunpack.c.h.b16 %v3715
    %v4666 = vunpack.c.l.b16 %v3716
    %v4667 = vunpack.c.h.b16 %v3716
    %v4668 = vunpack.c.l.b16 %v3717
    %v4669 = vunpack.c.h.b16 %v3717
    %v4670 = vunpack.c.l.b16 %v3718
    %v4671 = vunpack.c.h.b16 %v3718
    %v4672 = vunpack.c.l.b16 %v3719
    %v4673 = vunpack.c.h.b16 %v3719
    %v4674 = vunpack.c.l.b16 %v3720
    %v4675 = vunpack.c.h.b16 %v3720
    %v4676 = vunpack.c.l.b16 %v3721
    %v4677 = vunpack.c.h.b16 %v3721
    %v4678 = vunpack.c.l.b16 %v3722
    %v4679 = vunpack.c.h.b16 %v3722
    %v4680 = vunpack.c.l.b16 %v3723
    %v4681 = vunpack.c.h.b16 %v3723
    %v4682 = vunpack.c.l.b16 %v3724
    %v4683 = vunpack.c.h.b16 %v3724
    %v4684 = vunpack.c.l.b16 %v3725
    %v4685 = vunpack.c.h.b16 %v3725
    %v4686 = vunpack.c.l.b16 %v3726
    %v4687 = vunpack.c.h.b16 %v3726
    %v4688 = vunpack.c.l.b16 %v3727
    %v4689 = vunpack.c.h.b16 %v3727
    %v4690 = vunpack.c.l.b16 %v3728
    %v4691 = vunpack.c.h.b16 %v3728
    %v4692 = vunpack.c.l.b16 %v3729
    %v4693 = vunpack.c.h.b16 %v3729
    %v4694 = vunpack.c.l.b16 %v3730
    %v4695 = vunpack.c.h.b16 %v3730
    %v4696 = vunpack.c.l.b16 %v3731
    %v4697 = vunpack.c.h.b16 %v3731
    %v4698 = vunpack.c.l.b16 %v3732
    %v4699 = vunpack.c.h.b16 %v3732
    %v4700 = vunpack.c.l.b16 %v3733
    %v4701 = vunpack.c.h.b16 %v3733
    %v4702 = vunpack.c.l.b16 %v3734
    %v4703 = vunpack.c.h.b16 %v3734
    %v4704 = vunpack.c.l.b16 %v3735
    %v4705 = vunpack.c.h.b16 %v3735
    %v4706 = vunpack.c.l.b16 %v3736
    %v4707 = vunpack.c.h.b16 %v3736
    %v4708 = vunpack.c.l.b16 %v3737
    %v4709 = vunpack.c.h.b16 %v3737
    %v4710 = vunpack.c.l.b16 %v3738
    %v4711 = vunpack.c.h.b16 %v3738
    %v4712 = vunpack.c.l.b16 %v3739
    %v4713 = vunpack.c.h.b16 %v3739
    %v4714 = vunpack.c.l.b16 %v3740
    %v4715 = vunpack.c.h.b16 %v3740
    %v4716 = vunpack.c.l.b16 %v3741
    %v4717 = vunpack.c.h.b16 %v3741
    %v4718 = vunpack.c.l.b16 %v3742
    %v4719 = vunpack.c.h.b16 %v3742
    %v4720 = vunpack.c.l.b16 %v3743
    %v4721 = vunpack.c.h.b16 %v3743
    %v4722 = vunpack.c.l.b16 %v3744
    %v4723 = vunpack.c.h.b16 %v3744
    %v4724 = vunpack.c.l.b16 %v3745
    %v4725 = vunpack.c.h.b16 %v3745
    %v4726 = vunpack.c.l.b16 %v3746
    %v4727 = vunpack.c.h.b16 %v3746
    %v4728 = vunpack.c.l.b16 %v3747
    %v4729 = vunpack.c.h.b16 %v3747
    %v4730 = vunpack.c.l.b16 %v3748
    %v4731 = vunpack.c.h.b16 %v3748
    %v4732 = vunpack.c.l.b16 %v3749
    %v4733 = vunpack.c.h.b16 %v3749
    %v4734 = vunpack.c.l.b16 %v3750
    %v4735 = vunpack.c.h.b16 %v3750
    %v4736 = vunpack.c.l.b16 %v3751
    %v4737 = vunpack.c.h.b16 %v3751
    %v4738 = vunpack.c.l.b16 %v3752
    %v4739 = vunpack.c.h.b16 %v3752
    %v4740 = vunpack.c.l.b16 %v3753
    %v4741 = vunpack.c.h.b16 %v3753
    %v4742 = vunpack.c.l.b16 %v3754
    %v4743 = vunpack.c.h.b16 %v3754
    %v4744 = vunpack.c.l.b16 %v3755
    %v4745 = vunpack.c.h.b16 %v3755
    %v4746 = vunpack.c.l.b16 %v3756
    %v4747 = vunpack.c.h.b16 %v3756
    %v4748 = vunpack.c.l.b16 %v3757
    %v4749 = vunpack.c.h.b16 %v3757
    %v4750 = vunpack.c.l.b16 %v3758
    %v4751 = vunpack.c.h.b16 %v3758
    %v4752 = vunpack.c.l.b16 %v3759
    %v4753 = vunpack.c.h.b16 %v3759
    %v4754 = vunpack.c.l.b16 %v3760
    %v4755 = vunpack.c.h.b16 %v3760
    %v4756 = vunpack.c.l.b16 %v3761
    %v4757 = vunpack.c.h.b16 %v3761
    %v4758 = vunpack.c.l.b16 %v3762
    %v4759 = vunpack.c.h.b16 %v3762
    %v4760 = vunpack.c.l.b16 %v3763
    %v4761 = vunpack.c.h.b16 %v3763
    %v4762 = vunpack.c.l.b16 %v3764
    %v4763 = vunpack.c.h.b16 %v3764
    %v4764 = vunpack.c.l.b16 %v3765
    %v4765 = vunpack.c.h.b16 %v3765
    %v4766 = vunpack.c.l.b16 %v3766
    %v4767 = vunpack.c.h.b16 %v3766
    %v4768 = vunpack.c.l.b16 %v3767
    %v4769 = vunpack.c.h.b16 %v3767
    %v4770 = vunpack.c.l.b16 %v3768
    %v4771 = vunpack.c.h.b16 %v3768
    %v4772 = vunpack.c.l.b16 %v3769
    %v4773 = vunpack.c.h.b16 %v3769
    %v4774 = vunpack.c.l.b16 %v3770
    %v4775 = vunpack.c.h.b16 %v3770
    %v4776 = vunpack.c.l.b16 %v3771
    %v4777 = vunpack.c.h.b16 %v3771
    %v4778 = vunpack.c.l.b16 %v3772
    %v4779 = vunpack.c.h.b16 %v3772
    %v4780 = vunpack.c.l.b16 %v3773
    %v4781 = vunpack.c.h.b16 %v3773
    %v4782 = vunpack.c.l.b16 %v3774
    %v4783 = vunpack.c.h.b16 %v3774
    %v4784 = vunpack.c.l.b16 %v3775
    %v4785 = vunpack.c.h.b16 %v3775
    %v4786 = vunpack.c.l.b16 %v3776
    %v4787 = vunpack.c.h.b16 %v3776
    %v4788 = vunpack.c.l.b16 %v3777
    %v4789 = vunpack.c.h.b16 %v3777
    %v4790 = vunpack.c.l.b16 %v3778
    %v4791 = vunpack.c.h.b16 %v3778
    %v4792 = vunpack.c.l.b16 %v3779
    %v4793 = vunpack.c.h.b16 %v3779
    %v4794 = vunpack.c.l.b16 %v3780
    %v4795 = vunpack.c.h.b16 %v3780
    %v4796 = vunpack.c.l.b16 %v3781
    %v4797 = vunpack.c.h.b16 %v3781
    %v4798 = vunpack.c.l.b16 %v3782
    %v4799 = vunpack.c.h.b16 %v3782
    %v4800 = vunpack.c.l.b16 %v3783
    %v4801 = vunpack.c.h.b16 %v3783
    %v4802 = vunpack.c.l.b16 %v3784
    %v4803 = vunpack.c.h.b16 %v3784
    %v4804 = vunpack.c.l.b16 %v3785
    %v4805 = vunpack.c.h.b16 %v3785
    %v4806 = vunpack.c.l.b16 %v3786
    %v4807 = vunpack.c.h.b16 %v3786
    %v4808 = vunpack.c.l.b16 %v3787
    %v4809 = vunpack.c.h.b16 %v3787
    %v4810 = vunpack.c.l.b16 %v3788
    %v4811 = vunpack.c.h.b16 %v3788
    %v4812 = vunpack.c.l.b16 %v3789
    %v4813 = vunpack.c.h.b16 %v3789
    %v4814 = vunpack.c.l.b16 %v3790
    %v4815 = vunpack.c.h.b16 %v3790
    %v4816 = vunpack.c.l.b16 %v3791
    %v4817 = vunpack.c.h.b16 %v3791
    %v4818 = vunpack.c.l.b16 %v3792
    %v4819 = vunpack.c.h.b16 %v3792
    %v4820 = vunpack.c.l.b16 %v3793
    %v4821 = vunpack.c.h.b16 %v3793
    %v4822 = vunpack.c.l.b16 %v3794
    %v4823 = vunpack.c.h.b16 %v3794
    %v4824 = vunpack.c.l.b16 %v3795
    %v4825 = vunpack.c.h.b16 %v3795
    %v4826 = vunpack.c.l.b16 %v3796
    %v4827 = vunpack.c.h.b16 %v3796
    %v4828 = vunpack.c.l.b16 %v3797
    %v4829 = vunpack.c.h.b16 %v3797
    %v4830 = vunpack.c.l.b16 %v3798
    %v4831 = vunpack.c.h.b16 %v3798
    %v4832 = vunpack.c.l.b16 %v3799
    %v4833 = vunpack.c.h.b16 %v3799
    %v4834 = vunpack.c.l.b16 %v3800
    %v4835 = vunpack.c.h.b16 %v3800
    %v4836 = vunpack.c.l.b16 %v3801
    %v4837 = vunpack.c.h.b16 %v3801
    %v4838 = vunpack.c.l.b16 %v3802
    %v4839 = vunpack.c.h.b16 %v3802
    %v4840 = vunpack.c.l.b16 %v3803
    %v4841 = vunpack.c.h.b16 %v3803
    %v4842 = vunpack.c.l.b16 %v3804
    %v4843 = vunpack.c.h.b16 %v3804
    %v4844 = vunpack.c.l.b16 %v3805
    %v4845 = vunpack.c.h.b16 %v3805
    %v4846 = vunpack.c.l.b16 %v3806
    %v4847 = vunpack.c.h.b16 %v3806
    %v4848 = vunpack.c.l.b16 %v3807
    %v4849 = vunpack.c.h.b16 %v3807
    %v4850 = vunpack.c.l.b16 %v3808
    %v4851 = vunpack.c.h.b16 %v3808
    %v4852 = vunpack.c.l.b16 %v3809
    %v4853 = vunpack.c.h.b16 %v3809
    %v4854 = vunpack.c.l.b16 %v3810
    %v4855 = vunpack.c.h.b16 %v3810
    %v4856 = vunpack.c.l.b16 %v3811
    %v4857 = vunpack.c.h.b16 %v3811
    %v4858 = vunpack.c.l.b16 %v3812
    %v4859 = vunpack.c.h.b16 %v3812
    %v4860 = vunpack.c.l.b16 %v3813
    %v4861 = vunpack.c.h.b16 %v3813
    %v4862 = vunpack.c.l.b16 %v3814
    %v4863 = vunpack.c.h.b16 %v3814
    %v4864 = vunpack.c.l.b16 %v3815
    %v4865 = vunpack.c.h.b16 %v3815
    %v4866 = vunpack.c.l.b16 %v3816
    %v4867 = vunpack.c.h.b16 %v3816
    %v4868 = vunpack.c.l.b16 %v3817
    %v4869 = vunpack.c.h.b16 %v3817
    %v4870 = vunpack.c.l.b16 %v3818
    %v4871 = vunpack.c.h.b16 %v3818
    %v4872 = vunpack.c.l.b16 %v3819
    %v4873 = vunpack.c.h.b16 %v3819
    %v4874 = vunpack.c.l.b16 %v3820
    %v4875 = vunpack.c.h.b16 %v3820
    %v4876 = vunpack.c.l.b16 %v3821
    %v4877 = vunpack.c.h.b16 %v3821
    %v4878 = vunpack.c.l.b16 %v3822
    %v4879 = vunpack.c.h.b16 %v3822
    %v4880 = vunpack.c.l.b16 %v3823
    %v4881 = vunpack.c.h.b16 %v3823
    %v4882 = vunpack.c.l.b16 %v3824
    %v4883 = vunpack.c.h.b16 %v3824
    %v4884 = vunpack.c.l.b16 %v3825
    %v4885 = vunpack.c.h.b16 %v3825
    %v4886 = vunpack.c.l.b16 %v3826
    %v4887 = vunpack.c.h.b16 %v3826
    %v4888 = vunpack.c.l.b16 %v3827
    %v4889 = vunpack.c.h.b16 %v3827
    %v4890 = vunpack.c.l.b16 %v3828
    %v4891 = vunpack.c.h.b16 %v3828
    %v4892 = vunpack.c.l.b16 %v3829
    %v4893 = vunpack.c.h.b16 %v3829
    %v4894 = vunpack.c.l.b16 %v3830
    %v4895 = vunpack.c.h.b16 %v3830
    %v4896 = vunpack.c.l.b16 %v3831
    %v4897 = vunpack.c.h.b16 %v3831
    %v4898 = vunpack.c.l.b16 %v3832
    %v4899 = vunpack.c.h.b16 %v3832
    %v4900 = vunpack.c.l.b16 %v3833
    %v4901 = vunpack.c.h.b16 %v3833
    %v4902 = vunpack.c.l.b16 %v3834
    %v4903 = vunpack.c.h.b16 %v3834
    %v4904 = vunpack.c.l.b16 %v3835
    %v4905 = vunpack.c.h.b16 %v3835
    %v4906 = vunpack.c.l.b16 %v3836
    %v4907 = vunpack.c.h.b16 %v3836
    %v4908 = vunpack.c.l.b16 %v3837
    %v4909 = vunpack.c.h.b16 %v3837
    %v4910 = vunpack.c.l.b16 %v3838
    %v4911 = vunpack.c.h.b16 %v3838
    %v4912 = vunpack.c.l.b16 %v3839
    %v4913 = vunpack.c.h.b16 %v3839
    %v4914 = vunpack.c.l.b16 %v3840
    %v4915 = vunpack.c.h.b16 %v3840
    %v4916 = vunpack.c.l.b16 %v3841
    %v4917 = vunpack.c.h.b16 %v3841
    %v4918 = vunpack.c.l.b16 %v3842
    %v4919 = vunpack.c.h.b16 %v3842
    %v4920 = vunpack.c.l.b16 %v3843
    %v4921 = vunpack.c.h.b16 %v3843
    %v4922 = vunpack.c.l.b16 %v3844
    %v4923 = vunpack.c.h.b16 %v3844
    %v4924 = vunpack.c.l.b16 %v3845
    %v4925 = vunpack.c.h.b16 %v3845
    %v4926 = vunpack.c.l.b16 %v3846
    %v4927 = vunpack.c.h.b16 %v3846
    %v4928 = vunpack.c.l.b16 %v3847
    %v4929 = vunpack.c.h.b16 %v3847
    %v4930 = vunpack.c.l.b16 %v3848
    %v4931 = vunpack.c.h.b16 %v3848
    %v4932 = vunpack.c.l.b16 %v3849
    %v4933 = vunpack.c.h.b16 %v3849
    %v4934 = vunpack.c.l.b16 %v3850
    %v4935 = vunpack.c.h.b16 %v3850
    %v4936 = vunpack.c.l.b16 %v3851
    %v4937 = vunpack.c.h.b16 %v3851
    %v4938 = vunpack.c.l.b16 %v3852
    %v4939 = vunpack.c.h.b16 %v3852
    %v4940 = vunpack.c.l.b16 %v3853
    %v4941 = vunpack.c.h.b16 %v3853
    %v4942 = vunpack.c.l.b16 %v3854
    %v4943 = vunpack.c.h.b16 %v3854
    %v4944 = vunpack.c.l.b16 %v3855
    %v4945 = vunpack.c.h.b16 %v3855
    %v4946 = vunpack.c.l.b16 %v3856
    %v4947 = vunpack.c.h.b16 %v3856
    %v4948 = vunpack.c.l.b16 %v3857
    %v4949 = vunpack.c.h.b16 %v3857
    %v4950 = vunpack.c.l.b16 %v3858
    %v4951 = vunpack.c.h.b16 %v3858
    %v4952 = vunpack.c.l.b16 %v3859
    %v4953 = vunpack.c.h.b16 %v3859
    %v4954 = vunpack.c.l.b16 %v3860
    %v4955 = vunpack.c.h.b16 %v3860
    %v4956 = vunpack.c.l.b16 %v3861
    %v4957 = vunpack.c.h.b16 %v3861
    %v4958 = vunpack.c.l.b16 %v3862
    %v4959 = vunpack.c.h.b16 %v3862
    %v4960 = vunpack.c.l.b16 %v3863
    %v4961 = vunpack.c.h.b16 %v3863
    %v4962 = vunpack.c.l.b16 %v3864
    %v4963 = vunpack.c.h.b16 %v3864
    %v4964 = vunpack.c.l.b16 %v3865
    %v4965 = vunpack.c.h.b16 %v3865
    %v4966 = vunpack.c.l.b16 %v3866
    %v4967 = vunpack.c.h.b16 %v3866
    %v4968 = vunpack.c.l.b16 %v3867
    %v4969 = vunpack.c.h.b16 %v3867
    %v4970 = vunpack.c.l.b16 %v3868
    %v4971 = vunpack.c.h.b16 %v3868
    %v4972 = vunpack.c.l.b16 %v3869
    %v4973 = vunpack.c.h.b16 %v3869
    %v4974 = vunpack.c.l.b16 %v3870
    %v4975 = vunpack.c.h.b16 %v3870
    %v4976 = vunpack.c.l.b16 %v3871
    %v4977 = vunpack.c.h.b16 %v3871
    %v4978 = vunpack.c.l.b16 %v3872
    %v4979 = vunpack.c.h.b16 %v3872
    %v4980 = vunpack.c.l.b16 %v3873
    %v4981 = vunpack.c.h.b16 %v3873
    %v4982 = vunpack.c.l.b16 %v3874
    %v4983 = vunpack.c.h.b16 %v3874
    %v4984 = vunpack.c.l.b16 %v3875
    %v4985 = vunpack.c.h.b16 %v3875
    %v4986 = vunpack.c.l.b16 %v3876
    %v4987 = vunpack.c.h.b16 %v3876
    %v4988 = vunpack.c.l.b16 %v3877
    %v4989 = vunpack.c.h.b16 %v3877
    %v4990 = vunpack.c.l.b16 %v3878
    %v4991 = vunpack.c.h.b16 %v3878
    %v4992 = vunpack.c.l.b16 %v3879
    %v4993 = vunpack.c.h.b16 %v3879
    %v4994 = vunpack.c.l.b16 %v3880
    %v4995 = vunpack.c.h.b16 %v3880
    %v4996 = vunpack.c.l.b16 %v3881
    %v4997 = vunpack.c.h.b16 %v3881
    %v4998 = vunpack.c.l.b16 %v3882
    %v4999 = vunpack.c.h.b16 %v3882
    %v5000 = vunpack.c.l.b16 %v3883
    %v5001 = vunpack.c.h.b16 %v3883
    %v5002 = vunpack.c.l.b16 %v3884
    %v5003 = vunpack.c.h.b16 %v3884
    %v5004 = vunpack.c.l.b16 %v3885
    %v5005 = vunpack.c.h.b16 %v3885
    %v5006 = vunpack.c.l.b16 %v3886
    %v5007 = vunpack.c.h.b16 %v3886
    %v5008 = vunpack.c.l.b16 %v3887
    %v5009 = vunpack.c.h.b16 %v3887
    %v5010 = vunpack.c.l.b16 %v3888
    %v5011 = vunpack.c.h.b16 %v3888
    %v5012 = vunpack.c.l.b16 %v3889
    %v5013 = vunpack.c.h.b16 %v3889
    %v5014 = vunpack.c.l.b16 %v3890
    %v5015 = vunpack.c.h.b16 %v3890
    %v5016 = vunpack.c.l.b16 %v3891
    %v5017 = vunpack.c.h.b16 %v3891
    %v5018 = vunpack.c.l.b16 %v3892
    %v5019 = vunpack.c.h.b16 %v3892
    %v5020 = vunpack.c.l.b16 %v3893
    %v5021 = vunpack.c.h.b16 %v3893
    %v5022 = vunpack.c.l.b16 %v3894
    %v5023 = vunpack.c.h.b16 %v3894
    %v5024 = vunpack.c.l.b16 %v3895
    %v5025 = vunpack.c.h.b16 %v3895
    %v5026 = vunpack.c.l.b16 %v3896
    %v5027 = vunpack.c.h.b16 %v3896
    %v5028 = vunpack.c.l.b16 %v3897
    %v5029 = vunpack.c.h.b16 %v3897
    %v5030 = vunpack.c.l.b16 %v3898
    %v5031 = vunpack.c.h.b16 %v3898
    %v5032 = vunpack.c.l.b16 %v3899
    %v5033 = vunpack.c.h.b16 %v3899
    %v5034 = vunpack.c.l.b16 %v3900
    %v5035 = vunpack.c.h.b16 %v3900
    %v5036 = vunpack.c.l.b16 %v3901
    %v5037 = vunpack.c.h.b16 %v3901
    %v5038 = vunpack.c.l.b16 %v3902
    %v5039 = vunpack.c.h.b16 %v3902
    %v5040 = vunpack.c.l.b16 %v3903
    %v5041 = vunpack.c.h.b16 %v3903
    %v5042 = vunpack.c.l.b16 %v3904
    %v5043 = vunpack.c.h.b16 %v3904
    %v5044 = vunpack.c.l.b16 %v3905
    %v5045 = vunpack.c.h.b16 %v3905
    %v5046 = vunpack.c.l.b16 %v3906
    %v5047 = vunpack.c.h.b16 %v3906
    %v5048 = vunpack.c.l.b16 %v3907
    %v5049 = vunpack.c.h.b16 %v3907
    %v5050 = vunpack.c.l.b16 %v3908
    %v5051 = vunpack.c.h.b16 %v3908
    %v5052 = vunpack.c.l.b16 %v3909
    %v5053 = vunpack.c.h.b16 %v3909
    %v5054 = vunpack.c.l.b16 %v3910
    %v5055 = vunpack.c.h.b16 %v3910
    %v5056 = vunpack.c.l.b16 %v3911
    %v5057 = vunpack.c.h.b16 %v3911
    %v5058 = vunpack.c.l.b16 %v3912
    %v5059 = vunpack.c.h.b16 %v3912
    %v5060 = vunpack.c.l.b16 %v3913
    %v5061 = vunpack.c.h.b16 %v3913
    %v5062 = vunpack.c.l.b16 %v3914
    %v5063 = vunpack.c.h.b16 %v3914
    %v5064 = vunpack.c.l.b16 %v3915
    %v5065 = vunpack.c.h.b16 %v3915
    %v5066 = vunpack.c.l.b16 %v3916
    %v5067 = vunpack.c.h.b16 %v3916
    %v5068 = vunpack.c.l.b16 %v3917
    %v5069 = vunpack.c.h.b16 %v3917
    %v5070 = vunpack.c.l.b16 %v3918
    %v5071 = vunpack.c.h.b16 %v3918
    %v5072 = vunpack.c.l.b16 %v3919
    %v5073 = vunpack.c.h.b16 %v3919
    %v5074 = vunpack.c.l.b16 %v3920
    %v5075 = vunpack.c.h.b16 %v3920
    %v5076 = vunpack.c.l.b16 %v3921
    %v5077 = vunpack.c.h.b16 %v3921
    %v5078 = vunpack.c.l.b16 %v3922
    %v5079 = vunpack.c.h.b16 %v3922
    %v5080 = vunpack.c.l.b16 %v3923
    %v5081 = vunpack.c.h.b16 %v3923
    %v5082 = vunpack.c.l.b16 %v3924
    %v5083 = vunpack.c.h.b16 %v3924
    %v5084 = vunpack.c.l.b16 %v3925
    %v5085 = vunpack.c.h.b16 %v3925
    %v5086 = vunpack.c.l.b16 %v3926
    %v5087 = vunpack.c.h.b16 %v3926
    %v5088 = vunpack.c.l.b16 %v3927
    %v5089 = vunpack.c.h.b16 %v3927
    %v5090 = vunpack.c.l.b16 %v3928
    %v5091 = vunpack.c.h.b16 %v3928
    %v5092 = vunpack.c.l.b16 %v3929
    %v5093 = vunpack.c.h.b16 %v3929
    %v5094 = vunpack.c.l.b16 %v3930
    %v5095 = vunpack.c.h.b16 %v3930
    %v5096 = vunpack.c.l.b16 %v3931
    %v5097 = vunpack.c.h.b16 %v3931
    %v5098 = vunpack.c.l.b16 %v3932
    %v5099 = vunpack.c.h.b16 %v3932
    %v5100 = vunpack.c.l.b16 %v3933
    %v5101 = vunpack.c.h.b16 %v3933
    %v5102 = vunpack.c.l.b16 %v3934
    %v5103 = vunpack.c.h.b16 %v3934
    %v5104 = vunpack.c.l.b16 %v3935
    %v5105 = vunpack.c.h.b16 %v3935
    %v5106 = vunpack.c.l.b16 %v3936
    %v5107 = vunpack.c.h.b16 %v3936
    %v5108 = vunpack.c.l.b16 %v3937
    %v5109 = vunpack.c.h.b16 %v3937
    %v5110 = vunpack.c.l.b16 %v3938
    %v5111 = vunpack.c.h.b16 %v3938
    %v5112 = vunpack.c.l.b16 %v3939
    %v5113 = vunpack.c.h.b16 %v3939
    %v5114 = vunpack.c.l.b16 %v3940
    %v5115 = vunpack.c.h.b16 %v3940
    %v5116 = vunpack.c.l.b16 %v3941
    %v5117 = vunpack.c.h.b16 %v3941
    %v5118 = vunpack.c.l.b16 %v3942
    %v5119 = vunpack.c.h.b16 %v3942
    %v5120 = vunpack.c.l.b16 %v3943
    %v5121 = vunpack.c.h.b16 %v3943
    %v5122 = vunpack.c.l.b16 %v3944
    %v5123 = vunpack.c.h.b16 %v3944
    %v5124 = vunpack.c.l.b16 %v3945
    %v5125 = vunpack.c.h.b16 %v3945
    %v5126 = vunpack.c.l.b16 %v3946
    %v5127 = vunpack.c.h.b16 %v3946
    %v5128 = vunpack.c.l.b16 %v3947
    %v5129 = vunpack.c.h.b16 %v3947
    %v5130 = vunpack.c.l.b16 %v3948
    %v5131 = vunpack.c.h.b16 %v3948
    %v5132 = vunpack.c.l.b16 %v3949
    %v5133 = vunpack.c.h.b16 %v3949
    %v5134 = vunpack.c.l.b16 %v3950
    %v5135 = vunpack.c.h.b16 %v3950
    %v5136 = vunpack.c.l.b16 %v3951
    %v5137 = vunpack.c.h.b16 %v3951
    %v5138 = vunpack.c.l.b16 %v3952
    %v5139 = vunpack.c.h.b16 %v3952
    %v5140 = vunpack.c.l.b16 %v3953
    %v5141 = vunpack.c.h.b16 %v3953
    %v5142 = vunpack.c.l.b16 %v3954
    %v5143 = vunpack.c.h.b16 %v3954
    %v5144 = vunpack.c.l.b16 %v3955
    %v5145 = vunpack.c.h.b16 %v3955
    %v5146 = vunpack.c.l.b16 %v3956
    %v5147 = vunpack.c.h.b16 %v3956
    %v5148 = vunpack.c.l.b16 %v3957
    %v5149 = vunpack.c.h.b16 %v3957
    %v5150 = vunpack.c.l.b16 %v3958
    %v5151 = vunpack.c.h.b16 %v3958
    %v5152 = vunpack.c.l.b16 %v3959
    %v5153 = vunpack.c.h.b16 %v3959
    %v5154 = vunpack.c.l.b16 %v3960
    %v5155 = vunpack.c.h.b16 %v3960
    %v5156 = vunpack.c.l.b16 %v3961
    %v5157 = vunpack.c.h.b16 %v3961
    %v5158 = vunpack.c.l.b16 %v3962
    %v5159 = vunpack.c.h.b16 %v3962
    %v5160 = vunpack.c.l.b16 %v3963
    %v5161 = vunpack.c.h.b16 %v3963
    %v5162 = vunpack.c.l.b16 %v3964
    %v5163 = vunpack.c.h.b16 %v3964
    %v5164 = vunpack.c.l.b16 %v3965
    %v5165 = vunpack.c.h.b16 %v3965
    %v5166 = vunpack.c.l.b16 %v3966
    %v5167 = vunpack.c.h.b16 %v3966
    %v5168 = vunpack.c.l.b16 %v3967
    %v5169 = vunpack.c.h.b16 %v3967
    %v5170 = vunpack.c.l.b16 %v3968
    %v5171 = vunpack.c.h.b16 %v3968
    %v5172 = vunpack.c.l.b16 %v3969
    %v5173 = vunpack.c.h.b16 %v3969
    %v5174 = vunpack.c.l.b16 %v3970
    %v5175 = vunpack.c.h.b16 %v3970
    %v5176 = vunpack.c.l.b16 %v3971
    %v5177 = vunpack.c.h.b16 %v3971
    %v5178 = vunpack.c.l.b16 %v3972
    %v5179 = vunpack.c.h.b16 %v3972
    %v5180 = vunpack.c.l.b16 %v3973
    %v5181 = vunpack.c.h.b16 %v3973
    %v5182 = vunpack.c.l.b16 %v3974
    %v5183 = vunpack.c.h.b16 %v3974
    %v5184 = vunpack.c.l.b16 %v3975
    %v5185 = vunpack.c.h.b16 %v3975
    %v5186 = vunpack.c.l.b16 %v3976
    %v5187 = vunpack.c.h.b16 %v3976
    %v5188 = vunpack.c.l.b16 %v3977
    %v5189 = vunpack.c.h.b16 %v3977
    %v5190 = vunpack.c.l.b16 %v3978
    %v5191 = vunpack.c.h.b16 %v3978
    %v5192 = vunpack.c.l.b16 %v3979
    %v5193 = vunpack.c.h.b16 %v3979
    %v5194 = vunpack.c.l.b16 %v3980
    %v5195 = vunpack.c.h.b16 %v3980
    %v5196 = vunpack.c.l.b16 %v3981
    %v5197 = vunpack.c.h.b16 %v3981
    %v5198 = vunpack.c.l.b16 %v3982
    %v5199 = vunpack.c.h.b16 %v3982
    %v5200 = vunpack.c.l.b16 %v3983
    %v5201 = vunpack.c.h.b16 %v3983
    %v5202 = vunpack.c.l.b16 %v3984
    %v5203 = vunpack.c.h.b16 %v3984
    %v5204 = vunpack.c.l.b16 %v3985
    %v5205 = vunpack.c.h.b16 %v3985
    %v5206 = vunpack.c.l.b16 %v3986
    %v5207 = vunpack.c.h.b16 %v3986
    %v5208 = vunpack.c.l.b16 %v3987
    %v5209 = vunpack.c.h.b16 %v3987
    %v5210 = vunpack.c.l.b16 %v3988
    %v5211 = vunpack.c.h.b16 %v3988
    %v5212 = vunpack.c.l.b16 %v3989
    %v5213 = vunpack.c.h.b16 %v3989
    %v5214 = vunpack.c.l.b16 %v3990
    %v5215 = vunpack.c.h.b16 %v3990
    %v5216 = vunpack.c.l.b16 %v3991
    %v5217 = vunpack.c.h.b16 %v3991
    %v5218 = vunpack.c.l.b16 %v3992
    %v5219 = vunpack.c.h.b16 %v3992
    %v5220 = vunpack.c.l.b16 %v3993
    %v5221 = vunpack.c.h.b16 %v3993
    %v5222 = vunpack.c.l.b16 %v3994
    %v5223 = vunpack.c.h.b16 %v3994
    %v5224 = vunpack.c.l.b16 %v3995
    %v5225 = vunpack.c.h.b16 %v3995
    %v5226 = vunpack.c.l.b16 %v3996
    %v5227 = vunpack.c.h.b16 %v3996
    %v5228 = vunpack.c.l.b16 %v3997
    %v5229 = vunpack.c.h.b16 %v3997
    %v5230 = vunpack.c.l.b16 %v3998
    %v5231 = vunpack.c.h.b16 %v3998
    %v5232 = vunpack.c.l.b16 %v3999
    %v5233 = vunpack.c.h.b16 %v3999
    %v5234 = vunpack.c.l.b16 %v4000
    %v5235 = vunpack.c.h.b16 %v4000
    %v5236 = vunpack.c.l.b16 %v4001
    %v5237 = vunpack.c.h.b16 %v4001
    %v5238 = vunpack.c.l.b16 %v4002
    %v5239 = vunpack.c.h.b16 %v4002
    %v5240 = vunpack.c.l.b16 %v4003
    %v5241 = vunpack.c.h.b16 %v4003
    %v5242 = vunpack.c.l.b16 %v4004
    %v5243 = vunpack.c.h.b16 %v4004
    %v5244 = vunpack.c.l.b16 %v4005
    %v5245 = vunpack.c.h.b16 %v4005
    %v5246 = vunpack.c.l.b16 %v4006
    %v5247 = vunpack.c.h.b16 %v4006
    %v5248 = vunpack.c.l.b16 %v4007
    %v5249 = vunpack.c.h.b16 %v4007
    %v5250 = vunpack.c.l.b16 %v4008
    %v5251 = vunpack.c.h.b16 %v4008
    %v5252 = vunpack.c.l.b16 %v4009
    %v5253 = vunpack.c.h.b16 %v4009
    %v5254 = vunpack.c.l.b16 %v4010
    %v5255 = vunpack.c.h.b16 %v4010
    %v5256 = vunpack.c.l.b16 %v4011
    %v5257 = vunpack.c.h.b16 %v4011
    %v5258 = vpack.c.b16 %v4622, %v4618
    %v5259 = vpack.c.b16 %v4623, %v4619
    %v5260 = vpack.c.b16 %v4624, %v4620
    %v5261 = vpack.c.b16 %v4625, %v4621
    %v5262 = vpack.c.b16 %v4630, %v4626
    %v5263 = vpack.c.b16 %v4631, %v4627
    %v5264 = vpack.c.b16 %v4632, %v4628
    %v5265 = vpack.c.b16 %v4633, %v4629
    %v5266 = vpack.c.b16 %v4638, %v4634
    %v5267 = vpack.c.b16 %v4639, %v4635
    %v5268 = vpack.c.b16 %v4640, %v4636
    %v5269 = vpack.c.b16 %v4641, %v4637
    %v5270 = vpack.c.b16 %v4646, %v4642
    %v5271 = vpack.c.b16 %v4647, %v4643
    %v5272 = vpack.c.b16 %v4648, %v4644
    %v5273 = vpack.c.b16 %v4649, %v4645
    %v5274 = vpack.c.b16 %v4654, %v4650
    %v5275 = vpack.c.b16 %v4655, %v4651
    %v5276 = vpack.c.b16 %v4656, %v4652
    %v5277 = vpack.c.b16 %v4657, %v4653
    %v5278 = vpack.c.b16 %v4662, %v4658
    %v5279 = vpack.c.b16 %v4663, %v4659
    %v5280 = vpack.c.b16 %v4664, %v4660
    %v5281 = vpack.c.b16 %v4665, %v4661
    %v5282 = vpack.c.b16 %v4670, %v4666
    %v5283 = vpack.c.b16 %v4671, %v4667
    %v5284 = vpack.c.b16 %v4672, %v4668
    %v5285 = vpack.c.b16 %v4673, %v4669
    %v5286 = vpack.c.b16 %v4678, %v4674
    %v5287 = vpack.c.b16 %v4679, %v4675
    %v5288 = vpack.c.b16 %v4680, %v4676
    %v5289 = vpack.c.b16 %v4681, %v4677
    %v5290 = vpack.c.b16 %v4686, %v4682
    %v5291 = vpack.c.b16 %v4687, %v4683
    %v5292 = vpack.c.b16 %v4688, %v4684
    %v5293 = vpack.c.b16 %v4689, %v4685
    %v5294 = vpack.c.b16 %v4694, %v4690
    %v5295 = vpack.c.b16 %v4695, %v4691
    %v5296 = vpack.c.b16 %v4696, %v4692
    %v5297 = vpack.c.b16 %v4697, %v4693
    %v5298 = vpack.c.b16 %v4702, %v4698
    %v5299 = vpack.c.b16 %v4703, %v4699
    %v5300 = vpack.c.b16 %v4704, %v4700
    %v5301 = vpack.c.b16 %v4705, %v4701
    %v5302 = vpack.c.b16 %v4710, %v4706
    %v5303 = vpack.c.b16 %v4711, %v4707
    %v5304 = vpack.c.b16 %v4712, %v4708
    %v5305 = vpack.c.b16 %v4713, %v4709
    %v5306 = vpack.c.b16 %v4718, %v4714
    %v5307 = vpack.c.b16 %v4719, %v4715
    %v5308 = vpack.c.b16 %v4720, %v4716
    %v5309 = vpack.c.b16 %v4721, %v4717
    %v5310 = vpack.c.b16 %v4726, %v4722
    %v5311 = vpack.c.b16 %v4727, %v4723
    %v5312 = vpack.c.b16 %v4728, %v4724
    %v5313 = vpack.c.b16 %v4729, %v4725
    %v5314 = vpack.c.b16 %v4734, %v4730
    %v5315 = vpack.c.b16 %v4735, %v4731
    %v5316 = vpack.c.b16 %v4736, %v4732
    %v5317 = vpack.c.b16 %v4737, %v4733
    %v5318 = vpack.c.b16 %v4742, %v4738
    %v5319 = vpack.c.b16 %v4743, %v4739
    %v5320 = vpack.c.b16 %v4744, %v4740
    %v5321 = vpack.c.b16 %v4745, %v4741
    %v5322 = vpack.c.b16 %v4750, %v4746
    %v5323 = vpack.c.b16 %v4751, %v4747
    %v5324 = vpack.c.b16 %v4752, %v4748
    %v5325 = vpack.c.b16 %v4753, %v4749
    %v5326 = vpack.c.b16 %v4758, %v4754
    %v5327 = vpack.c.b16 %v4759, %v4755
    %v5328 = vpack.c.b16 %v4760, %v4756
    %v5329 = vpack.c.b16 %v4761, %v4757
    %v5330 = vpack.c.b16 %v4766, %v4762
    %v5331 = vpack.c.b16 %v4767, %v4763
    %v5332 = vpack.c.b16 %v4768, %v4764
    %v5333 = vpack.c.b16 %v4769, %v4765
    %v5334 = vpack.c.b16 %v4774, %v4770
    %v5335 = vpack.c.b16 %v4775, %v4771
    %v5336 = vpack.c.b16 %v4776, %v4772
    %v5337 = vpack.c.b16 %v4777, %v4773
    %v5338 = vpack.c.b16 %v4782, %v4778
    %v5339 = vpack.c.b16 %v4783, %v4779
    %v5340 = vpack.c.b16 %v4784, %v4780
    %v5341 = vpack.c.b16 %v4785, %v4781
    %v5342 = vpack.c.b16 %v4790, %v4786
    %v5343 = vpack.c.b16 %v4791, %v4787
    %v5344 = vpack.c.b16 %v4792, %v4788
    %v5345 = vpack.c.b16 %v4793, %v4789
    %v5346 = vpack.c.b16 %v4798, %v4794
    %v5347 = vpack.c.b16 %v4799, %v4795
    %v5348 = vpack.c.b16 %v4800, %v4796
    %v5349 = vpack.c.b16 %v4801, %v4797
    %v5350 = vpack.c.b16 %v4806, %v4802
    %v5351 = vpack.c.b16 %v4807, %v4803
    %v5352 = vpack.c.b16 %v4808, %v4804
    %v5353 = vpack.c.b16 %v4809, %v4805
    %v5354 = vpack.c.b16 %v4814, %v4810
    %v5355 = vpack.c.b16 %v4815, %v4811
    %v5356 = vpack.c.b16 %v4816, %v4812
    %v5357 = vpack.c.b16 %v4817, %v4813
    %v5358 = vpack.c.b16 %v4822, %v4818
    %v5359 = vpack.c.b16 %v4823, %v4819
    %v5360 = vpack.c.b16 %v4824, %v4820
    %v5361 = vpack.c.b16 %v4825, %v4821
    %v5362 = vpack.c.b16 %v4830, %v4826
    %v5363 = vpack.c.b16 %v4831, %v4827
    %v5364 = vpack.c.b16 %v4832, %v4828
    %v5365 = vpack.c.b16 %v4833, %v4829
    %v5366 = vpack.c.b16 %v4838, %v4834
    %v5367 = vpack.c.b16 %v4839, %v4835
    %v5368 = vpack.c.b16 %v4840, %v4836
    %v5369 = vpack.c.b16 %v4841, %v4837
    %v5370 = vpack.c.b16 %v4846, %v4842
    %v5371 = vpack.c.b16 %v4847, %v4843
    %v5372 = vpack.c.b16 %v4848, %v4844
    %v5373 = vpack.c.b16 %v4849, %v4845
    %v5374 = vpack.c.b16 %v4854, %v4850
    %v5375 = vpack.c.b16 %v4855, %v4851
    %v5376 = vpack.c.b16 %v4856, %v4852
    %v5377 = vpack.c.b16 %v4857, %v4853
    %v5378 = vpack.c.b16 %v4862, %v4858
    %v5379 = vpack.c.b16 %v4863, %v4859
    %v5380 = vpack.c.b16 %v4864, %v4860
    %v5381 = vpack.c.b16 %v4865, %v4861
    %v5382 = vpack.c.b16 %v4870, %v4866
    %v5383 = vpack.c.b16 %v4871, %v4867
    %v5384 = vpack.c.b16 %v4872, %v4868
    %v5385 = vpack.c.b16 %v4873, %v4869
    %v5386 = vpack.c.b16 %v4878, %v4874
    %v5387 = vpack.c.b16 %v4879, %v4875
    %v5388 = vpack.c.b16 %v4880, %v4876
    %v5389 = vpack.c.b16 %v4881, %v4877
    %v5390 = vpack.c.b16 %v4886, %v4882
    %v5391 = vpack.c.b16 %v4887, %v4883
    %v5392 = vpack.c.b16 %v4888, %v4884
    %v5393 = vpack.c.b16 %v4889, %v4885
    %v5394 = vpack.c.b16 %v4894, %v4890
    %v5395 = vpack.c.b16 %v4895, %v4891
    %v5396 = vpack.c.b16 %v4896, %v4892
    %v5397 = vpack.c.b16 %v4897, %v4893
    %v5398 = vpack.c.b16 %v4902, %v4898
    %v5399 = vpack.c.b16 %v4903, %v4899
    %v5400 = vpack.c.b16 %v4904, %v4900
    %v5401 = vpack.c.b16 %v4905, %v4901
    %v5402 = vpack.c.b16 %v4910, %v4906
    %v5403 = vpack.c.b16 %v4911, %v4907
    %v5404 = vpack.c.b16 %v4912, %v4908
    %v5405 = vpack.c.b16 %v4913, %v4909
    %v5406 = vpack.c.b16 %v4918, %v4914
    %v5407 = vpack.c.b16 %v4919, %v4915
    %v5408 = vpack.c.b16 %v4920, %v4916
    %v5409 = vpack.c.b16 %v4921, %v4917
    %v5410 = vpack.c.b16 %v4926, %v4922
    %v5411 = vpack.c.b16 %v4927, %v4923
    %v5412 = vpack.c.b16 %v4928, %v4924
    %v5413 = vpack.c.b16 %v4929, %v4925
    %v5414 = vpack.c.b16 %v4934, %v4930
    %v5415 = vpack.c.b16 %v4935, %v4931
    %v5416 = vpack.c.b16 %v4936, %v4932
    %v5417 = vpack.c.b16 %v4937, %v4933
    %v5418 = vpack.c.b16 %v4942, %v4938
    %v5419 = vpack.c.b16 %v4943, %v4939
    %v5420 = vpack.c.b16 %v4944, %v4940
    %v5421 = vpack.c.b16 %v4945, %v4941
    %v5422 = vpack.c.b16 %v4950, %v4946
    %v5423 = vpack.c.b16 %v4951, %v4947
    %v5424 = vpack.c.b16 %v4952, %v4948
    %v5425 = vpack.c.b16 %v4953, %v4949
    %v5426 = vpack.c.b16 %v4958, %v4954
    %v5427 = vpack.c.b16 %v4959, %v4955
    %v5428 = vpack.c.b16 %v4960, %v4956
    %v5429 = vpack.c.b16 %v4961, %v4957
    %v5430 = vpack.c.b16 %v4966, %v4962
    %v5431 = vpack.c.b16 %v4967, %v4963
    %v5432 = vpack.c.b16 %v4968, %v4964
    %v5433 = vpack.c.b16 %v4969, %v4965
    %v5434 = vpack.c.b16 %v4974, %v4970
    %v5435 = vpack.c.b16 %v4975, %v4971
    %v5436 = vpack.c.b16 %v4976, %v4972
    %v5437 = vpack.c.b16 %v4977, %v4973
    %v5438 = vpack.c.b16 %v4982, %v4978
    %v5439 = vpack.c.b16 %v4983, %v4979
    %v5440 = vpack.c.b16 %v4984, %v4980
    %v5441 = vpack.c.b16 %v4985, %v4981
    %v5442 = vpack.c.b16 %v4990, %v4986
    %v5443 = vpack.c.b16 %v4991, %v4987
    %v5444 = vpack.c.b16 %v4992, %v4988
    %v5445 = vpack.c.b16 %v4993, %v4989
    %v5446 = vpack.c.b16 %v4998, %v4994
    %v5447 = vpack.c.b16 %v4999, %v4995
    %v5448 = vpack.c.b16 %v5000, %v4996
    %v5449 = vpack.c.b16 %v5001, %v4997
    %v5450 = vpack.c.b16 %v5006, %v5002
    %v5451 = vpack.c.b16 %v5007, %v5003
    %v5452 = vpack.c.b16 %v5008, %v5004
    %v5453 = vpack.c.b16 %v5009, %v5005
    %v5454 = vpack.c.b16 %v5014, %v5010
    %v5455 = vpack.c.b16 %v5015, %v5011
    %v5456 = vpack.c.b16 %v5016, %v5012
    %v5457 = vpack.c.b16 %v5017, %v5013
    %v5458 = vpack.c.b16 %v5022, %v5018
    %v5459 = vpack.c.b16 %v5023, %v5019
    %v5460 = vpack.c.b16 %v5024, %v5020
    %v5461 = vpack.c.b16 %v5025, %v5021
    %v5462 = vpack.c.b16 %v5030, %v5026
    %v5463 = vpack.c.b16 %v5031, %v5027
    %v5464 = vpack.c.b16 %v5032, %v5028
    %v5465 = vpack.c.b16 %v5033, %v5029
    %v5466 = vpack.c.b16 %v5038, %v5034
    %v5467 = vpack.c.b16 %v5039, %v5035
    %v5468 = vpack.c.b16 %v5040, %v5036
    %v5469 = vpack.c.b16 %v5041, %v5037
    %v5470 = vpack.c.b16 %v5046, %v5042
    %v5471 = vpack.c.b16 %v5047, %v5043
    %v5472 = vpack.c.b16 %v5048, %v5044
    %v5473 = vpack.c.b16 %v5049, %v5045
    %v5474 = vpack.c.b16 %v5054, %v5050
    %v5475 = vpack.c.b16 %v5055, %v5051
    %v5476 = vpack.c.b16 %v5056, %v5052
    %v5477 = vpack.c.b16 %v5057, %v5053
    %v5478 = vpack.c.b16 %v5062, %v5058
    %v5479 = vpack.c.b16 %v5063, %v5059
    %v5480 = vpack.c.b16 %v5064, %v5060
    %v5481 = vpack.c.b16 %v5065, %v5061
    %v5482 = vpack.c.b16 %v5070, %v5066
    %v5483 = vpack.c.b16 %v5071, %v5067
    %v5484 = vpack.c.b16 %v5072, %v5068
    %v5485 = vpack.c.b16 %v5073, %v5069
    %v5486 = vpack.c.b16 %v5078, %v5074
    %v5487 = vpack.c.b16 %v5079, %v5075
    %v5488 = vpack.c.b16 %v5080, %v5076
    %v5489 = vpack.c.b16 %v5081, %v5077
    %v5490 = vpack.c.b16 %v5086, %v5082
    %v5491 = vpack.c.b16 %v5087, %v5083
    %v5492 = vpack.c.b16 %v5088, %v5084
    %v5493 = vpack.c.b16 %v5089, %v5085
    %v5494 = vpack.c.b16 %v5094, %v5090
    %v5495 = vpack.c.b16 %v5095, %v5091
    %v5496 = vpack.c.b16 %v5096, %v5092
    %v5497 = vpack.c.b16 %v5097, %v5093
    %v5498 = vpack.c.b16 %v5102, %v5098
    %v5499 = vpack.c.b16 %v5103, %v5099
    %v5500 = vpack.c.b16 %v5104, %v5100
    %v5501 = vpack.c.b16 %v5105, %v5101
    %v5502 = vpack.c.b16 %v5110, %v5106
    %v5503 = vpack.c.b16 %v5111, %v5107
    %v5504 = vpack.c.b16 %v5112, %v5108
    %v5505 = vpack.c.b16 %v5113, %v5109
    %v5506 = vpack.c.b16 %v5118, %v5114
    %v5507 = vpack.c.b16 %v5119, %v5115
    %v5508 = vpack.c.b16 %v5120, %v5116
    %v5509 = vpack.c.b16 %v5121, %v5117
    %v5510 = vpack.c.b16 %v5126, %v5122
    %v5511 = vpack.c.b16 %v5127, %v5123
    %v5512 = vpack.c.b16 %v5128, %v5124
    %v5513 = vpack.c.b16 %v5129, %v5125
    %v5514 = vpack.c.b16 %v5134, %v5130
    %v5515 = vpack.c.b16 %v5135, %v5131
    %v5516 = vpack.c.b16 %v5136, %v5132
    %v5517 = vpack.c.b16 %v5137, %v5133
    %v5518 = vpack.c.b16 %v5142, %v5138
    %v5519 = vpack.c.b16 %v5143, %v5139
    %v5520 = vpack.c.b16 %v5144, %v5140
    %v5521 = vpack.c.b16 %v5145, %v5141
    %v5522 = vpack.c.b16 %v5150, %v5146
    %v5523 = vpack.c.b16 %v5151, %v5147
    %v5524 = vpack.c.b16 %v5152, %v5148
    %v5525 = vpack.c.b16 %v5153, %v5149
    %v5526 = vpack.c.b16 %v5158, %v5154
    %v5527 = vpack.c.b16 %v5159, %v5155
    %v5528 = vpack.c.b16 %v5160, %v5156
    %v5529 = vpack.c.b16 %v5161, %v5157
    %v5530 = vpack.c.b16 %v5166, %v5162
    %v5531 = vpack.c.b16 %v5167, %v5163
    %v5532 = vpack.c.b16 %v5168, %v5164
    %v5533 = vpack.c.b16 %v5169, %v5165
    %v5534 = vpack.c.b16 %v5174, %v5170
    %v5535 = vpack.c.b16 %v5175, %v5171
    %v5536 = vpack.c.b16 %v5176, %v5172
    %v5537 = vpack.c.b16 %v5177, %v5173
    %v5538 = vpack.c.b16 %v5182, %v5178
    %v5539 = vpack.c.b16 %v5183, %v5179
    %v5540 = vpack.c.b16 %v5184, %v5180
    %v5541 = vpack.c.b16 %v5185, %v5181
    %v5542 = vpack.c.b16 %v5190, %v5186
    %v5543 = vpack.c.b16 %v5191, %v5187
    %v5544 = vpack.c.b16 %v5192, %v5188
    %v5545 = vpack.c.b16 %v5193, %v5189
    %v5546 = vpack.c.b16 %v5198, %v5194
    %v5547 = vpack.c.b16 %v5199, %v5195
    %v5548 = vpack.c.b16 %v5200, %v5196
    %v5549 = vpack.c.b16 %v5201, %v5197
    %v5550 = vpack.c.b16 %v5206, %v5202
    %v5551 = vpack.c.b16 %v5207, %v5203
    %v5552 = vpack.c.b16 %v5208, %v5204
    %v5553 = vpack.c.b16 %v5209, %v5205
    %v5554 = vpack.c.b16 %v5214, %v5210
    %v5555 = vpack.c.b16 %v5215, %v5211
    %v5556 = vpack.c.b16 %v5216, %v5212
    %v5557 = vpack.c.b16 %v5217, %v5213
    %v5558 = vpack.c.b16 %v5222, %v5218
    %v5559 = vpack.c.b16 %v5223, %v5219
    %v5560 = vpack.c.b16 %v5224, %v5220
    %v5561 = vpack.c.b16 %v5225, %v5221
    %v5562 = vpack.c.b16 %v5230, %v5226
    %v5563 = vpack.c.b16 %v5231, %v5227
    %v5564 = vpack.c.b16 %v5232, %v5228
    %v5565 = vpack.c.b16 %v5233, %v5229
    %v5566 = vpack.c.b16 %v5238, %v5234
    %v5567 = vpack.c.b16 %v5239, %v5235
    %v5568 = vpack.c.b16 %v5240, %v5236
    %v5569 = vpack.c.b16 %v5241, %v5237
    %v5570 = vpack.c.b16 %v5246, %v5242
    %v5571 = vpack.c.b16 %v5247, %v5243
    %v5572 = vpack.c.b16 %v5248, %v5244
    %v5573 = vpack.c.b16 %v5249, %v5245
    %v5574 = vpack.c.b16 %v5254, %v5250
    %v5575 = vpack.c.b16 %v5255, %v5251
    %v5576 = vpack.c.b16 %v5256, %v5252
    %v5577 = vpack.c.b16 %v5257, %v5253
    %5898 = vmatprep.subr.bf16.mxu0 %v5287
    %5899 = vmatpush1.bf16.msra.mxu0 %v5286
    %5900 = vmatprep.subr.bf16.mxu0 %v5283
    %5901 = vmatpush1.bf16.msra.mxu0 %v5282
    %5902 = vmatprep.subr.bf16.mxu0 %v5279
    %5903 = vmatpush1.bf16.msra.mxu0 %v5278
    %5904 = vmatprep.subr.bf16.mxu0 %v5275
    %5905 = vmatpush1.bf16.msra.mxu0 %v5274
    %5906 = vmatprep.subr.bf16.mxu0 %v5271
    %5907 = vmatpush1.bf16.msra.mxu0 %v5270
    %5908 = vmatprep.subr.bf16.mxu0 %v5267
    %5909 = vmatpush1.bf16.msra.mxu0 %v5266
    %5910 = vmatprep.subr.bf16.mxu0 %v5263
    %5911 = vmatpush1.bf16.msra.mxu0 %v5262
    %5912 = vmatprep.subr.bf16.mxu0 %v5259
    %5913 = vmatpush1.bf16.msra.mxu0 %v5258
    %5914 = vmatprep.subr.bf16.mxu0 %v5319
    %5915 = vmatpush2.bf16.msra.mxu0 %v5318
    %5916 = vmatprep.subr.bf16.mxu0 %v5315
    %5917 = vmatpush2.bf16.msra.mxu0 %v5314
    %5918 = vmatprep.subr.bf16.mxu0 %v5311
    %5919 = vmatpush2.bf16.msra.mxu0 %v5310
    %5920 = vmatprep.subr.bf16.mxu0 %v5307
    %5921 = vmatpush2.bf16.msra.mxu0 %v5306
    %5922 = vmatprep.subr.bf16.mxu0 %v5303
    %5923 = vmatpush2.bf16.msra.mxu0 %v5302
    %5924 = vmatprep.subr.bf16.mxu0 %v5299
    %5925 = vmatpush2.bf16.msra.mxu0 %v5298
    %5926 = vmatprep.subr.bf16.mxu0 %v5295
    %5927 = vmatpush2.bf16.msra.mxu0 %v5294
    %5928 = vmatprep.subr.bf16.mxu0 %v5291
    %5929 = vmatpush2.bf16.msra.mxu0 %v5290
    %5930 = vmatprep.mubr.bf16.mxu0 %v3683
    %5931 = vmatmul.mubr.bf16.gmra.mxu0 %v3682
    %v5932 = vpop.f32.mrf.mxu0
    %v5933 = vadd.f32 %v4247, %v5932
    %v5934 = vpop.f32.mrf.mxu0
    %v5935 = vadd.f32 %v4249, %v5934
    %v5936 = vpop.f32.mrf.mxu0
    %v5937 = vadd.f32 %v4251, %v5936
    %v5938 = vpop.f32.mrf.mxu0
    %v5939 = vadd.f32 %v4253, %v5938
    %5940 = vdwg.mxu0
    %5941 = vmatprep.subr.bf16.mxu0 %v5351
    %5942 = vmatpush1.bf16.msra.mxu0 %v5350
    %5943 = vmatprep.subr.bf16.mxu0 %v5347
    %5944 = vmatpush1.bf16.msra.mxu0 %v5346
    %5945 = vmatprep.subr.bf16.mxu0 %v5343
    %5946 = vmatpush1.bf16.msra.mxu0 %v5342
    %5947 = vmatprep.subr.bf16.mxu0 %v5339
    %5948 = vmatpush1.bf16.msra.mxu0 %v5338
    %5949 = vmatprep.subr.bf16.mxu0 %v5335
    %5950 = vmatpush1.bf16.msra.mxu0 %v5334
    %5951 = vmatprep.subr.bf16.mxu0 %v5331
    %5952 = vmatpush1.bf16.msra.mxu0 %v5330
    %5953 = vmatprep.subr.bf16.mxu0 %v5327
    %5954 = vmatpush1.bf16.msra.mxu0 %v5326
    %5955 = vmatprep.subr.bf16.mxu0 %v5323
    %5956 = vmatpush1.bf16.msra.mxu0 %v5322
    %5957 = vmatprep.subr.bf16.mxu0 %v5383
    %5958 = vmatpush2.bf16.msra.mxu0 %v5382
    %5959 = vmatprep.subr.bf16.mxu0 %v5379
    %5960 = vmatpush2.bf16.msra.mxu0 %v5378
    %5961 = vmatprep.subr.bf16.mxu0 %v5375
    %5962 = vmatpush2.bf16.msra.mxu0 %v5374
    %5963 = vmatprep.subr.bf16.mxu0 %v5371
    %5964 = vmatpush2.bf16.msra.mxu0 %v5370
    %5965 = vmatprep.subr.bf16.mxu0 %v5367
    %5966 = vmatpush2.bf16.msra.mxu0 %v5366
    %5967 = vmatprep.subr.bf16.mxu0 %v5363
    %5968 = vmatpush2.bf16.msra.mxu0 %v5362
    %5969 = vmatprep.subr.bf16.mxu0 %v5359
    %5970 = vmatpush2.bf16.msra.mxu0 %v5358
    %5971 = vmatprep.subr.bf16.mxu0 %v5355
    %5972 = vmatpush2.bf16.msra.mxu0 %v5354
    %5973 = vmatprep.mubr.bf16.mxu0 %v3685
    %5974 = vmatmul.mubr.bf16.gmra.mxu0 %v3684
    %v5975 = vpop.f32.mrf.mxu0
    %v5976 = vadd.f32 %v5933, %v5975
    %v5977 = vpop.f32.mrf.mxu0
    %v5978 = vadd.f32 %v5935, %v5977
    %v5979 = vpop.f32.mrf.mxu0
    %v5980 = vadd.f32 %v5937, %v5979
    %v5981 = vpop.f32.mrf.mxu0
    %v5982 = vadd.f32 %v5939, %v5981
    %5983 = vdwg.mxu0
    %5984 = vmatprep.subr.bf16.mxu0 %v5415
    %5985 = vmatpush1.bf16.msra.mxu0 %v5414
    %5986 = vmatprep.subr.bf16.mxu0 %v5411
    %5987 = vmatpush1.bf16.msra.mxu0 %v5410
    %5988 = vmatprep.subr.bf16.mxu0 %v5407
    %5989 = vmatpush1.bf16.msra.mxu0 %v5406
    %5990 = vmatprep.subr.bf16.mxu0 %v5403
    %5991 = vmatpush1.bf16.msra.mxu0 %v5402
    %5992 = vmatprep.subr.bf16.mxu0 %v5399
    %5993 = vmatpush1.bf16.msra.mxu0 %v5398
    %5994 = vmatprep.subr.bf16.mxu0 %v5395
    %5995 = vmatpush1.bf16.msra.mxu0 %v5394
    %5996 = vmatprep.subr.bf16.mxu0 %v5391
    %5997 = vmatpush1.bf16.msra.mxu0 %v5390
    %5998 = vmatprep.subr.bf16.mxu0 %v5387
    %5999 = vmatpush1.bf16.msra.mxu0 %v5386
    %6000 = vmatprep.subr.bf16.mxu0 %v5447
    %6001 = vmatpush2.bf16.msra.mxu0 %v5446
    %6002 = vmatprep.subr.bf16.mxu0 %v5443
    %6003 = vmatpush2.bf16.msra.mxu0 %v5442
    %6004 = vmatprep.subr.bf16.mxu0 %v5439
    %6005 = vmatpush2.bf16.msra.mxu0 %v5438
    %6006 = vmatprep.subr.bf16.mxu0 %v5435
    %6007 = vmatpush2.bf16.msra.mxu0 %v5434
    %6008 = vmatprep.subr.bf16.mxu0 %v5431
    %6009 = vmatpush2.bf16.msra.mxu0 %v5430
    %6010 = vmatprep.subr.bf16.mxu0 %v5427
    %6011 = vmatpush2.bf16.msra.mxu0 %v5426
    %6012 = vmatprep.subr.bf16.mxu0 %v5423
    %6013 = vmatpush2.bf16.msra.mxu0 %v5422
    %6014 = vmatprep.subr.bf16.mxu0 %v5419
    %6015 = vmatpush2.bf16.msra.mxu0 %v5418
    %6016 = vmatprep.mubr.bf16.mxu0 %v3687
    %6017 = vmatmul.mubr.bf16.gmra.mxu0 %v3686
    %v6018 = vpop.f32.mrf.mxu0
    %v6019 = vadd.f32 %v5976, %v6018
    %v6020 = vpop.f32.mrf.mxu0
    %v6021 = vadd.f32 %v5978, %v6020
    %v6022 = vpop.f32.mrf.mxu0
    %v6023 = vadd.f32 %v5980, %v6022
    %v6024 = vpop.f32.mrf.mxu0
    %v6025 = vadd.f32 %v5982, %v6024
    %6026 = vdwg.mxu0
    %6027 = vmatprep.subr.bf16.mxu0 %v5479
    %6028 = vmatpush1.bf16.msra.mxu0 %v5478
    %6029 = vmatprep.subr.bf16.mxu0 %v5475
    %6030 = vmatpush1.bf16.msra.mxu0 %v5474
    %6031 = vmatprep.subr.bf16.mxu0 %v5471
    %6032 = vmatpush1.bf16.msra.mxu0 %v5470
    %6033 = vmatprep.subr.bf16.mxu0 %v5467
    %6034 = vmatpush1.bf16.msra.mxu0 %v5466
    %6035 = vmatprep.subr.bf16.mxu0 %v5463
    %6036 = vmatpush1.bf16.msra.mxu0 %v5462
    %6037 = vmatprep.subr.bf16.mxu0 %v5459
    %6038 = vmatpush1.bf16.msra.mxu0 %v5458
    %6039 = vmatprep.subr.bf16.mxu0 %v5455
    %6040 = vmatpush1.bf16.msra.mxu0 %v5454
    %6041 = vmatprep.subr.bf16.mxu0 %v5451
    %6042 = vmatpush1.bf16.msra.mxu0 %v5450
    %6043 = vmatprep.subr.bf16.mxu0 %v5511
    %6044 = vmatpush2.bf16.msra.mxu0 %v5510
    %6045 = vmatprep.subr.bf16.mxu0 %v5507
    %6046 = vmatpush2.bf16.msra.mxu0 %v5506
    %6047 = vmatprep.subr.bf16.mxu0 %v5503
    %6048 = vmatpush2.bf16.msra.mxu0 %v5502
    %6049 = vmatprep.subr.bf16.mxu0 %v5499
    %6050 = vmatpush2.bf16.msra.mxu0 %v5498
    %6051 = vmatprep.subr.bf16.mxu0 %v5495
    %6052 = vmatpush2.bf16.msra.mxu0 %v5494
    %6053 = vmatprep.subr.bf16.mxu0 %v5491
    %6054 = vmatpush2.bf16.msra.mxu0 %v5490
    %6055 = vmatprep.subr.bf16.mxu0 %v5487
    %6056 = vmatpush2.bf16.msra.mxu0 %v5486
    %6057 = vmatprep.subr.bf16.mxu0 %v5483
    %6058 = vmatpush2.bf16.msra.mxu0 %v5482
    %6059 = vmatprep.mubr.bf16.mxu0 %v3689
    %6060 = vmatmul.mubr.bf16.gmra.mxu0 %v3688
    %v6061 = vpop.f32.mrf.mxu0
    %v6062 = vadd.f32 %v6019, %v6061
    %v6063 = vpop.f32.mrf.mxu0
    %v6064 = vadd.f32 %v6021, %v6063
    %v6065 = vpop.f32.mrf.mxu0
    %v6066 = vadd.f32 %v6023, %v6065
    %v6067 = vpop.f32.mrf.mxu0
    %v6068 = vadd.f32 %v6025, %v6067
    %6069 = vdwg.mxu0
    %6070 = vmatprep.subr.bf16.mxu0 %v5543
    %6071 = vmatpush1.bf16.msra.mxu0 %v5542
    %6072 = vmatprep.subr.bf16.mxu0 %v5539
    %6073 = vmatpush1.bf16.msra.mxu0 %v5538
    %6074 = vmatprep.subr.bf16.mxu0 %v5535
    %6075 = vmatpush1.bf16.msra.mxu0 %v5534
    %6076 = vmatprep.subr.bf16.mxu0 %v5531
    %6077 = vmatpush1.bf16.msra.mxu0 %v5530
    %6078 = vmatprep.subr.bf16.mxu0 %v5527
    %6079 = vmatpush1.bf16.msra.mxu0 %v5526
    %6080 = vmatprep.subr.bf16.mxu0 %v5523
    %6081 = vmatpush1.bf16.msra.mxu0 %v5522
    %6082 = vmatprep.subr.bf16.mxu0 %v5519
    %6083 = vmatpush1.bf16.msra.mxu0 %v5518
    %6084 = vmatprep.subr.bf16.mxu0 %v5515
    %6085 = vmatpush1.bf16.msra.mxu0 %v5514
    %6086 = vmatprep.subr.bf16.mxu0 %v5575
    %6087 = vmatpush2.bf16.msra.mxu0 %v5574
    %6088 = vmatprep.subr.bf16.mxu0 %v5571
    %6089 = vmatpush2.bf16.msra.mxu0 %v5570
    %6090 = vmatprep.subr.bf16.mxu0 %v5567
    %6091 = vmatpush2.bf16.msra.mxu0 %v5566
    %6092 = vmatprep.subr.bf16.mxu0 %v5563
    %6093 = vmatpush2.bf16.msra.mxu0 %v5562
    %6094 = vmatprep.subr.bf16.mxu0 %v5559
    %6095 = vmatpush2.bf16.msra.mxu0 %v5558
    %6096 = vmatprep.subr.bf16.mxu0 %v5555
    %6097 = vmatpush2.bf16.msra.mxu0 %v5554
    %6098 = vmatprep.subr.bf16.mxu0 %v5551
    %6099 = vmatpush2.bf16.msra.mxu0 %v5550
    %6100 = vmatprep.subr.bf16.mxu0 %v5547
    %6101 = vmatpush2.bf16.msra.mxu0 %v5546
    %6102 = vmatprep.mubr.bf16.mxu0 %v3691
    %6103 = vmatmul.mubr.bf16.gmra.mxu0 %v3690
    %v6104 = vpop.f32.mrf.mxu0
    %v6105 = vadd.f32 %v6062, %v6104
    %v6106 = vpop.f32.mrf.mxu0
    %v6107 = vadd.f32 %v6064, %v6106
    %v6108 = vpop.f32.mrf.mxu0
    %v6109 = vadd.f32 %v6066, %v6108
    %v6110 = vpop.f32.mrf.mxu0
    %v6111 = vadd.f32 %v6068, %v6110
    %6112 = vdwg.mxu0
    %6113 = vmatprep.subr.bf16.mxu0 %v5289
    %6114 = vmatpush1.bf16.msra.mxu0 %v5288
    %6115 = vmatprep.subr.bf16.mxu0 %v5285
    %6116 = vmatpush1.bf16.msra.mxu0 %v5284
    %6117 = vmatprep.subr.bf16.mxu0 %v5281
    %6118 = vmatpush1.bf16.msra.mxu0 %v5280
    %6119 = vmatprep.subr.bf16.mxu0 %v5277
    %6120 = vmatpush1.bf16.msra.mxu0 %v5276
    %6121 = vmatprep.subr.bf16.mxu0 %v5273
    %6122 = vmatpush1.bf16.msra.mxu0 %v5272
    %6123 = vmatprep.subr.bf16.mxu0 %v5269
    %6124 = vmatpush1.bf16.msra.mxu0 %v5268
    %6125 = vmatprep.subr.bf16.mxu0 %v5265
    %6126 = vmatpush1.bf16.msra.mxu0 %v5264
    %6127 = vmatprep.subr.bf16.mxu0 %v5261
    %6128 = vmatpush1.bf16.msra.mxu0 %v5260
    %6129 = vmatprep.subr.bf16.mxu0 %v5321
    %6130 = vmatpush2.bf16.msra.mxu0 %v5320
    %6131 = vmatprep.subr.bf16.mxu0 %v5317
    %6132 = vmatpush2.bf16.msra.mxu0 %v5316
    %6133 = vmatprep.subr.bf16.mxu0 %v5313
    %6134 = vmatpush2.bf16.msra.mxu0 %v5312
    %6135 = vmatprep.subr.bf16.mxu0 %v5309
    %6136 = vmatpush2.bf16.msra.mxu0 %v5308
    %6137 = vmatprep.subr.bf16.mxu0 %v5305
    %6138 = vmatpush2.bf16.msra.mxu0 %v5304
    %6139 = vmatprep.subr.bf16.mxu0 %v5301
    %6140 = vmatpush2.bf16.msra.mxu0 %v5300
    %6141 = vmatprep.subr.bf16.mxu0 %v5297
    %6142 = vmatpush2.bf16.msra.mxu0 %v5296
    %6143 = vmatprep.subr.bf16.mxu0 %v5293
    %6144 = vmatpush2.bf16.msra.mxu0 %v5292
    %6145 = vmatprep.mubr.bf16.mxu0 %v3683
    %6146 = vmatmul.mubr.bf16.gmra.mxu0 %v3682
    %v6147 = vpop.f32.mrf.mxu0
    %v6148 = vadd.f32 %v4290, %v6147
    %v6149 = vpop.f32.mrf.mxu0
    %v6150 = vadd.f32 %v4292, %v6149
    %v6151 = vpop.f32.mrf.mxu0
    %v6152 = vadd.f32 %v4294, %v6151
    %v6153 = vpop.f32.mrf.mxu0
    %v6154 = vadd.f32 %v4296, %v6153
    %6155 = vdwg.mxu0
    %6156 = vmatprep.subr.bf16.mxu0 %v5353
    %6157 = vmatpush1.bf16.msra.mxu0 %v5352
    %6158 = vmatprep.subr.bf16.mxu0 %v5349
    %6159 = vmatpush1.bf16.msra.mxu0 %v5348
    %6160 = vmatprep.subr.bf16.mxu0 %v5345
    %6161 = vmatpush1.bf16.msra.mxu0 %v5344
    %6162 = vmatprep.subr.bf16.mxu0 %v5341
    %6163 = vmatpush1.bf16.msra.mxu0 %v5340
    %6164 = vmatprep.subr.bf16.mxu0 %v5337
    %6165 = vmatpush1.bf16.msra.mxu0 %v5336
    %6166 = vmatprep.subr.bf16.mxu0 %v5333
    %6167 = vmatpush1.bf16.msra.mxu0 %v5332
    %6168 = vmatprep.subr.bf16.mxu0 %v5329
    %6169 = vmatpush1.bf16.msra.mxu0 %v5328
    %6170 = vmatprep.subr.bf16.mxu0 %v5325
    %6171 = vmatpush1.bf16.msra.mxu0 %v5324
    %6172 = vmatprep.subr.bf16.mxu0 %v5385
    %6173 = vmatpush2.bf16.msra.mxu0 %v5384
    %6174 = vmatprep.subr.bf16.mxu0 %v5381
    %6175 = vmatpush2.bf16.msra.mxu0 %v5380
    %6176 = vmatprep.subr.bf16.mxu0 %v5377
    %6177 = vmatpush2.bf16.msra.mxu0 %v5376
    %6178 = vmatprep.subr.bf16.mxu0 %v5373
    %6179 = vmatpush2.bf16.msra.mxu0 %v5372
    %6180 = vmatprep.subr.bf16.mxu0 %v5369
    %6181 = vmatpush2.bf16.msra.mxu0 %v5368
    %6182 = vmatprep.subr.bf16.mxu0 %v5365
    %6183 = vmatpush2.bf16.msra.mxu0 %v5364
    %6184 = vmatprep.subr.bf16.mxu0 %v5361
    %6185 = vmatpush2.bf16.msra.mxu0 %v5360
    %6186 = vmatprep.subr.bf16.mxu0 %v5357
    %6187 = vmatpush2.bf16.msra.mxu0 %v5356
    %6188 = vmatprep.mubr.bf16.mxu0 %v3685
    %6189 = vmatmul.mubr.bf16.gmra.mxu0 %v3684
    %v6190 = vpop.f32.mrf.mxu0
    %v6191 = vadd.f32 %v6148, %v6190
    %v6192 = vpop.f32.mrf.mxu0
    %v6193 = vadd.f32 %v6150, %v6192
    %v6194 = vpop.f32.mrf.mxu0
    %v6195 = vadd.f32 %v6152, %v6194
    %v6196 = vpop.f32.mrf.mxu0
    %v6197 = vadd.f32 %v6154, %v6196
    %6198 = vdwg.mxu0
    %6199 = vmatprep.subr.bf16.mxu0 %v5417
    %6200 = vmatpush1.bf16.msra.mxu0 %v5416
    %6201 = vmatprep.subr.bf16.mxu0 %v5413
    %6202 = vmatpush1.bf16.msra.mxu0 %v5412
    %6203 = vmatprep.subr.bf16.mxu0 %v5409
    %6204 = vmatpush1.bf16.msra.mxu0 %v5408
    %6205 = vmatprep.subr.bf16.mxu0 %v5405
    %6206 = vmatpush1.bf16.msra.mxu0 %v5404
    %6207 = vmatprep.subr.bf16.mxu0 %v5401
    %6208 = vmatpush1.bf16.msra.mxu0 %v5400
    %6209 = vmatprep.subr.bf16.mxu0 %v5397
    %6210 = vmatpush1.bf16.msra.mxu0 %v5396
    %6211 = vmatprep.subr.bf16.mxu0 %v5393
    %6212 = vmatpush1.bf16.msra.mxu0 %v5392
    %6213 = vmatprep.subr.bf16.mxu0 %v5389
    %6214 = vmatpush1.bf16.msra.mxu0 %v5388
    %6215 = vmatprep.subr.bf16.mxu0 %v5449
    %6216 = vmatpush2.bf16.msra.mxu0 %v5448
    %6217 = vmatprep.subr.bf16.mxu0 %v5445
    %6218 = vmatpush2.bf16.msra.mxu0 %v5444
    %6219 = vmatprep.subr.bf16.mxu0 %v5441
    %6220 = vmatpush2.bf16.msra.mxu0 %v5440
    %6221 = vmatprep.subr.bf16.mxu0 %v5437
    %6222 = vmatpush2.bf16.msra.mxu0 %v5436
    %6223 = vmatprep.subr.bf16.mxu0 %v5433
    %6224 = vmatpush2.bf16.msra.mxu0 %v5432
    %6225 = vmatprep.subr.bf16.mxu0 %v5429
    %6226 = vmatpush2.bf16.msra.mxu0 %v5428
    %6227 = vmatprep.subr.bf16.mxu0 %v5425
    %6228 = vmatpush2.bf16.msra.mxu0 %v5424
    %6229 = vmatprep.subr.bf16.mxu0 %v5421
    %6230 = vmatpush2.bf16.msra.mxu0 %v5420
    %6231 = vmatprep.mubr.bf16.mxu0 %v3687
    %6232 = vmatmul.mubr.bf16.gmra.mxu0 %v3686
    %v6233 = vpop.f32.mrf.mxu0
    %v6234 = vadd.f32 %v6191, %v6233
    %v6235 = vpop.f32.mrf.mxu0
    %v6236 = vadd.f32 %v6193, %v6235
    %v6237 = vpop.f32.mrf.mxu0
    %v6238 = vadd.f32 %v6195, %v6237
    %v6239 = vpop.f32.mrf.mxu0
    %v6240 = vadd.f32 %v6197, %v6239
    %6241 = vdwg.mxu0
    %6242 = vmatprep.subr.bf16.mxu0 %v5481
    %6243 = vmatpush1.bf16.msra.mxu0 %v5480
    %6244 = vmatprep.subr.bf16.mxu0 %v5477
    %6245 = vmatpush1.bf16.msra.mxu0 %v5476
    %6246 = vmatprep.subr.bf16.mxu0 %v5473
    %6247 = vmatpush1.bf16.msra.mxu0 %v5472
    %6248 = vmatprep.subr.bf16.mxu0 %v5469
    %6249 = vmatpush1.bf16.msra.mxu0 %v5468
    %6250 = vmatprep.subr.bf16.mxu0 %v5465
    %6251 = vmatpush1.bf16.msra.mxu0 %v5464
    %6252 = vmatprep.subr.bf16.mxu0 %v5461
    %6253 = vmatpush1.bf16.msra.mxu0 %v5460
    %6254 = vmatprep.subr.bf16.mxu0 %v5457
    %6255 = vmatpush1.bf16.msra.mxu0 %v5456
    %6256 = vmatprep.subr.bf16.mxu0 %v5453
    %6257 = vmatpush1.bf16.msra.mxu0 %v5452
    %6258 = vmatprep.subr.bf16.mxu0 %v5513
    %6259 = vmatpush2.bf16.msra.mxu0 %v5512
    %6260 = vmatprep.subr.bf16.mxu0 %v5509
    %6261 = vmatpush2.bf16.msra.mxu0 %v5508
    %6262 = vmatprep.subr.bf16.mxu0 %v5505
    %6263 = vmatpush2.bf16.msra.mxu0 %v5504
    %6264 = vmatprep.subr.bf16.mxu0 %v5501
    %6265 = vmatpush2.bf16.msra.mxu0 %v5500
    %6266 = vmatprep.subr.bf16.mxu0 %v5497
    %6267 = vmatpush2.bf16.msra.mxu0 %v5496
    %6268 = vmatprep.subr.bf16.mxu0 %v5493
    %6269 = vmatpush2.bf16.msra.mxu0 %v5492
    %6270 = vmatprep.subr.bf16.mxu0 %v5489
    %6271 = vmatpush2.bf16.msra.mxu0 %v5488
    %6272 = vmatprep.subr.bf16.mxu0 %v5485
    %6273 = vmatpush2.bf16.msra.mxu0 %v5484
    %6274 = vmatprep.mubr.bf16.mxu0 %v3689
    %6275 = vmatmul.mubr.bf16.gmra.mxu0 %v3688
    %v6276 = vpop.f32.mrf.mxu0
    %v6277 = vadd.f32 %v6234, %v6276
    %v6278 = vpop.f32.mrf.mxu0
    %v6279 = vadd.f32 %v6236, %v6278
    %v6280 = vpop.f32.mrf.mxu0
    %v6281 = vadd.f32 %v6238, %v6280
    %v6282 = vpop.f32.mrf.mxu0
    %v6283 = vadd.f32 %v6240, %v6282
    %6284 = vdwg.mxu0
    %6285 = vmatprep.subr.bf16.mxu0 %v5545
    %6286 = vmatpush1.bf16.msra.mxu0 %v5544
    %6287 = vmatprep.subr.bf16.mxu0 %v5541
    %6288 = vmatpush1.bf16.msra.mxu0 %v5540
    %6289 = vmatprep.subr.bf16.mxu0 %v5537
    %6290 = vmatpush1.bf16.msra.mxu0 %v5536
    %6291 = vmatprep.subr.bf16.mxu0 %v5533
    %6292 = vmatpush1.bf16.msra.mxu0 %v5532
    %6293 = vmatprep.subr.bf16.mxu0 %v5529
    %6294 = vmatpush1.bf16.msra.mxu0 %v5528
    %6295 = vmatprep.subr.bf16.mxu0 %v5525
    %6296 = vmatpush1.bf16.msra.mxu0 %v5524
    %6297 = vmatprep.subr.bf16.mxu0 %v5521
    %6298 = vmatpush1.bf16.msra.mxu0 %v5520
    %6299 = vmatprep.subr.bf16.mxu0 %v5517
    %6300 = vmatpush1.bf16.msra.mxu0 %v5516
    %6301 = vmatprep.subr.bf16.mxu0 %v5577
    %6302 = vmatpush2.bf16.msra.mxu0 %v5576
    %6303 = vmatprep.subr.bf16.mxu0 %v5573
    %6304 = vmatpush2.bf16.msra.mxu0 %v5572
    %6305 = vmatprep.subr.bf16.mxu0 %v5569
    %6306 = vmatpush2.bf16.msra.mxu0 %v5568
    %6307 = vmatprep.subr.bf16.mxu0 %v5565
    %6308 = vmatpush2.bf16.msra.mxu0 %v5564
    %6309 = vmatprep.subr.bf16.mxu0 %v5561
    %6310 = vmatpush2.bf16.msra.mxu0 %v5560
    %6311 = vmatprep.subr.bf16.mxu0 %v5557
    %6312 = vmatpush2.bf16.msra.mxu0 %v5556
    %6313 = vmatprep.subr.bf16.mxu0 %v5553
    %6314 = vmatpush2.bf16.msra.mxu0 %v5552
    %6315 = vmatprep.subr.bf16.mxu0 %v5549
    %6316 = vmatpush2.bf16.msra.mxu0 %v5548
    %6317 = vmatprep.mubr.bf16.mxu0 %v3691
    %6318 = vmatmul.mubr.bf16.gmra.mxu0 %v3690
    %v6319 = vpop.f32.mrf.mxu0
    %v6320 = vadd.f32 %v6277, %v6319
    %v6321 = vpop.f32.mrf.mxu0
    %v6322 = vadd.f32 %v6279, %v6321
    %v6323 = vpop.f32.mrf.mxu0
    %v6324 = vadd.f32 %v6281, %v6323
    %v6325 = vpop.f32.mrf.mxu0
    %v6326 = vadd.f32 %v6283, %v6325
    %6327 = vdwg.mxu0
    %v6328 = vld [vmem:[#allocation13] sm:$0xf]
    %v6330 = vlaneseq
    %v6331 = vshrl.u32 %v6330, 7
    %v6332 = vsub.s32 0, %v6331
    %v6333 = vrot.slane %v6328, %v6332
    %v6334 = vlaneseq
    %v6335 = vshrl.u32 %v6334, 7
    %v6336 = vsub.s32 1, %v6335
    %v6337 = vrot.slane %v6328, %v6336
    %v6338 = vlaneseq
    %v6339 = vshrl.u32 %v6338, 7
    %v6340 = vsub.s32 2, %v6339
    %v6341 = vrot.slane %v6328, %v6340
    %v6342 = vlaneseq
    %v6343 = vshrl.u32 %v6342, 7
    %v6344 = vsub.s32 3, %v6343
    %v6345 = vrot.slane %v6328, %v6344
    %v6350 = vadd.f32 %v6105, %v6333
    %v6351 = vadd.f32 %v6107, %v6337
    %v6352 = vadd.f32 %v6320, %v6341
    %v6353 = vadd.f32 %v6322, %v6345
    %v6354 = vadd.f32 %v6109, %v6333
    %v6355 = vadd.f32 %v6111, %v6337
    %v6356 = vadd.f32 %v6324, %v6341
    %v6357 = vadd.f32 %v6326, %v6345
    %v6358 = vmax.f32 %v6350, 0.0
    %v6359 = vmax.f32 %v6351, 0.0
    %v6360 = vmax.f32 %v6352, 0.0
    %v6361 = vmax.f32 %v6353, 0.0
    %v6362 = vmax.f32 %v6354, 0.0
    %v6363 = vmax.f32 %v6355, 0.0
    %v6364 = vmax.f32 %v6356, 0.0
    %v6365 = vmax.f32 %v6357, 0.0
    %v6366 = vpack.c.bf16 %v6362, %v6358
    %v6367 = vpack.c.bf16 %v6363, %v6359
    %v6368 = vpack.c.bf16 %v6364, %v6360
    %v6369 = vpack.c.bf16 %v6365, %v6361
    %v6370 = vld [vmem:[#allocation11] sm:$0xff]
    %v6371 = vld [vmem:[#allocation11 + $0x8] sm:$0xff]
    %v6372 = vld [vmem:[#allocation11 + $0x10] sm:$0xff]
    %v6373 = vld [vmem:[#allocation11 + $0x18] sm:$0xff]
    %v6374 = vld [vmem:[#allocation11 + $0x20] sm:$0xff]
    %v6375 = vld [vmem:[#allocation11 + $0x28] sm:$0xff]
    %v6376 = vld [vmem:[#allocation11 + $0x30] sm:$0xff]
    %v6377 = vld [vmem:[#allocation11 + $0x38] sm:$0xff]
    %v6378 = vld [vmem:[#allocation11 + $0x40] sm:$0xff]
    %v6379 = vld [vmem:[#allocation11 + $0x48] sm:$0xff]
    %v6380 = vld [vmem:[#allocation11 + $0x50] sm:$0xff]
    %v6381 = vld [vmem:[#allocation11 + $0x58] sm:$0xff]
    %v6382 = vld [vmem:[#allocation11 + $0x60] sm:$0xff]
    %v6383 = vld [vmem:[#allocation11 + $0x68] sm:$0xff]
    %v6384 = vld [vmem:[#allocation11 + $0x70] sm:$0xff]
    %v6385 = vld [vmem:[#allocation11 + $0x78] sm:$0xff]
    %v6386 = vld [vmem:[#allocation11 + $0x80] sm:$0xff]
    %v6387 = vld [vmem:[#allocation11 + $0x88] sm:$0xff]
    %v6388 = vld [vmem:[#allocation11 + $0x90] sm:$0xff]
    %v6389 = vld [vmem:[#allocation11 + $0x98] sm:$0xff]
    %v6390 = vld [vmem:[#allocation11 + $0xa0] sm:$0xff]
    %v6391 = vld [vmem:[#allocation11 + $0xa8] sm:$0xff]
    %v6392 = vld [vmem:[#allocation11 + $0xb0] sm:$0xff]
    %v6393 = vld [vmem:[#allocation11 + $0xb8] sm:$0xff]
    %v6394 = vld [vmem:[#allocation11 + $0xc0] sm:$0xff]
    %v6395 = vld [vmem:[#allocation11 + $0xc8] sm:$0xff]
    %v6396 = vld [vmem:[#allocation11 + $0xd0] sm:$0xff]
    %v6397 = vld [vmem:[#allocation11 + $0xd8] sm:$0xff]
    %v6398 = vld [vmem:[#allocation11 + $0xe0] sm:$0xff]
    %v6399 = vld [vmem:[#allocation11 + $0xe8] sm:$0xff]
    %v6400 = vld [vmem:[#allocation11 + $0xf0] sm:$0xff]
    %v6401 = vld [vmem:[#allocation11 + $0xf8] sm:$0xff]
    %v6402 = vld [vmem:[#allocation11 + $0x100] sm:$0xff]
    %v6403 = vld [vmem:[#allocation11 + $0x108] sm:$0xff]
    %v6404 = vld [vmem:[#allocation11 + $0x110] sm:$0xff]
    %v6405 = vld [vmem:[#allocation11 + $0x118] sm:$0xff]
    %v6406 = vld [vmem:[#allocation11 + $0x120] sm:$0xff]
    %v6407 = vld [vmem:[#allocation11 + $0x128] sm:$0xff]
    %v6408 = vld [vmem:[#allocation11 + $0x130] sm:$0xff]
    %v6409 = vld [vmem:[#allocation11 + $0x138] sm:$0xff]
    %v6410 = vld [vmem:[#allocation11 + $0x140] sm:$0xff]
    %v6411 = vld [vmem:[#allocation11 + $0x148] sm:$0xff]
    %v6412 = vld [vmem:[#allocation11 + $0x150] sm:$0xff]
    %v6413 = vld [vmem:[#allocation11 + $0x158] sm:$0xff]
    %v6414 = vld [vmem:[#allocation11 + $0x160] sm:$0xff]
    %v6415 = vld [vmem:[#allocation11 + $0x168] sm:$0xff]
    %v6416 = vld [vmem:[#allocation11 + $0x170] sm:$0xff]
    %v6417 = vld [vmem:[#allocation11 + $0x178] sm:$0xff]
    %v6418 = vld [vmem:[#allocation11 + $0x180] sm:$0xff]
    %v6419 = vld [vmem:[#allocation11 + $0x188] sm:$0xff]
    %v6420 = vld [vmem:[#allocation11 + $0x190] sm:$0xff]
    %v6421 = vld [vmem:[#allocation11 + $0x198] sm:$0xff]
    %v6422 = vld [vmem:[#allocation11 + $0x1a0] sm:$0xff]
    %v6423 = vld [vmem:[#allocation11 + $0x1a8] sm:$0xff]
    %v6424 = vld [vmem:[#allocation11 + $0x1b0] sm:$0xff]
    %v6425 = vld [vmem:[#allocation11 + $0x1b8] sm:$0xff]
    %v6426 = vld [vmem:[#allocation11 + $0x1c0] sm:$0xff]
    %v6427 = vld [vmem:[#allocation11 + $0x1c8] sm:$0xff]
    %v6428 = vld [vmem:[#allocation11 + $0x1d0] sm:$0xff]
    %v6429 = vld [vmem:[#allocation11 + $0x1d8] sm:$0xff]
    %v6430 = vld [vmem:[#allocation11 + $0x1e0] sm:$0xff]
    %v6431 = vld [vmem:[#allocation11 + $0x1e8] sm:$0xff]
    %v6432 = vld [vmem:[#allocation11 + $0x1f0] sm:$0xff]
    %v6433 = vld [vmem:[#allocation11 + $0x1f8] sm:$0xff]
    %v6434 = vld [vmem:[#allocation13 + $0x4] sm:$0x3]
    %v6436 = vlaneseq
    %v6437 = vshrl.u32 %v6436, 7
    %v6438 = vsub.s32 0, %v6437
    %v6439 = vrot.slane %v6434, %v6438
    %v6440 = vlaneseq
    %v6441 = vshrl.u32 %v6440, 7
    %v6442 = vsub.s32 1, %v6441
    %v6443 = vrot.slane %v6434, %v6442
    %v6510 = vunpack.c.l.b16 %v6370
    %v6511 = vunpack.c.h.b16 %v6370
    %v6512 = vunpack.c.l.b16 %v6371
    %v6513 = vunpack.c.h.b16 %v6371
    %v6514 = vunpack.c.l.b16 %v6372
    %v6515 = vunpack.c.h.b16 %v6372
    %v6516 = vunpack.c.l.b16 %v6373
    %v6517 = vunpack.c.h.b16 %v6373
    %v6518 = vunpack.c.l.b16 %v6374
    %v6519 = vunpack.c.h.b16 %v6374
    %v6520 = vunpack.c.l.b16 %v6375
    %v6521 = vunpack.c.h.b16 %v6375
    %v6522 = vunpack.c.l.b16 %v6376
    %v6523 = vunpack.c.h.b16 %v6376
    %v6524 = vunpack.c.l.b16 %v6377
    %v6525 = vunpack.c.h.b16 %v6377
    %v6526 = vunpack.c.l.b16 %v6378
    %v6527 = vunpack.c.h.b16 %v6378
    %v6528 = vunpack.c.l.b16 %v6379
    %v6529 = vunpack.c.h.b16 %v6379
    %v6530 = vunpack.c.l.b16 %v6380
    %v6531 = vunpack.c.h.b16 %v6380
    %v6532 = vunpack.c.l.b16 %v6381
    %v6533 = vunpack.c.h.b16 %v6381
    %v6534 = vunpack.c.l.b16 %v6382
    %v6535 = vunpack.c.h.b16 %v6382
    %v6536 = vunpack.c.l.b16 %v6383
    %v6537 = vunpack.c.h.b16 %v6383
    %v6538 = vunpack.c.l.b16 %v6384
    %v6539 = vunpack.c.h.b16 %v6384
    %v6540 = vunpack.c.l.b16 %v6385
    %v6541 = vunpack.c.h.b16 %v6385
    %v6542 = vunpack.c.l.b16 %v6386
    %v6543 = vunpack.c.h.b16 %v6386
    %v6544 = vunpack.c.l.b16 %v6387
    %v6545 = vunpack.c.h.b16 %v6387
    %v6546 = vunpack.c.l.b16 %v6388
    %v6547 = vunpack.c.h.b16 %v6388
    %v6548 = vunpack.c.l.b16 %v6389
    %v6549 = vunpack.c.h.b16 %v6389
    %v6550 = vunpack.c.l.b16 %v6390
    %v6551 = vunpack.c.h.b16 %v6390
    %v6552 = vunpack.c.l.b16 %v6391
    %v6553 = vunpack.c.h.b16 %v6391
    %v6554 = vunpack.c.l.b16 %v6392
    %v6555 = vunpack.c.h.b16 %v6392
    %v6556 = vunpack.c.l.b16 %v6393
    %v6557 = vunpack.c.h.b16 %v6393
    %v6558 = vunpack.c.l.b16 %v6394
    %v6559 = vunpack.c.h.b16 %v6394
    %v6560 = vunpack.c.l.b16 %v6395
    %v6561 = vunpack.c.h.b16 %v6395
    %v6562 = vunpack.c.l.b16 %v6396
    %v6563 = vunpack.c.h.b16 %v6396
    %v6564 = vunpack.c.l.b16 %v6397
    %v6565 = vunpack.c.h.b16 %v6397
    %v6566 = vunpack.c.l.b16 %v6398
    %v6567 = vunpack.c.h.b16 %v6398
    %v6568 = vunpack.c.l.b16 %v6399
    %v6569 = vunpack.c.h.b16 %v6399
    %v6570 = vunpack.c.l.b16 %v6400
    %v6571 = vunpack.c.h.b16 %v6400
    %v6572 = vunpack.c.l.b16 %v6401
    %v6573 = vunpack.c.h.b16 %v6401
    %v6574 = vunpack.c.l.b16 %v6402
    %v6575 = vunpack.c.h.b16 %v6402
    %v6576 = vunpack.c.l.b16 %v6403
    %v6577 = vunpack.c.h.b16 %v6403
    %v6578 = vunpack.c.l.b16 %v6404
    %v6579 = vunpack.c.h.b16 %v6404
    %v6580 = vunpack.c.l.b16 %v6405
    %v6581 = vunpack.c.h.b16 %v6405
    %v6582 = vunpack.c.l.b16 %v6406
    %v6583 = vunpack.c.h.b16 %v6406
    %v6584 = vunpack.c.l.b16 %v6407
    %v6585 = vunpack.c.h.b16 %v6407
    %v6586 = vunpack.c.l.b16 %v6408
    %v6587 = vunpack.c.h.b16 %v6408
    %v6588 = vunpack.c.l.b16 %v6409
    %v6589 = vunpack.c.h.b16 %v6409
    %v6590 = vunpack.c.l.b16 %v6410
    %v6591 = vunpack.c.h.b16 %v6410
    %v6592 = vunpack.c.l.b16 %v6411
    %v6593 = vunpack.c.h.b16 %v6411
    %v6594 = vunpack.c.l.b16 %v6412
    %v6595 = vunpack.c.h.b16 %v6412
    %v6596 = vunpack.c.l.b16 %v6413
    %v6597 = vunpack.c.h.b16 %v6413
    %v6598 = vunpack.c.l.b16 %v6414
    %v6599 = vunpack.c.h.b16 %v6414
    %v6600 = vunpack.c.l.b16 %v6415
    %v6601 = vunpack.c.h.b16 %v6415
    %v6602 = vunpack.c.l.b16 %v6416
    %v6603 = vunpack.c.h.b16 %v6416
    %v6604 = vunpack.c.l.b16 %v6417
    %v6605 = vunpack.c.h.b16 %v6417
    %v6606 = vunpack.c.l.b16 %v6418
    %v6607 = vunpack.c.h.b16 %v6418
    %v6608 = vunpack.c.l.b16 %v6419
    %v6609 = vunpack.c.h.b16 %v6419
    %v6610 = vunpack.c.l.b16 %v6420
    %v6611 = vunpack.c.h.b16 %v6420
    %v6612 = vunpack.c.l.b16 %v6421
    %v6613 = vunpack.c.h.b16 %v6421
    %v6614 = vunpack.c.l.b16 %v6422
    %v6615 = vunpack.c.h.b16 %v6422
    %v6616 = vunpack.c.l.b16 %v6423
    %v6617 = vunpack.c.h.b16 %v6423
    %v6618 = vunpack.c.l.b16 %v6424
    %v6619 = vunpack.c.h.b16 %v6424
    %v6620 = vunpack.c.l.b16 %v6425
    %v6621 = vunpack.c.h.b16 %v6425
    %v6622 = vunpack.c.l.b16 %v6426
    %v6623 = vunpack.c.h.b16 %v6426
    %v6624 = vunpack.c.l.b16 %v6427
    %v6625 = vunpack.c.h.b16 %v6427
    %v6626 = vunpack.c.l.b16 %v6428
    %v6627 = vunpack.c.h.b16 %v6428
    %v6628 = vunpack.c.l.b16 %v6429
    %v6629 = vunpack.c.h.b16 %v6429
    %v6630 = vunpack.c.l.b16 %v6430
    %v6631 = vunpack.c.h.b16 %v6430
    %v6632 = vunpack.c.l.b16 %v6431
    %v6633 = vunpack.c.h.b16 %v6431
    %v6634 = vunpack.c.l.b16 %v6432
    %v6635 = vunpack.c.h.b16 %v6432
    %v6636 = vunpack.c.l.b16 %v6433
    %v6637 = vunpack.c.h.b16 %v6433
    %v6638 = vpack.c.b16 %v6512, %v6510
    %v6639 = vpack.c.b16 %v6513, %v6511
    %v6640 = vpack.c.b16 %v6516, %v6514
    %v6641 = vpack.c.b16 %v6517, %v6515
    %v6642 = vpack.c.b16 %v6520, %v6518
    %v6643 = vpack.c.b16 %v6521, %v6519
    %v6644 = vpack.c.b16 %v6524, %v6522
    %v6645 = vpack.c.b16 %v6525, %v6523
    %v6646 = vpack.c.b16 %v6528, %v6526
    %v6647 = vpack.c.b16 %v6529, %v6527
    %v6648 = vpack.c.b16 %v6532, %v6530
    %v6649 = vpack.c.b16 %v6533, %v6531
    %v6650 = vpack.c.b16 %v6536, %v6534
    %v6651 = vpack.c.b16 %v6537, %v6535
    %v6652 = vpack.c.b16 %v6540, %v6538
    %v6653 = vpack.c.b16 %v6541, %v6539
    %v6654 = vpack.c.b16 %v6544, %v6542
    %v6655 = vpack.c.b16 %v6545, %v6543
    %v6656 = vpack.c.b16 %v6548, %v6546
    %v6657 = vpack.c.b16 %v6549, %v6547
    %v6658 = vpack.c.b16 %v6552, %v6550
    %v6659 = vpack.c.b16 %v6553, %v6551
    %v6660 = vpack.c.b16 %v6556, %v6554
    %v6661 = vpack.c.b16 %v6557, %v6555
    %v6662 = vpack.c.b16 %v6560, %v6558
    %v6663 = vpack.c.b16 %v6561, %v6559
    %v6664 = vpack.c.b16 %v6564, %v6562
    %v6665 = vpack.c.b16 %v6565, %v6563
    %v6666 = vpack.c.b16 %v6568, %v6566
    %v6667 = vpack.c.b16 %v6569, %v6567
    %v6668 = vpack.c.b16 %v6572, %v6570
    %v6669 = vpack.c.b16 %v6573, %v6571
    %v6670 = vpack.c.b16 %v6576, %v6574
    %v6671 = vpack.c.b16 %v6577, %v6575
    %v6672 = vpack.c.b16 %v6580, %v6578
    %v6673 = vpack.c.b16 %v6581, %v6579
    %v6674 = vpack.c.b16 %v6584, %v6582
    %v6675 = vpack.c.b16 %v6585, %v6583
    %v6676 = vpack.c.b16 %v6588, %v6586
    %v6677 = vpack.c.b16 %v6589, %v6587
    %v6678 = vpack.c.b16 %v6592, %v6590
    %v6679 = vpack.c.b16 %v6593, %v6591
    %v6680 = vpack.c.b16 %v6596, %v6594
    %v6681 = vpack.c.b16 %v6597, %v6595
    %v6682 = vpack.c.b16 %v6600, %v6598
    %v6683 = vpack.c.b16 %v6601, %v6599
    %v6684 = vpack.c.b16 %v6604, %v6602
    %v6685 = vpack.c.b16 %v6605, %v6603
    %v6686 = vpack.c.b16 %v6608, %v6606
    %v6687 = vpack.c.b16 %v6609, %v6607
    %v6688 = vpack.c.b16 %v6612, %v6610
    %v6689 = vpack.c.b16 %v6613, %v6611
    %v6690 = vpack.c.b16 %v6616, %v6614
    %v6691 = vpack.c.b16 %v6617, %v6615
    %v6692 = vpack.c.b16 %v6620, %v6618
    %v6693 = vpack.c.b16 %v6621, %v6619
    %v6694 = vpack.c.b16 %v6624, %v6622
    %v6695 = vpack.c.b16 %v6625, %v6623
    %v6696 = vpack.c.b16 %v6628, %v6626
    %v6697 = vpack.c.b16 %v6629, %v6627
    %v6698 = vpack.c.b16 %v6632, %v6630
    %v6699 = vpack.c.b16 %v6633, %v6631
    %v6700 = vpack.c.b16 %v6636, %v6634
    %v6701 = vpack.c.b16 %v6637, %v6635
    %6766 = vmatprep.subr.bf16.mxu0 %v6653
    %6767 = vmatpush1.bf16.msra.mxu0 %v6652
    %6768 = vmatprep.subr.bf16.mxu0 %v6651
    %6769 = vmatpush1.bf16.msra.mxu0 %v6650
    %6770 = vmatprep.subr.bf16.mxu0 %v6649
    %6771 = vmatpush1.bf16.msra.mxu0 %v6648
    %6772 = vmatprep.subr.bf16.mxu0 %v6647
    %6773 = vmatpush1.bf16.msra.mxu0 %v6646
    %6774 = vmatprep.subr.bf16.mxu0 %v6645
    %6775 = vmatpush1.bf16.msra.mxu0 %v6644
    %6776 = vmatprep.subr.bf16.mxu0 %v6643
    %6777 = vmatpush1.bf16.msra.mxu0 %v6642
    %6778 = vmatprep.subr.bf16.mxu0 %v6641
    %6779 = vmatpush1.bf16.msra.mxu0 %v6640
    %6780 = vmatprep.subr.bf16.mxu0 %v6639
    %6781 = vmatpush1.bf16.msra.mxu0 %v6638
    %6782 = vmatprep.subr.bf16.mxu0 %v6669
    %6783 = vmatpush2.bf16.msra.mxu0 %v6668
    %6784 = vmatprep.subr.bf16.mxu0 %v6667
    %6785 = vmatpush2.bf16.msra.mxu0 %v6666
    %6786 = vmatprep.subr.bf16.mxu0 %v6665
    %6787 = vmatpush2.bf16.msra.mxu0 %v6664
    %6788 = vmatprep.subr.bf16.mxu0 %v6663
    %6789 = vmatpush2.bf16.msra.mxu0 %v6662
    %6790 = vmatprep.subr.bf16.mxu0 %v6661
    %6791 = vmatpush2.bf16.msra.mxu0 %v6660
    %6792 = vmatprep.subr.bf16.mxu0 %v6659
    %6793 = vmatpush2.bf16.msra.mxu0 %v6658
    %6794 = vmatprep.subr.bf16.mxu0 %v6657
    %6795 = vmatpush2.bf16.msra.mxu0 %v6656
    %6796 = vmatprep.subr.bf16.mxu0 %v6655
    %6797 = vmatpush2.bf16.msra.mxu0 %v6654
    %6798 = vmatprep.mubr.bf16.mxu0 %v6367
    %6799 = vmatmul.mubr.bf16.gmra.mxu0 %v6366
    %v6800 = vpop.f32.mrf.mxu0
    %v6801 = vadd.f32 %v6439, %v6800
    %v6802 = vpop.f32.mrf.mxu0
    %v6803 = vadd.f32 %v6443, %v6802
    %v6804 = vpop.f32.mrf.mxu0
    %v6805 = vadd.f32 %v6439, %v6804
    %v6806 = vpop.f32.mrf.mxu0
    %v6807 = vadd.f32 %v6443, %v6806
    %6808 = vdwg.mxu0
    %6809 = vmatprep.subr.bf16.mxu0 %v6685
    %6810 = vmatpush1.bf16.msra.mxu0 %v6684
    %6811 = vmatprep.subr.bf16.mxu0 %v6683
    %6812 = vmatpush1.bf16.msra.mxu0 %v6682
    %6813 = vmatprep.subr.bf16.mxu0 %v6681
    %6814 = vmatpush1.bf16.msra.mxu0 %v6680
    %6815 = vmatprep.subr.bf16.mxu0 %v6679
    %6816 = vmatpush1.bf16.msra.mxu0 %v6678
    %6817 = vmatprep.subr.bf16.mxu0 %v6677
    %6818 = vmatpush1.bf16.msra.mxu0 %v6676
    %6819 = vmatprep.subr.bf16.mxu0 %v6675
    %6820 = vmatpush1.bf16.msra.mxu0 %v6674
    %6821 = vmatprep.subr.bf16.mxu0 %v6673
    %6822 = vmatpush1.bf16.msra.mxu0 %v6672
    %6823 = vmatprep.subr.bf16.mxu0 %v6671
    %6824 = vmatpush1.bf16.msra.mxu0 %v6670
    %6825 = vmatprep.subr.bf16.mxu0 %v6701
    %6826 = vmatpush2.bf16.msra.mxu0 %v6700
    %6827 = vmatprep.subr.bf16.mxu0 %v6699
    %6828 = vmatpush2.bf16.msra.mxu0 %v6698
    %6829 = vmatprep.subr.bf16.mxu0 %v6697
    %6830 = vmatpush2.bf16.msra.mxu0 %v6696
    %6831 = vmatprep.subr.bf16.mxu0 %v6695
    %6832 = vmatpush2.bf16.msra.mxu0 %v6694
    %6833 = vmatprep.subr.bf16.mxu0 %v6693
    %6834 = vmatpush2.bf16.msra.mxu0 %v6692
    %6835 = vmatprep.subr.bf16.mxu0 %v6691
    %6836 = vmatpush2.bf16.msra.mxu0 %v6690
    %6837 = vmatprep.subr.bf16.mxu0 %v6689
    %6838 = vmatpush2.bf16.msra.mxu0 %v6688
    %6839 = vmatprep.subr.bf16.mxu0 %v6687
    %6840 = vmatpush2.bf16.msra.mxu0 %v6686
    %6841 = vmatprep.mubr.bf16.mxu0 %v6369
    %6842 = vmatmul.mubr.bf16.gmra.mxu0 %v6368
    %v6843 = vpop.f32.mrf.mxu0
    %v6844 = vadd.f32 %v6801, %v6843
    %v6845 = vpop.f32.mrf.mxu0
    %v6846 = vadd.f32 %v6803, %v6845
    %v6847 = vpop.f32.mrf.mxu0
    %v6848 = vadd.f32 %v6805, %v6847
    %v6849 = vpop.f32.mrf.mxu0
    %v6850 = vadd.f32 %v6807, %v6849
    %6851 = vdwg.mxu0
    %v6852 = vmax.f32 %v6844, 0.0
    %v6853 = vmax.f32 %v6846, 0.0
    %v6854 = vmax.f32 %v6848, 0.0
    %v6855 = vmax.f32 %v6850, 0.0
    %v6856 = vld [vmem:[#allocation13 + $0x6] sm:$0x3]
    %v6858 = vlaneseq
    %v6859 = vshrl.u32 %v6858, 7
    %v6860 = vsub.s32 0, %v6859
    %v6861 = vrot.slane %v6856, %v6860
    %v6862 = vlaneseq
    %v6863 = vshrl.u32 %v6862, 7
    %v6864 = vsub.s32 1, %v6863
    %v6865 = vrot.slane %v6856, %v6864
    %v6868 = vmul.f32 %v6852, %v6861
    %v6869 = vmul.f32 %v6853, %v6865
    %v6870 = vmul.f32 %v6854, %v6861
    %v6871 = vmul.f32 %v6855, %v6865
    %v6872 = vadd.f32 %v6868, %v6869
    %6873 = vadd.xlane.f32.xlu0 %v6872
    %v6874 = vpop.xlane.xlu0 %6873
    %v6875 = vadd.f32 %v6870, %v6871
    %6876 = vadd.xlane.f32.xlu0 %v6875
    %v6877 = vpop.xlane.xlu0 %6876
    %v6878 = vld [vmem:[#allocation13 + $0x8] sm:$0x1]
    %v6880 = vlaneseq
    %v6881 = vshrl.u32 %v6880, 7
    %v6882 = vsub.s32 0, %v6881
    %v6883 = vrot.slane %v6878, %v6882
    %v6885 = vadd.f32 %v6874, %v6883
    %v6886 = vadd.f32 %v6877, %v6883
    %6887 = vst [vmem:[#allocation14] sm:$0xff] %v6885
    %6888 = vst [vmem:[#allocation14 + $0x8] sm:$0xff] %v6886
    // Predicated region
    $region58: #{tpu_custom_call.1} parent=1 // pred_check
      _
    $region59: #{tpu_custom_call.1} parent=1 // pred_check_branch
      %6890 = sbr.rel (0) target = $region61
    $region60: #{tpu_custom_call.1} parent=1 // pred_region
      %s6892 = ssub.s32 256, 256
      %6893 = vsyncadd [#allocation4], %s6892
      %s6894 = sshll.u32 [#allocation14], 4
      %s6895 = int_to_ptr.vmem [resolvable:$true] %s6894
      %6900 = dma.vmem_to_hbm [thread:$0]  %s6895, 256, %s7, [#allocation4], 128, 128, 8
    $region61: #{tpu_custom_call.1} parent=1 // pred_fallthru
      _
    // Predicated region
    $region62: #{tpu_custom_call.1} parent=1 // pred_check
      _
    $region63: #{tpu_custom_call.1} parent=1 // pred_check_branch
      %6902 = sbr.rel (0) target = $region65
    $region64: #{tpu_custom_call.1} parent=1 // pred_region
      %6903 = dma.done [#allocation4], 256
    $region65: #{tpu_custom_call.1} parent=1 // pred_fallthru
      _
    %6904 = vsyncpa [#allocation3], 1
    %6905 = vsyncpa [#allocation6], 1
    %6906 = vsyncpa [#allocation9], 1
    %6907 = vsyncpa [#allocation12], 1
    %6908 = vsyncpa [#allocation4], 1

</llo_original>
